<compile_context>
chip_gen: v7x
topology: tpu7x:2x2x1
jax: 0.10.0
libtpu: 0.0.40
codegen_flags: <defaults>
</compile_context>

<pallas_src>
import functools

import jax
import jax.numpy as jnp
from jax.experimental import pallas as pl
from jax.experimental.pallas import tpu as pltpu

EPS = 1e-5
KSIZE = 7
PAD = 3


def _round_up(x, m):
    return (x + m - 1) // m * m


def _layer_layouts(H, W):
    """Static layout constants for the flattened, height-padded VMEM buffers."""
    HW = H * W
    span = (KSIZE - 1) * W + (KSIZE - 1)          # largest tap offset (6W + 6)
    # layer-1 buffer: wrapper stores the height-padded image starting at PAD.
    off1 = PAD
    L1 = _round_up(off1 + HW + span, 128)
    # layer-2 buffer: the kernel stores the (unpadded) intermediate at a
    # 128-aligned lane offset so that store is a full, unmasked vst.
    store2 = _round_up(PAD * W + PAD, 128)        # where y1[:, 0] lands
    off2 = store2 - PAD * W                       # where padded row 0 would start
    L2 = _round_up(off2 + HW + span, 128)
    return off1, L1, off2, store2, L2


# ---------------------------------------------------------------------------
# Fused kernel: (conv7x7 + folded BN + ReLU) x 2 for one batch image.
# Patch extraction (im2col) is done in VMEM via 49 shifted, width-masked
# windows of the flattened height-padded activation.
# ---------------------------------------------------------------------------
def _double_conv_kernel(x_ref, w1_ref, s1_ref, w2_ref, s2_ref, mask_ref,
                        o_ref, p1_ref, mid_ref, p2_ref,
                        *, C_in, C_out, H, W):
    HW = H * W
    off1, _, off2, store2, _ = _layer_layouts(H, W)
    masks = mask_ref[...]                          # (8, HW) 0/1 width-validity

    def build_patches(src, base, C, p_ref):
        # src: (C, L) flattened height-padded activation (value in vregs)
        # base: buffer index where padded row i=0, w=0 lives
        # Fills p_ref rows [(dh*7+dw)*C : +C] with the width-masked window.
        p_ref[...] = jnp.zeros_like(p_ref)         # also zeroes K-padding rows
        for dh in range(KSIZE):
            for dw in range(KSIZE):
                t = dh * KSIZE + dw
                off = (base - PAD) + dh * W + dw
                win = src[:, off:off + HW]         # (C, HW) static slice
                m = masks[dw:dw + 1, :]            # (1, HW)
                p_ref[t * C:(t + 1) * C, :] = win * m

    # ---------------- layer 1: conv7x7 + BN + ReLU --------------------------
    build_patches(x_ref[0], off1, C_in, p1_ref)
    y1 = jnp.dot(w1_ref[...], p1_ref[...], preferred_element_type=jnp.float32)
    y1 = jnp.maximum(y1 + s1_ref[...], 0.0)        # (C_out, HW)

    # ---------------- hand-off: height-pad y1 into the mid buffer -----------
    mid_ref[...] = jnp.zeros_like(mid_ref)
    mid_ref[:, store2:store2 + HW] = y1            # 128-lane-aligned store

    # ---------------- layer 2: conv7x7 + BN + ReLU --------------------------
    build_patches(mid_ref[...], off2, C_out, p2_ref)
    y2 = jnp.dot(w2_ref[...], p2_ref[...], preferred_element_type=jnp.float32)
    y2 = jnp.maximum(y2 + s2_ref[...], 0.0)        # (C_out, HW)
    o_ref[0] = y2.astype(o_ref.dtype)


# ---------------------------------------------------------------------------
# Wrapper-side prep: fold BN into weights, flatten/pad input, build masks.
# ---------------------------------------------------------------------------
def _fold_conv_bn(w, b, gamma, beta, mean, var, k_pad):
    """PyTorch (C_out, C_in, kh, kw) -> (C_out, k_pad) with BN scale folded in."""
    C_out, C_in, kh, kw = w.shape
    scale = gamma / jnp.sqrt(var + EPS)                      # (C_out,)
    w_t = jnp.transpose(w, (0, 2, 3, 1)).reshape(C_out, kh * kw * C_in)
    w_t = w_t * scale[:, None]
    w_t = jnp.pad(w_t, ((0, 0), (0, k_pad - kh * kw * C_in)))
    shift = (b - mean) * scale + beta                        # (C_out,)
    return w_t.astype(jnp.float32), shift.reshape(C_out, 1).astype(jnp.float32)


def _flatten_padded_input(x_nchw, off1, L1):
    """NCHW -> (N, C, L1): height-padded image flattened, placed at offset off1."""
    N, C, H, W = x_nchw.shape
    x_hp = jnp.pad(x_nchw, ((0, 0), (0, 0), (PAD, PAD), (0, 0)))
    flat = x_hp.reshape(N, C, (H + 2 * PAD) * W)
    return jnp.pad(flat, ((0, 0), (0, 0), (off1, L1 - off1 - (H + 2 * PAD) * W)))


def _width_masks(H, W):
    """mask[dw, p] = 1 iff output column (p % W) shifted by dw stays in-bounds."""
    HW = H * W
    w_idx = jnp.arange(HW, dtype=jnp.int32) % W
    dw = jnp.arange(KSIZE, dtype=jnp.int32)
    valid = ((w_idx[None, :] + dw[:, None] >= PAD)
             & (w_idx[None, :] + dw[:, None] <= W - 1 + PAD))
    m = valid.astype(jnp.float32)                            # (7, HW)
    return jnp.pad(m, ((0, 8 - KSIZE), (0, 0)))              # (8, HW)


@jax.jit
def inconv_1_forward(x_nchw, params):
    N, C_in, H, W = x_nchw.shape
    C_out = params["w1"].shape[0]
    HW = H * W
    off1, L1, _, _, L2 = _layer_layouts(H, W)
    k1_pad = _round_up(KSIZE * KSIZE * C_in, 128)
    k2_pad = _round_up(KSIZE * KSIZE * C_out, 128)

    x_flat = _flatten_padded_input(x_nchw, off1, L1)         # (N, C_in, L1)
    w1_t, s1 = _fold_conv_bn(params["w1"], params["b1"], params["g1"],
                             params["be1"], params["m1"], params["v1"], k1_pad)
    w2_t, s2 = _fold_conv_bn(params["w2"], params["b2"], params["g2"],
                             params["be2"], params["m2"], params["v2"], k2_pad)
    masks = _width_masks(H, W)

    kernel = functools.partial(_double_conv_kernel,
                               C_in=C_in, C_out=C_out, H=H, W=W)

    out_flat = pl.pallas_call(
        kernel,
        out_shape=jax.ShapeDtypeStruct((N, C_out, HW), jnp.float32),
        grid_spec=pltpu.PrefetchScalarGridSpec(
            num_scalar_prefetch=0,
            grid=(N,),
            in_specs=[
                pl.BlockSpec((1, C_in, L1), lambda n: (n, 0, 0)),
                pl.BlockSpec((C_out, k1_pad), lambda n: (0, 0)),
                pl.BlockSpec((C_out, 1), lambda n: (0, 0)),
                pl.BlockSpec((C_out, k2_pad), lambda n: (0, 0)),
                pl.BlockSpec((C_out, 1), lambda n: (0, 0)),
                pl.BlockSpec((8, HW), lambda n: (0, 0)),
            ],
            out_specs=pl.BlockSpec((1, C_out, HW), lambda n: (n, 0, 0)),
            scratch_shapes=[
                pltpu.VMEM((k1_pad, HW), jnp.float32),   # layer-1 patch matrix
                pltpu.VMEM((C_out, L2), jnp.float32),    # intermediate (in VMEM)
                pltpu.VMEM((k2_pad, HW), jnp.float32),   # layer-2 patch matrix
            ],
        ),
        compiler_params=pltpu.CompilerParams(
            dimension_semantics=("parallel",)),
    )(x_flat, w1_t, s1, w2_t, s2, masks)

    return out_flat.reshape(N, C_out, H, W)                  # already NCHW


# ---------------------------------------------------------------------------
# Pure-JAX reference (lax.conv) for the correctness check
# ---------------------------------------------------------------------------
def ref_layer(x, w, b, gamma, beta, mean, var):
    y = jax.lax.conv_general_dilated(
        x, w, window_strides=(1, 1), padding=((PAD, PAD), (PAD, PAD)),
        dimension_numbers=("NCHW", "OIHW", "NCHW"))
    y = y + b[None, :, None, None]
    y = (y - mean[None, :, None, None]) / jnp.sqrt(var[None, :, None, None] + EPS)
    y = y * gamma[None, :, None, None] + beta[None, :, None, None]
    return jnp.maximum(y, 0.0)


def ref_forward(x, p):
    y = ref_layer(x, p["w1"], p["b1"], p["g1"], p["be1"], p["m1"], p["v1"])
    y = ref_layer(y, p["w2"], p["b2"], p["g2"], p["be2"], p["m2"], p["v2"])
    return y


# ---------------------------------------------------------------------------
if __name__ == "__main__":
    # Small shapes consistent with the module: in_ch=4, out_ch=8, N=2, 16x16.
    N, in_ch, out_ch, H, W = 2, 4, 8, 16, 16

    keys = jax.random.split(jax.random.PRNGKey(0), 13)
    params = {
        # conv1 / bn1
        "w1": 0.1 * jax.random.normal(keys[0], (out_ch, in_ch, KSIZE, KSIZE), jnp.float32),
        "b1": 0.1 * jax.random.normal(keys[1], (out_ch,), jnp.float32),
        "g1": 1.0 + 0.1 * jax.random.normal(keys[2], (out_ch,), jnp.float32),
        "be1": 0.1 * jax.random.normal(keys[3], (out_ch,), jnp.float32),
        "m1": 0.05 * jax.random.normal(keys[4], (out_ch,), jnp.float32),
        "v1": 1.0 + 0.1 * jax.random.uniform(keys[5], (out_ch,), jnp.float32),
        # conv2 / bn2
        "w2": 0.1 * jax.random.normal(keys[6], (out_ch, out_ch, KSIZE, KSIZE), jnp.float32),
        "b2": 0.1 * jax.random.normal(keys[7], (out_ch,), jnp.float32),
        "g2": 1.0 + 0.1 * jax.random.normal(keys[8], (out_ch,), jnp.float32),
        "be2": 0.1 * jax.random.normal(keys[9], (out_ch,), jnp.float32),
        "m2": 0.05 * jax.random.normal(keys[10], (out_ch,), jnp.float32),
        "v2": 1.0 + 0.1 * jax.random.uniform(keys[11], (out_ch,), jnp.float32),
    }
    # TODO(synk): BatchNorm is implemented in eval mode (running stats); PyTorch
    # default train-mode batch statistics are not reproduced here.

    x = jax.random.normal(keys[12], (N, in_ch, H, W), jnp.float32)

    out = jax.block_until_ready(inconv_1_forward(x, params))
    ref = jax.block_until_ready(ref_forward(x, params))

    assert out.shape == (N, out_ch, H, W), out.shape
    max_err = float(jnp.max(jnp.abs(out - ref)))
    assert jnp.allclose(out, ref, atol=2e-4, rtol=2e-4), max_err

    print("KERNEL_OK")
</pallas_src>

<mosaic_0001>
module attributes {stable_mosaic.version = 11 : i64} {
  func.func @_double_conv_kernel(%arg0: i32, %arg1: memref<1x4x384xf32, #tpu.memory_space<vmem>>, %arg2: memref<8x256xf32, #tpu.memory_space<vmem>>, %arg3: memref<8x1xf32, #tpu.memory_space<vmem>>, %arg4: memref<8x512xf32, #tpu.memory_space<vmem>>, %arg5: memref<8x1xf32, #tpu.memory_space<vmem>>, %arg6: memref<8x256xf32, #tpu.memory_space<vmem>>, %arg7: memref<1x8x256xf32, #tpu.memory_space<vmem>>, %arg8: memref<256x256xf32, #tpu.memory_space<vmem>>, %arg9: memref<8x512xf32, #tpu.memory_space<vmem>>, %arg10: memref<512x256xf32, #tpu.memory_space<vmem>>) attributes {dimension_semantics = [#tpu.dimension_semantics<parallel>], iteration_bounds = array<i64: 2>, scalar_prefetch = 0 : i64, scratch_operands = 3 : i64, tpu.core_type = #tpu.core_type<tc>, window_params = [{transform_indices = @transform_0, window_bounds = array<i64: 1, 4, 384>}, {pipeline_mode = #tpu.pipeline_mode<synchronous>, transform_indices = @transform_1, window_bounds = array<i64: 8, 256>}, {pipeline_mode = #tpu.pipeline_mode<synchronous>, transform_indices = @transform_2, window_bounds = array<i64: 8, 1>}, {pipeline_mode = #tpu.pipeline_mode<synchronous>, transform_indices = @transform_3, window_bounds = array<i64: 8, 512>}, {pipeline_mode = #tpu.pipeline_mode<synchronous>, transform_indices = @transform_4, window_bounds = array<i64: 8, 1>}, {pipeline_mode = #tpu.pipeline_mode<synchronous>, transform_indices = @transform_5, window_bounds = array<i64: 8, 256>}, {transform_indices = @transform_6, window_bounds = array<i64: 1, 8, 256>}]} {
    %c0 = arith.constant 0 : index
    %c0_0 = arith.constant 0 : index
    %0 = vector.load %arg6[%c0, %c0_0] : memref<8x256xf32, #tpu.memory_space<vmem>>, vector<8x256xf32>
    %c0_1 = arith.constant 0 : index
    %c0_2 = arith.constant 0 : index
    %c0_3 = arith.constant 0 : index
    %1 = vector.load %arg1[%c0_1, %c0_2, %c0_3] : memref<1x4x384xf32, #tpu.memory_space<vmem>>, vector<1x4x384xf32>
    %2 = vector.shape_cast %1 : vector<1x4x384xf32> to vector<4x384xf32>
    %cst = arith.constant 0.000000e+00 : f32
    %3 = vector.broadcast %cst : f32 to vector<256x256xf32>
    %c0_4 = arith.constant 0 : index
    %c0_5 = arith.constant 0 : index
    %4 = vector.load %arg8[%c0_4, %c0_5] : memref<256x256xf32, #tpu.memory_space<vmem>>, vector<256x256xf32>
    tpu.vector_store %arg8[%c0_4, %c0_5], %3 {strides = array<i32>} : memref<256x256xf32, #tpu.memory_space<vmem>>, vector<256x256xf32>,
    %5 = vector.extract_strided_slice %2 {offsets = [0, 0], sizes = [4, 256], strides = [1, 1]} : vector<4x384xf32> to vector<4x256xf32>
    %6 = vector.extract_strided_slice %0 {offsets = [0, 0], sizes = [1, 256], strides = [1, 1]} : vector<8x256xf32> to vector<1x256xf32>
    %7 = vector.broadcast %6 : vector<1x256xf32> to vector<4x256xf32>
    %8 = arith.mulf %5, %7 : vector<4x256xf32>
    %c0_6 = arith.constant 0 : index
    %c0_7 = arith.constant 0 : index
    %9 = vector.load %arg8[%c0_6, %c0_7] : memref<256x256xf32, #tpu.memory_space<vmem>>, vector<4x256xf32>
    tpu.vector_store %arg8[%c0_6, %c0_7], %8 {strides = array<i32>} : memref<256x256xf32, #tpu.memory_space<vmem>>, vector<4x256xf32>,
    %10 = vector.extract_strided_slice %2 {offsets = [0, 1], sizes = [4, 256], strides = [1, 1]} : vector<4x384xf32> to vector<4x256xf32>
    %11 = vector.extract_strided_slice %0 {offsets = [1, 0], sizes = [1, 256], strides = [1, 1]} : vector<8x256xf32> to vector<1x256xf32>
    %12 = vector.broadcast %11 : vector<1x256xf32> to vector<4x256xf32>
    %13 = arith.mulf %10, %12 : vector<4x256xf32>
    %c4 = arith.constant 4 : index
    %c0_8 = arith.constant 0 : index
    %14 = vector.load %arg8[%c4, %c0_8] : memref<256x256xf32, #tpu.memory_space<vmem>>, vector<4x256xf32>
    tpu.vector_store %arg8[%c4, %c0_8], %13 {strides = array<i32>} : memref<256x256xf32, #tpu.memory_space<vmem>>, vector<4x256xf32>,
    %15 = vector.extract_strided_slice %2 {offsets = [0, 2], sizes = [4, 256], strides = [1, 1]} : vector<4x384xf32> to vector<4x256xf32>
    %16 = vector.extract_strided_slice %0 {offsets = [2, 0], sizes = [1, 256], strides = [1, 1]} : vector<8x256xf32> to vector<1x256xf32>
    %17 = vector.broadcast %16 : vector<1x256xf32> to vector<4x256xf32>
    %18 = arith.mulf %15, %17 : vector<4x256xf32>
    %c8 = arith.constant 8 : index
    %c0_9 = arith.constant 0 : index
    %19 = vector.load %arg8[%c8, %c0_9] : memref<256x256xf32, #tpu.memory_space<vmem>>, vector<4x256xf32>
    tpu.vector_store %arg8[%c8, %c0_9], %18 {strides = array<i32>} : memref<256x256xf32, #tpu.memory_space<vmem>>, vector<4x256xf32>,
    %20 = vector.extract_strided_slice %2 {offsets = [0, 3], sizes = [4, 256], strides = [1, 1]} : vector<4x384xf32> to vector<4x256xf32>
    %21 = vector.extract_strided_slice %0 {offsets = [3, 0], sizes = [1, 256], strides = [1, 1]} : vector<8x256xf32> to vector<1x256xf32>
    %22 = vector.broadcast %21 : vector<1x256xf32> to vector<4x256xf32>
    %23 = arith.mulf %20, %22 : vector<4x256xf32>
    %c12 = arith.constant 12 : index
    %c0_10 = arith.constant 0 : index
    %24 = vector.load %arg8[%c12, %c0_10] : memref<256x256xf32, #tpu.memory_space<vmem>>, vector<4x256xf32>
    tpu.vector_store %arg8[%c12, %c0_10], %23 {strides = array<i32>} : memref<256x256xf32, #tpu.memory_space<vmem>>, vector<4x256xf32>,
    %25 = vector.extract_strided_slice %2 {offsets = [0, 4], sizes = [4, 256], strides = [1, 1]} : vector<4x384xf32> to vector<4x256xf32>
    %26 = vector.extract_strided_slice %0 {offsets = [4, 0], sizes = [1, 256], strides = [1, 1]} : vector<8x256xf32> to vector<1x256xf32>
    %27 = vector.broadcast %26 : vector<1x256xf32> to vector<4x256xf32>
    %28 = arith.mulf %25, %27 : vector<4x256xf32>
    %c16 = arith.constant 16 : index
    %c0_11 = arith.constant 0 : index
    %29 = vector.load %arg8[%c16, %c0_11] : memref<256x256xf32, #tpu.memory_space<vmem>>, vector<4x256xf32>
    tpu.vector_store %arg8[%c16, %c0_11], %28 {strides = array<i32>} : memref<256x256xf32, #tpu.memory_space<vmem>>, vector<4x256xf32>,
    %30 = vector.extract_strided_slice %2 {offsets = [0, 5], sizes = [4, 256], strides = [1, 1]} : vector<4x384xf32> to vector<4x256xf32>
    %31 = vector.extract_strided_slice %0 {offsets = [5, 0], sizes = [1, 256], strides = [1, 1]} : vector<8x256xf32> to vector<1x256xf32>
    %32 = vector.broadcast %31 : vector<1x256xf32> to vector<4x256xf32>
    %33 = arith.mulf %30, %32 : vector<4x256xf32>
    %c20 = arith.constant 20 : index
    %c0_12 = arith.constant 0 : index
    %34 = vector.load %arg8[%c20, %c0_12] : memref<256x256xf32, #tpu.memory_space<vmem>>, vector<4x256xf32>
    tpu.vector_store %arg8[%c20, %c0_12], %33 {strides = array<i32>} : memref<256x256xf32, #tpu.memory_space<vmem>>, vector<4x256xf32>,
    %35 = vector.extract_strided_slice %2 {offsets = [0, 6], sizes = [4, 256], strides = [1, 1]} : vector<4x384xf32> to vector<4x256xf32>
    %36 = vector.extract_strided_slice %0 {offsets = [6, 0], sizes = [1, 256], strides = [1, 1]} : vector<8x256xf32> to vector<1x256xf32>
    %37 = vector.broadcast %36 : vector<1x256xf32> to vector<4x256xf32>
    %38 = arith.mulf %35, %37 : vector<4x256xf32>
    %c24 = arith.constant 24 : index
    %c0_13 = arith.constant 0 : index
    %39 = vector.load %arg8[%c24, %c0_13] : memref<256x256xf32, #tpu.memory_space<vmem>>, vector<4x256xf32>
    tpu.vector_store %arg8[%c24, %c0_13], %38 {strides = array<i32>} : memref<256x256xf32, #tpu.memory_space<vmem>>, vector<4x256xf32>,
    %40 = vector.extract_strided_slice %2 {offsets = [0, 16], sizes = [4, 256], strides = [1, 1]} : vector<4x384xf32> to vector<4x256xf32>
    %41 = vector.extract_strided_slice %0 {offsets = [0, 0], sizes = [1, 256], strides = [1, 1]} : vector<8x256xf32> to vector<1x256xf32>
    %42 = vector.broadcast %41 : vector<1x256xf32> to vector<4x256xf32>
    %43 = arith.mulf %40, %42 : vector<4x256xf32>
    %c28 = arith.constant 28 : index
    %c0_14 = arith.constant 0 : index
    %44 = vector.load %arg8[%c28, %c0_14] : memref<256x256xf32, #tpu.memory_space<vmem>>, vector<4x256xf32>
    tpu.vector_store %arg8[%c28, %c0_14], %43 {strides = array<i32>} : memref<256x256xf32, #tpu.memory_space<vmem>>, vector<4x256xf32>,
    %45 = vector.extract_strided_slice %2 {offsets = [0, 17], sizes = [4, 256], strides = [1, 1]} : vector<4x384xf32> to vector<4x256xf32>
    %46 = vector.extract_strided_slice %0 {offsets = [1, 0], sizes = [1, 256], strides = [1, 1]} : vector<8x256xf32> to vector<1x256xf32>
    %47 = vector.broadcast %46 : vector<1x256xf32> to vector<4x256xf32>
    %48 = arith.mulf %45, %47 : vector<4x256xf32>
    %c32 = arith.constant 32 : index
    %c0_15 = arith.constant 0 : index
    %49 = vector.load %arg8[%c32, %c0_15] : memref<256x256xf32, #tpu.memory_space<vmem>>, vector<4x256xf32>
    tpu.vector_store %arg8[%c32, %c0_15], %48 {strides = array<i32>} : memref<256x256xf32, #tpu.memory_space<vmem>>, vector<4x256xf32>,
    %50 = vector.extract_strided_slice %2 {offsets = [0, 18], sizes = [4, 256], strides = [1, 1]} : vector<4x384xf32> to vector<4x256xf32>
    %51 = vector.extract_strided_slice %0 {offsets = [2, 0], sizes = [1, 256], strides = [1, 1]} : vector<8x256xf32> to vector<1x256xf32>
    %52 = vector.broadcast %51 : vector<1x256xf32> to vector<4x256xf32>
    %53 = arith.mulf %50, %52 : vector<4x256xf32>
    %c36 = arith.constant 36 : index
    %c0_16 = arith.constant 0 : index
    %54 = vector.load %arg8[%c36, %c0_16] : memref<256x256xf32, #tpu.memory_space<vmem>>, vector<4x256xf32>
    tpu.vector_store %arg8[%c36, %c0_16], %53 {strides = array<i32>} : memref<256x256xf32, #tpu.memory_space<vmem>>, vector<4x256xf32>,
    %55 = vector.extract_strided_slice %2 {offsets = [0, 19], sizes = [4, 256], strides = [1, 1]} : vector<4x384xf32> to vector<4x256xf32>
    %56 = vector.extract_strided_slice %0 {offsets = [3, 0], sizes = [1, 256], strides = [1, 1]} : vector<8x256xf32> to vector<1x256xf32>
    %57 = vector.broadcast %56 : vector<1x256xf32> to vector<4x256xf32>
    %58 = arith.mulf %55, %57 : vector<4x256xf32>
    %c40 = arith.constant 40 : index
    %c0_17 = arith.constant 0 : index
    %59 = vector.load %arg8[%c40, %c0_17] : memref<256x256xf32, #tpu.memory_space<vmem>>, vector<4x256xf32>
    tpu.vector_store %arg8[%c40, %c0_17], %58 {strides = array<i32>} : memref<256x256xf32, #tpu.memory_space<vmem>>, vector<4x256xf32>,
    %60 = vector.extract_strided_slice %2 {offsets = [0, 20], sizes = [4, 256], strides = [1, 1]} : vector<4x384xf32> to vector<4x256xf32>
    %61 = vector.extract_strided_slice %0 {offsets = [4, 0], sizes = [1, 256], strides = [1, 1]} : vector<8x256xf32> to vector<1x256xf32>
    %62 = vector.broadcast %61 : vector<1x256xf32> to vector<4x256xf32>
    %63 = arith.mulf %60, %62 : vector<4x256xf32>
    %c44 = arith.constant 44 : index
    %c0_18 = arith.constant 0 : index
    %64 = vector.load %arg8[%c44, %c0_18] : memref<256x256xf32, #tpu.memory_space<vmem>>, vector<4x256xf32>
    tpu.vector_store %arg8[%c44, %c0_18], %63 {strides = array<i32>} : memref<256x256xf32, #tpu.memory_space<vmem>>, vector<4x256xf32>,
    %65 = vector.extract_strided_slice %2 {offsets = [0, 21], sizes = [4, 256], strides = [1, 1]} : vector<4x384xf32> to vector<4x256xf32>
    %66 = vector.extract_strided_slice %0 {offsets = [5, 0], sizes = [1, 256], strides = [1, 1]} : vector<8x256xf32> to vector<1x256xf32>
    %67 = vector.broadcast %66 : vector<1x256xf32> to vector<4x256xf32>
    %68 = arith.mulf %65, %67 : vector<4x256xf32>
    %c48 = arith.constant 48 : index
    %c0_19 = arith.constant 0 : index
    %69 = vector.load %arg8[%c48, %c0_19] : memref<256x256xf32, #tpu.memory_space<vmem>>, vector<4x256xf32>
    tpu.vector_store %arg8[%c48, %c0_19], %68 {strides = array<i32>} : memref<256x256xf32, #tpu.memory_space<vmem>>, vector<4x256xf32>,
    %70 = vector.extract_strided_slice %2 {offsets = [0, 22], sizes = [4, 256], strides = [1, 1]} : vector<4x384xf32> to vector<4x256xf32>
    %71 = vector.extract_strided_slice %0 {offsets = [6, 0], sizes = [1, 256], strides = [1, 1]} : vector<8x256xf32> to vector<1x256xf32>
    %72 = vector.broadcast %71 : vector<1x256xf32> to vector<4x256xf32>
    %73 = arith.mulf %70, %72 : vector<4x256xf32>
    %c52 = arith.constant 52 : index
    %c0_20 = arith.constant 0 : index
    %74 = vector.load %arg8[%c52, %c0_20] : memref<256x256xf32, #tpu.memory_space<vmem>>, vector<4x256xf32>
    tpu.vector_store %arg8[%c52, %c0_20], %73 {strides = array<i32>} : memref<256x256xf32, #tpu.memory_space<vmem>>, vector<4x256xf32>,
    %75 = vector.extract_strided_slice %2 {offsets = [0, 32], sizes = [4, 256], strides = [1, 1]} : vector<4x384xf32> to vector<4x256xf32>
    %76 = vector.extract_strided_slice %0 {offsets = [0, 0], sizes = [1, 256], strides = [1, 1]} : vector<8x256xf32> to vector<1x256xf32>
    %77 = vector.broadcast %76 : vector<1x256xf32> to vector<4x256xf32>
    %78 = arith.mulf %75, %77 : vector<4x256xf32>
    %c56 = arith.constant 56 : index
    %c0_21 = arith.constant 0 : index
    %79 = vector.load %arg8[%c56, %c0_21] : memref<256x256xf32, #tpu.memory_space<vmem>>, vector<4x256xf32>
    tpu.vector_store %arg8[%c56, %c0_21], %78 {strides = array<i32>} : memref<256x256xf32, #tpu.memory_space<vmem>>, vector<4x256xf32>,
    %80 = vector.extract_strided_slice %2 {offsets = [0, 33], sizes = [4, 256], strides = [1, 1]} : vector<4x384xf32> to vector<4x256xf32>
    %81 = vector.extract_strided_slice %0 {offsets = [1, 0], sizes = [1, 256], strides = [1, 1]} : vector<8x256xf32> to vector<1x256xf32>
    %82 = vector.broadcast %81 : vector<1x256xf32> to vector<4x256xf32>
    %83 = arith.mulf %80, %82 : vector<4x256xf32>
    %c60 = arith.constant 60 : index
    %c0_22 = arith.constant 0 : index
    %84 = vector.load %arg8[%c60, %c0_22] : memref<256x256xf32, #tpu.memory_space<vmem>>, vector<4x256xf32>
    tpu.vector_store %arg8[%c60, %c0_22], %83 {strides = array<i32>} : memref<256x256xf32, #tpu.memory_space<vmem>>, vector<4x256xf32>,
    %85 = vector.extract_strided_slice %2 {offsets = [0, 34], sizes = [4, 256], strides = [1, 1]} : vector<4x384xf32> to vector<4x256xf32>
    %86 = vector.extract_strided_slice %0 {offsets = [2, 0], sizes = [1, 256], strides = [1, 1]} : vector<8x256xf32> to vector<1x256xf32>
    %87 = vector.broadcast %86 : vector<1x256xf32> to vector<4x256xf32>
    %88 = arith.mulf %85, %87 : vector<4x256xf32>
    %c64 = arith.constant 64 : index
    %c0_23 = arith.constant 0 : index
    %89 = vector.load %arg8[%c64, %c0_23] : memref<256x256xf32, #tpu.memory_space<vmem>>, vector<4x256xf32>
    tpu.vector_store %arg8[%c64, %c0_23], %88 {strides = array<i32>} : memref<256x256xf32, #tpu.memory_space<vmem>>, vector<4x256xf32>,
    %90 = vector.extract_strided_slice %2 {offsets = [0, 35], sizes = [4, 256], strides = [1, 1]} : vector<4x384xf32> to vector<4x256xf32>
    %91 = vector.extract_strided_slice %0 {offsets = [3, 0], sizes = [1, 256], strides = [1, 1]} : vector<8x256xf32> to vector<1x256xf32>
    %92 = vector.broadcast %91 : vector<1x256xf32> to vector<4x256xf32>
    %93 = arith.mulf %90, %92 : vector<4x256xf32>
    %c68 = arith.constant 68 : index
    %c0_24 = arith.constant 0 : index
    %94 = vector.load %arg8[%c68, %c0_24] : memref<256x256xf32, #tpu.memory_space<vmem>>, vector<4x256xf32>
    tpu.vector_store %arg8[%c68, %c0_24], %93 {strides = array<i32>} : memref<256x256xf32, #tpu.memory_space<vmem>>, vector<4x256xf32>,
    %95 = vector.extract_strided_slice %2 {offsets = [0, 36], sizes = [4, 256], strides = [1, 1]} : vector<4x384xf32> to vector<4x256xf32>
    %96 = vector.extract_strided_slice %0 {offsets = [4, 0], sizes = [1, 256], strides = [1, 1]} : vector<8x256xf32> to vector<1x256xf32>
    %97 = vector.broadcast %96 : vector<1x256xf32> to vector<4x256xf32>
    %98 = arith.mulf %95, %97 : vector<4x256xf32>
    %c72 = arith.constant 72 : index
    %c0_25 = arith.constant 0 : index
    %99 = vector.load %arg8[%c72, %c0_25] : memref<256x256xf32, #tpu.memory_space<vmem>>, vector<4x256xf32>
    tpu.vector_store %arg8[%c72, %c0_25], %98 {strides = array<i32>} : memref<256x256xf32, #tpu.memory_space<vmem>>, vector<4x256xf32>,
    %100 = vector.extract_strided_slice %2 {offsets = [0, 37], sizes = [4, 256], strides = [1, 1]} : vector<4x384xf32> to vector<4x256xf32>
    %101 = vector.extract_strided_slice %0 {offsets = [5, 0], sizes = [1, 256], strides = [1, 1]} : vector<8x256xf32> to vector<1x256xf32>
    %102 = vector.broadcast %101 : vector<1x256xf32> to vector<4x256xf32>
    %103 = arith.mulf %100, %102 : vector<4x256xf32>
    %c76 = arith.constant 76 : index
    %c0_26 = arith.constant 0 : index
    %104 = vector.load %arg8[%c76, %c0_26] : memref<256x256xf32, #tpu.memory_space<vmem>>, vector<4x256xf32>
    tpu.vector_store %arg8[%c76, %c0_26], %103 {strides = array<i32>} : memref<256x256xf32, #tpu.memory_space<vmem>>, vector<4x256xf32>,
    %105 = vector.extract_strided_slice %2 {offsets = [0, 38], sizes = [4, 256], strides = [1, 1]} : vector<4x384xf32> to vector<4x256xf32>
    %106 = vector.extract_strided_slice %0 {offsets = [6, 0], sizes = [1, 256], strides = [1, 1]} : vector<8x256xf32> to vector<1x256xf32>
    %107 = vector.broadcast %106 : vector<1x256xf32> to vector<4x256xf32>
    %108 = arith.mulf %105, %107 : vector<4x256xf32>
    %c80 = arith.constant 80 : index
    %c0_27 = arith.constant 0 : index
    %109 = vector.load %arg8[%c80, %c0_27] : memref<256x256xf32, #tpu.memory_space<vmem>>, vector<4x256xf32>
    tpu.vector_store %arg8[%c80, %c0_27], %108 {strides = array<i32>} : memref<256x256xf32, #tpu.memory_space<vmem>>, vector<4x256xf32>,
    %110 = vector.extract_strided_slice %2 {offsets = [0, 48], sizes = [4, 256], strides = [1, 1]} : vector<4x384xf32> to vector<4x256xf32>
    %111 = vector.extract_strided_slice %0 {offsets = [0, 0], sizes = [1, 256], strides = [1, 1]} : vector<8x256xf32> to vector<1x256xf32>
    %112 = vector.broadcast %111 : vector<1x256xf32> to vector<4x256xf32>
    %113 = arith.mulf %110, %112 : vector<4x256xf32>
    %c84 = arith.constant 84 : index
    %c0_28 = arith.constant 0 : index
    %114 = vector.load %arg8[%c84, %c0_28] : memref<256x256xf32, #tpu.memory_space<vmem>>, vector<4x256xf32>
    tpu.vector_store %arg8[%c84, %c0_28], %113 {strides = array<i32>} : memref<256x256xf32, #tpu.memory_space<vmem>>, vector<4x256xf32>,
    %115 = vector.extract_strided_slice %2 {offsets = [0, 49], sizes = [4, 256], strides = [1, 1]} : vector<4x384xf32> to vector<4x256xf32>
    %116 = vector.extract_strided_slice %0 {offsets = [1, 0], sizes = [1, 256], strides = [1, 1]} : vector<8x256xf32> to vector<1x256xf32>
    %117 = vector.broadcast %116 : vector<1x256xf32> to vector<4x256xf32>
    %118 = arith.mulf %115, %117 : vector<4x256xf32>
    %c88 = arith.constant 88 : index
    %c0_29 = arith.constant 0 : index
    %119 = vector.load %arg8[%c88, %c0_29] : memref<256x256xf32, #tpu.memory_space<vmem>>, vector<4x256xf32>
    tpu.vector_store %arg8[%c88, %c0_29], %118 {strides = array<i32>} : memref<256x256xf32, #tpu.memory_space<vmem>>, vector<4x256xf32>,
    %120 = vector.extract_strided_slice %2 {offsets = [0, 50], sizes = [4, 256], strides = [1, 1]} : vector<4x384xf32> to vector<4x256xf32>
    %121 = vector.extract_strided_slice %0 {offsets = [2, 0], sizes = [1, 256], strides = [1, 1]} : vector<8x256xf32> to vector<1x256xf32>
    %122 = vector.broadcast %121 : vector<1x256xf32> to vector<4x256xf32>
    %123 = arith.mulf %120, %122 : vector<4x256xf32>
    %c92 = arith.constant 92 : index
    %c0_30 = arith.constant 0 : index
    %124 = vector.load %arg8[%c92, %c0_30] : memref<256x256xf32, #tpu.memory_space<vmem>>, vector<4x256xf32>
    tpu.vector_store %arg8[%c92, %c0_30], %123 {strides = array<i32>} : memref<256x256xf32, #tpu.memory_space<vmem>>, vector<4x256xf32>,
    %125 = vector.extract_strided_slice %2 {offsets = [0, 51], sizes = [4, 256], strides = [1, 1]} : vector<4x384xf32> to vector<4x256xf32>
    %126 = vector.extract_strided_slice %0 {offsets = [3, 0], sizes = [1, 256], strides = [1, 1]} : vector<8x256xf32> to vector<1x256xf32>
    %127 = vector.broadcast %126 : vector<1x256xf32> to vector<4x256xf32>
    %128 = arith.mulf %125, %127 : vector<4x256xf32>
    %c96 = arith.constant 96 : index
    %c0_31 = arith.constant 0 : index
    %129 = vector.load %arg8[%c96, %c0_31] : memref<256x256xf32, #tpu.memory_space<vmem>>, vector<4x256xf32>
    tpu.vector_store %arg8[%c96, %c0_31], %128 {strides = array<i32>} : memref<256x256xf32, #tpu.memory_space<vmem>>, vector<4x256xf32>,
    %130 = vector.extract_strided_slice %2 {offsets = [0, 52], sizes = [4, 256], strides = [1, 1]} : vector<4x384xf32> to vector<4x256xf32>
    %131 = vector.extract_strided_slice %0 {offsets = [4, 0], sizes = [1, 256], strides = [1, 1]} : vector<8x256xf32> to vector<1x256xf32>
    %132 = vector.broadcast %131 : vector<1x256xf32> to vector<4x256xf32>
    %133 = arith.mulf %130, %132 : vector<4x256xf32>
    %c100 = arith.constant 100 : index
    %c0_32 = arith.constant 0 : index
    %134 = vector.load %arg8[%c100, %c0_32] : memref<256x256xf32, #tpu.memory_space<vmem>>, vector<4x256xf32>
    tpu.vector_store %arg8[%c100, %c0_32], %133 {strides = array<i32>} : memref<256x256xf32, #tpu.memory_space<vmem>>, vector<4x256xf32>,
    %135 = vector.extract_strided_slice %2 {offsets = [0, 53], sizes = [4, 256], strides = [1, 1]} : vector<4x384xf32> to vector<4x256xf32>
    %136 = vector.extract_strided_slice %0 {offsets = [5, 0], sizes = [1, 256], strides = [1, 1]} : vector<8x256xf32> to vector<1x256xf32>
    %137 = vector.broadcast %136 : vector<1x256xf32> to vector<4x256xf32>
    %138 = arith.mulf %135, %137 : vector<4x256xf32>
    %c104 = arith.constant 104 : index
    %c0_33 = arith.constant 0 : index
    %139 = vector.load %arg8[%c104, %c0_33] : memref<256x256xf32, #tpu.memory_space<vmem>>, vector<4x256xf32>
    tpu.vector_store %arg8[%c104, %c0_33], %138 {strides = array<i32>} : memref<256x256xf32, #tpu.memory_space<vmem>>, vector<4x256xf32>,
    %140 = vector.extract_strided_slice %2 {offsets = [0, 54], sizes = [4, 256], strides = [1, 1]} : vector<4x384xf32> to vector<4x256xf32>
    %141 = vector.extract_strided_slice %0 {offsets = [6, 0], sizes = [1, 256], strides = [1, 1]} : vector<8x256xf32> to vector<1x256xf32>
    %142 = vector.broadcast %141 : vector<1x256xf32> to vector<4x256xf32>
    %143 = arith.mulf %140, %142 : vector<4x256xf32>
    %c108 = arith.constant 108 : index
    %c0_34 = arith.constant 0 : index
    %144 = vector.load %arg8[%c108, %c0_34] : memref<256x256xf32, #tpu.memory_space<vmem>>, vector<4x256xf32>
    tpu.vector_store %arg8[%c108, %c0_34], %143 {strides = array<i32>} : memref<256x256xf32, #tpu.memory_space<vmem>>, vector<4x256xf32>,
    %145 = vector.extract_strided_slice %2 {offsets = [0, 64], sizes = [4, 256], strides = [1, 1]} : vector<4x384xf32> to vector<4x256xf32>
    %146 = vector.extract_strided_slice %0 {offsets = [0, 0], sizes = [1, 256], strides = [1, 1]} : vector<8x256xf32> to vector<1x256xf32>
    %147 = vector.broadcast %146 : vector<1x256xf32> to vector<4x256xf32>
    %148 = arith.mulf %145, %147 : vector<4x256xf32>
    %c112 = arith.constant 112 : index
    %c0_35 = arith.constant 0 : index
    %149 = vector.load %arg8[%c112, %c0_35] : memref<256x256xf32, #tpu.memory_space<vmem>>, vector<4x256xf32>
    tpu.vector_store %arg8[%c112, %c0_35], %148 {strides = array<i32>} : memref<256x256xf32, #tpu.memory_space<vmem>>, vector<4x256xf32>,
    %150 = vector.extract_strided_slice %2 {offsets = [0, 65], sizes = [4, 256], strides = [1, 1]} : vector<4x384xf32> to vector<4x256xf32>
    %151 = vector.extract_strided_slice %0 {offsets = [1, 0], sizes = [1, 256], strides = [1, 1]} : vector<8x256xf32> to vector<1x256xf32>
    %152 = vector.broadcast %151 : vector<1x256xf32> to vector<4x256xf32>
    %153 = arith.mulf %150, %152 : vector<4x256xf32>
    %c116 = arith.constant 116 : index
    %c0_36 = arith.constant 0 : index
    %154 = vector.load %arg8[%c116, %c0_36] : memref<256x256xf32, #tpu.memory_space<vmem>>, vector<4x256xf32>
    tpu.vector_store %arg8[%c116, %c0_36], %153 {strides = array<i32>} : memref<256x256xf32, #tpu.memory_space<vmem>>, vector<4x256xf32>,
    %155 = vector.extract_strided_slice %2 {offsets = [0, 66], sizes = [4, 256], strides = [1, 1]} : vector<4x384xf32> to vector<4x256xf32>
    %156 = vector.extract_strided_slice %0 {offsets = [2, 0], sizes = [1, 256], strides = [1, 1]} : vector<8x256xf32> to vector<1x256xf32>
    %157 = vector.broadcast %156 : vector<1x256xf32> to vector<4x256xf32>
    %158 = arith.mulf %155, %157 : vector<4x256xf32>
    %c120 = arith.constant 120 : index
    %c0_37 = arith.constant 0 : index
    %159 = vector.load %arg8[%c120, %c0_37] : memref<256x256xf32, #tpu.memory_space<vmem>>, vector<4x256xf32>
    tpu.vector_store %arg8[%c120, %c0_37], %158 {strides = array<i32>} : memref<256x256xf32, #tpu.memory_space<vmem>>, vector<4x256xf32>,
    %160 = vector.extract_strided_slice %2 {offsets = [0, 67], sizes = [4, 256], strides = [1, 1]} : vector<4x384xf32> to vector<4x256xf32>
    %161 = vector.extract_strided_slice %0 {offsets = [3, 0], sizes = [1, 256], strides = [1, 1]} : vector<8x256xf32> to vector<1x256xf32>
    %162 = vector.broadcast %161 : vector<1x256xf32> to vector<4x256xf32>
    %163 = arith.mulf %160, %162 : vector<4x256xf32>
    %c124 = arith.constant 124 : index
    %c0_38 = arith.constant 0 : index
    %164 = vector.load %arg8[%c124, %c0_38] : memref<256x256xf32, #tpu.memory_space<vmem>>, vector<4x256xf32>
    tpu.vector_store %arg8[%c124, %c0_38], %163 {strides = array<i32>} : memref<256x256xf32, #tpu.memory_space<vmem>>, vector<4x256xf32>,
    %165 = vector.extract_strided_slice %2 {offsets = [0, 68], sizes = [4, 256], strides = [1, 1]} : vector<4x384xf32> to vector<4x256xf32>
    %166 = vector.extract_strided_slice %0 {offsets = [4, 0], sizes = [1, 256], strides = [1, 1]} : vector<8x256xf32> to vector<1x256xf32>
    %167 = vector.broadcast %166 : vector<1x256xf32> to vector<4x256xf32>
    %168 = arith.mulf %165, %167 : vector<4x256xf32>
    %c128 = arith.constant 128 : index
    %c0_39 = arith.constant 0 : index
    %169 = vector.load %arg8[%c128, %c0_39] : memref<256x256xf32, #tpu.memory_space<vmem>>, vector<4x256xf32>
    tpu.vector_store %arg8[%c128, %c0_39], %168 {strides = array<i32>} : memref<256x256xf32, #tpu.memory_space<vmem>>, vector<4x256xf32>,
    %170 = vector.extract_strided_slice %2 {offsets = [0, 69], sizes = [4, 256], strides = [1, 1]} : vector<4x384xf32> to vector<4x256xf32>
    %171 = vector.extract_strided_slice %0 {offsets = [5, 0], sizes = [1, 256], strides = [1, 1]} : vector<8x256xf32> to vector<1x256xf32>
    %172 = vector.broadcast %171 : vector<1x256xf32> to vector<4x256xf32>
    %173 = arith.mulf %170, %172 : vector<4x256xf32>
    %c132 = arith.constant 132 : index
    %c0_40 = arith.constant 0 : index
    %174 = vector.load %arg8[%c132, %c0_40] : memref<256x256xf32, #tpu.memory_space<vmem>>, vector<4x256xf32>
    tpu.vector_store %arg8[%c132, %c0_40], %173 {strides = array<i32>} : memref<256x256xf32, #tpu.memory_space<vmem>>, vector<4x256xf32>,
    %175 = vector.extract_strided_slice %2 {offsets = [0, 70], sizes = [4, 256], strides = [1, 1]} : vector<4x384xf32> to vector<4x256xf32>
    %176 = vector.extract_strided_slice %0 {offsets = [6, 0], sizes = [1, 256], strides = [1, 1]} : vector<8x256xf32> to vector<1x256xf32>
    %177 = vector.broadcast %176 : vector<1x256xf32> to vector<4x256xf32>
    %178 = arith.mulf %175, %177 : vector<4x256xf32>
    %c136 = arith.constant 136 : index
    %c0_41 = arith.constant 0 : index
    %179 = vector.load %arg8[%c136, %c0_41] : memref<256x256xf32, #tpu.memory_space<vmem>>, vector<4x256xf32>
    tpu.vector_store %arg8[%c136, %c0_41], %178 {strides = array<i32>} : memref<256x256xf32, #tpu.memory_space<vmem>>, vector<4x256xf32>,
    %180 = vector.extract_strided_slice %2 {offsets = [0, 80], sizes = [4, 256], strides = [1, 1]} : vector<4x384xf32> to vector<4x256xf32>
    %181 = vector.extract_strided_slice %0 {offsets = [0, 0], sizes = [1, 256], strides = [1, 1]} : vector<8x256xf32> to vector<1x256xf32>
    %182 = vector.broadcast %181 : vector<1x256xf32> to vector<4x256xf32>
    %183 = arith.mulf %180, %182 : vector<4x256xf32>
    %c140 = arith.constant 140 : index
    %c0_42 = arith.constant 0 : index
    %184 = vector.load %arg8[%c140, %c0_42] : memref<256x256xf32, #tpu.memory_space<vmem>>, vector<4x256xf32>
    tpu.vector_store %arg8[%c140, %c0_42], %183 {strides = array<i32>} : memref<256x256xf32, #tpu.memory_space<vmem>>, vector<4x256xf32>,
    %185 = vector.extract_strided_slice %2 {offsets = [0, 81], sizes = [4, 256], strides = [1, 1]} : vector<4x384xf32> to vector<4x256xf32>
    %186 = vector.extract_strided_slice %0 {offsets = [1, 0], sizes = [1, 256], strides = [1, 1]} : vector<8x256xf32> to vector<1x256xf32>
    %187 = vector.broadcast %186 : vector<1x256xf32> to vector<4x256xf32>
    %188 = arith.mulf %185, %187 : vector<4x256xf32>
    %c144 = arith.constant 144 : index
    %c0_43 = arith.constant 0 : index
    %189 = vector.load %arg8[%c144, %c0_43] : memref<256x256xf32, #tpu.memory_space<vmem>>, vector<4x256xf32>
    tpu.vector_store %arg8[%c144, %c0_43], %188 {strides = array<i32>} : memref<256x256xf32, #tpu.memory_space<vmem>>, vector<4x256xf32>,
    %190 = vector.extract_strided_slice %2 {offsets = [0, 82], sizes = [4, 256], strides = [1, 1]} : vector<4x384xf32> to vector<4x256xf32>
    %191 = vector.extract_strided_slice %0 {offsets = [2, 0], sizes = [1, 256], strides = [1, 1]} : vector<8x256xf32> to vector<1x256xf32>
    %192 = vector.broadcast %191 : vector<1x256xf32> to vector<4x256xf32>
    %193 = arith.mulf %190, %192 : vector<4x256xf32>
    %c148 = arith.constant 148 : index
    %c0_44 = arith.constant 0 : index
    %194 = vector.load %arg8[%c148, %c0_44] : memref<256x256xf32, #tpu.memory_space<vmem>>, vector<4x256xf32>
    tpu.vector_store %arg8[%c148, %c0_44], %193 {strides = array<i32>} : memref<256x256xf32, #tpu.memory_space<vmem>>, vector<4x256xf32>,
    %195 = vector.extract_strided_slice %2 {offsets = [0, 83], sizes = [4, 256], strides = [1, 1]} : vector<4x384xf32> to vector<4x256xf32>
    %196 = vector.extract_strided_slice %0 {offsets = [3, 0], sizes = [1, 256], strides = [1, 1]} : vector<8x256xf32> to vector<1x256xf32>
    %197 = vector.broadcast %196 : vector<1x256xf32> to vector<4x256xf32>
    %198 = arith.mulf %195, %197 : vector<4x256xf32>
    %c152 = arith.constant 152 : index
    %c0_45 = arith.constant 0 : index
    %199 = vector.load %arg8[%c152, %c0_45] : memref<256x256xf32, #tpu.memory_space<vmem>>, vector<4x256xf32>
    tpu.vector_store %arg8[%c152, %c0_45], %198 {strides = array<i32>} : memref<256x256xf32, #tpu.memory_space<vmem>>, vector<4x256xf32>,
    %200 = vector.extract_strided_slice %2 {offsets = [0, 84], sizes = [4, 256], strides = [1, 1]} : vector<4x384xf32> to vector<4x256xf32>
    %201 = vector.extract_strided_slice %0 {offsets = [4, 0], sizes = [1, 256], strides = [1, 1]} : vector<8x256xf32> to vector<1x256xf32>
    %202 = vector.broadcast %201 : vector<1x256xf32> to vector<4x256xf32>
    %203 = arith.mulf %200, %202 : vector<4x256xf32>
    %c156 = arith.constant 156 : index
    %c0_46 = arith.constant 0 : index
    %204 = vector.load %arg8[%c156, %c0_46] : memref<256x256xf32, #tpu.memory_space<vmem>>, vector<4x256xf32>
    tpu.vector_store %arg8[%c156, %c0_46], %203 {strides = array<i32>} : memref<256x256xf32, #tpu.memory_space<vmem>>, vector<4x256xf32>,
    %205 = vector.extract_strided_slice %2 {offsets = [0, 85], sizes = [4, 256], strides = [1, 1]} : vector<4x384xf32> to vector<4x256xf32>
    %206 = vector.extract_strided_slice %0 {offsets = [5, 0], sizes = [1, 256], strides = [1, 1]} : vector<8x256xf32> to vector<1x256xf32>
    %207 = vector.broadcast %206 : vector<1x256xf32> to vector<4x256xf32>
    %208 = arith.mulf %205, %207 : vector<4x256xf32>
    %c160 = arith.constant 160 : index
    %c0_47 = arith.constant 0 : index
    %209 = vector.load %arg8[%c160, %c0_47] : memref<256x256xf32, #tpu.memory_space<vmem>>, vector<4x256xf32>
    tpu.vector_store %arg8[%c160, %c0_47], %208 {strides = array<i32>} : memref<256x256xf32, #tpu.memory_space<vmem>>, vector<4x256xf32>,
    %210 = vector.extract_strided_slice %2 {offsets = [0, 86], sizes = [4, 256], strides = [1, 1]} : vector<4x384xf32> to vector<4x256xf32>
    %211 = vector.extract_strided_slice %0 {offsets = [6, 0], sizes = [1, 256], strides = [1, 1]} : vector<8x256xf32> to vector<1x256xf32>
    %212 = vector.broadcast %211 : vector<1x256xf32> to vector<4x256xf32>
    %213 = arith.mulf %210, %212 : vector<4x256xf32>
    %c164 = arith.constant 164 : index
    %c0_48 = arith.constant 0 : index
    %214 = vector.load %arg8[%c164, %c0_48] : memref<256x256xf32, #tpu.memory_space<vmem>>, vector<4x256xf32>
    tpu.vector_store %arg8[%c164, %c0_48], %213 {strides = array<i32>} : memref<256x256xf32, #tpu.memory_space<vmem>>, vector<4x256xf32>,
    %215 = vector.extract_strided_slice %2 {offsets = [0, 96], sizes = [4, 256], strides = [1, 1]} : vector<4x384xf32> to vector<4x256xf32>
    %216 = vector.extract_strided_slice %0 {offsets = [0, 0], sizes = [1, 256], strides = [1, 1]} : vector<8x256xf32> to vector<1x256xf32>
    %217 = vector.broadcast %216 : vector<1x256xf32> to vector<4x256xf32>
    %218 = arith.mulf %215, %217 : vector<4x256xf32>
    %c168 = arith.constant 168 : index
    %c0_49 = arith.constant 0 : index
    %219 = vector.load %arg8[%c168, %c0_49] : memref<256x256xf32, #tpu.memory_space<vmem>>, vector<4x256xf32>
    tpu.vector_store %arg8[%c168, %c0_49], %218 {strides = array<i32>} : memref<256x256xf32, #tpu.memory_space<vmem>>, vector<4x256xf32>,
    %220 = vector.extract_strided_slice %2 {offsets = [0, 97], sizes = [4, 256], strides = [1, 1]} : vector<4x384xf32> to vector<4x256xf32>
    %221 = vector.extract_strided_slice %0 {offsets = [1, 0], sizes = [1, 256], strides = [1, 1]} : vector<8x256xf32> to vector<1x256xf32>
    %222 = vector.broadcast %221 : vector<1x256xf32> to vector<4x256xf32>
    %223 = arith.mulf %220, %222 : vector<4x256xf32>
    %c172 = arith.constant 172 : index
    %c0_50 = arith.constant 0 : index
    %224 = vector.load %arg8[%c172, %c0_50] : memref<256x256xf32, #tpu.memory_space<vmem>>, vector<4x256xf32>
    tpu.vector_store %arg8[%c172, %c0_50], %223 {strides = array<i32>} : memref<256x256xf32, #tpu.memory_space<vmem>>, vector<4x256xf32>,
    %225 = vector.extract_strided_slice %2 {offsets = [0, 98], sizes = [4, 256], strides = [1, 1]} : vector<4x384xf32> to vector<4x256xf32>
    %226 = vector.extract_strided_slice %0 {offsets = [2, 0], sizes = [1, 256], strides = [1, 1]} : vector<8x256xf32> to vector<1x256xf32>
    %227 = vector.broadcast %226 : vector<1x256xf32> to vector<4x256xf32>
    %228 = arith.mulf %225, %227 : vector<4x256xf32>
    %c176 = arith.constant 176 : index
    %c0_51 = arith.constant 0 : index
    %229 = vector.load %arg8[%c176, %c0_51] : memref<256x256xf32, #tpu.memory_space<vmem>>, vector<4x256xf32>
    tpu.vector_store %arg8[%c176, %c0_51], %228 {strides = array<i32>} : memref<256x256xf32, #tpu.memory_space<vmem>>, vector<4x256xf32>,
    %230 = vector.extract_strided_slice %2 {offsets = [0, 99], sizes = [4, 256], strides = [1, 1]} : vector<4x384xf32> to vector<4x256xf32>
    %231 = vector.extract_strided_slice %0 {offsets = [3, 0], sizes = [1, 256], strides = [1, 1]} : vector<8x256xf32> to vector<1x256xf32>
    %232 = vector.broadcast %231 : vector<1x256xf32> to vector<4x256xf32>
    %233 = arith.mulf %230, %232 : vector<4x256xf32>
    %c180 = arith.constant 180 : index
    %c0_52 = arith.constant 0 : index
    %234 = vector.load %arg8[%c180, %c0_52] : memref<256x256xf32, #tpu.memory_space<vmem>>, vector<4x256xf32>
    tpu.vector_store %arg8[%c180, %c0_52], %233 {strides = array<i32>} : memref<256x256xf32, #tpu.memory_space<vmem>>, vector<4x256xf32>,
    %235 = vector.extract_strided_slice %2 {offsets = [0, 100], sizes = [4, 256], strides = [1, 1]} : vector<4x384xf32> to vector<4x256xf32>
    %236 = vector.extract_strided_slice %0 {offsets = [4, 0], sizes = [1, 256], strides = [1, 1]} : vector<8x256xf32> to vector<1x256xf32>
    %237 = vector.broadcast %236 : vector<1x256xf32> to vector<4x256xf32>
    %238 = arith.mulf %235, %237 : vector<4x256xf32>
    %c184 = arith.constant 184 : index
    %c0_53 = arith.constant 0 : index
    %239 = vector.load %arg8[%c184, %c0_53] : memref<256x256xf32, #tpu.memory_space<vmem>>, vector<4x256xf32>
    tpu.vector_store %arg8[%c184, %c0_53], %238 {strides = array<i32>} : memref<256x256xf32, #tpu.memory_space<vmem>>, vector<4x256xf32>,
    %240 = vector.extract_strided_slice %2 {offsets = [0, 101], sizes = [4, 256], strides = [1, 1]} : vector<4x384xf32> to vector<4x256xf32>
    %241 = vector.extract_strided_slice %0 {offsets = [5, 0], sizes = [1, 256], strides = [1, 1]} : vector<8x256xf32> to vector<1x256xf32>
    %242 = vector.broadcast %241 : vector<1x256xf32> to vector<4x256xf32>
    %243 = arith.mulf %240, %242 : vector<4x256xf32>
    %c188 = arith.constant 188 : index
    %c0_54 = arith.constant 0 : index
    %244 = vector.load %arg8[%c188, %c0_54] : memref<256x256xf32, #tpu.memory_space<vmem>>, vector<4x256xf32>
    tpu.vector_store %arg8[%c188, %c0_54], %243 {strides = array<i32>} : memref<256x256xf32, #tpu.memory_space<vmem>>, vector<4x256xf32>,
    %245 = vector.extract_strided_slice %2 {offsets = [0, 102], sizes = [4, 256], strides = [1, 1]} : vector<4x384xf32> to vector<4x256xf32>
    %246 = vector.extract_strided_slice %0 {offsets = [6, 0], sizes = [1, 256], strides = [1, 1]} : vector<8x256xf32> to vector<1x256xf32>
    %247 = vector.broadcast %246 : vector<1x256xf32> to vector<4x256xf32>
    %248 = arith.mulf %245, %247 : vector<4x256xf32>
    %c192 = arith.constant 192 : index
    %c0_55 = arith.constant 0 : index
    %249 = vector.load %arg8[%c192, %c0_55] : memref<256x256xf32, #tpu.memory_space<vmem>>, vector<4x256xf32>
    tpu.vector_store %arg8[%c192, %c0_55], %248 {strides = array<i32>} : memref<256x256xf32, #tpu.memory_space<vmem>>, vector<4x256xf32>,
    %c0_56 = arith.constant 0 : index
    %c0_57 = arith.constant 0 : index
    %250 = vector.load %arg2[%c0_56, %c0_57] : memref<8x256xf32, #tpu.memory_space<vmem>>, vector<8x256xf32>
    %c0_58 = arith.constant 0 : index
    %c0_59 = arith.constant 0 : index
    %251 = vector.load %arg8[%c0_58, %c0_59] : memref<256x256xf32, #tpu.memory_space<vmem>>, vector<256x256xf32>
    %cst_60 = arith.constant dense<0.000000e+00> : vector<8x256xf32>
    %252 = tpu.matmul %250, %251, %cst_60 {dimension_numbers = #tpu.dot_dimension_numbers<[1], [0], [0], [1], [0, 0, 1, 1], [], []>} : vector<8x256xf32>, vector<256x256xf32>, vector<8x256xf32> -> vector<8x256xf32>
    %c0_61 = arith.constant 0 : index
    %c0_62 = arith.constant 0 : index
    %253 = vector.load %arg3[%c0_61, %c0_62] : memref<8x1xf32, #tpu.memory_space<vmem>>, vector<8x1xf32>
    %254 = vector.broadcast %253 : vector<8x1xf32> to vector<8x256xf32>
    %255 = arith.addf %252, %254 : vector<8x256xf32>
    %cst_63 = arith.constant 0.000000e+00 : f32
    %256 = vector.broadcast %cst_63 : f32 to vector<8x256xf32>
    %257 = arith.maximumf %255, %256 : vector<8x256xf32>
    %cst_64 = arith.constant 0.000000e+00 : f32
    %258 = vector.broadcast %cst_64 : f32 to vector<8x512xf32>
    %c0_65 = arith.constant 0 : index
    %c0_66 = arith.constant 0 : index
    %259 = vector.load %arg9[%c0_65, %c0_66] : memref<8x512xf32, #tpu.memory_space<vmem>>, vector<8x512xf32>
    tpu.vector_store %arg9[%c0_65, %c0_66], %258 {strides = array<i32>} : memref<8x512xf32, #tpu.memory_space<vmem>>, vector<8x512xf32>,
    %c0_67 = arith.constant 0 : index
    %c128_68 = arith.constant 128 : index
    %260 = vector.load %arg9[%c0_67, %c128_68] : memref<8x512xf32, #tpu.memory_space<vmem>>, vector<8x256xf32>
    tpu.vector_store %arg9[%c0_67, %c128_68], %257 {strides = array<i32>} : memref<8x512xf32, #tpu.memory_space<vmem>>, vector<8x256xf32>,
    %c0_69 = arith.constant 0 : index
    %c0_70 = arith.constant 0 : index
    %261 = vector.load %arg9[%c0_69, %c0_70] : memref<8x512xf32, #tpu.memory_space<vmem>>, vector<8x512xf32>
    %cst_71 = arith.constant 0.000000e+00 : f32
    %262 = vector.broadcast %cst_71 : f32 to vector<512x256xf32>
    %c0_72 = arith.constant 0 : index
    %c0_73 = arith.constant 0 : index
    %263 = vector.load %arg10[%c0_72, %c0_73] : memref<512x256xf32, #tpu.memory_space<vmem>>, vector<512x256xf32>
    tpu.vector_store %arg10[%c0_72, %c0_73], %262 {strides = array<i32>} : memref<512x256xf32, #tpu.memory_space<vmem>>, vector<512x256xf32>,
    %264 = vector.extract_strided_slice %261 {offsets = [0, 77], sizes = [8, 256], strides = [1, 1]} : vector<8x512xf32> to vector<8x256xf32>
    %265 = vector.extract_strided_slice %0 {offsets = [0, 0], sizes = [1, 256], strides = [1, 1]} : vector<8x256xf32> to vector<1x256xf32>
    %266 = vector.broadcast %265 : vector<1x256xf32> to vector<8x256xf32>
    %267 = arith.mulf %264, %266 : vector<8x256xf32>
    %c0_74 = arith.constant 0 : index
    %c0_75 = arith.constant 0 : index
    %268 = vector.load %arg10[%c0_74, %c0_75] : memref<512x256xf32, #tpu.memory_space<vmem>>, vector<8x256xf32>
    tpu.vector_store %arg10[%c0_74, %c0_75], %267 {strides = array<i32>} : memref<512x256xf32, #tpu.memory_space<vmem>>, vector<8x256xf32>,
    %269 = vector.extract_strided_slice %261 {offsets = [0, 78], sizes = [8, 256], strides = [1, 1]} : vector<8x512xf32> to vector<8x256xf32>
    %270 = vector.extract_strided_slice %0 {offsets = [1, 0], sizes = [1, 256], strides = [1, 1]} : vector<8x256xf32> to vector<1x256xf32>
    %271 = vector.broadcast %270 : vector<1x256xf32> to vector<8x256xf32>
    %272 = arith.mulf %269, %271 : vector<8x256xf32>
    %c8_76 = arith.constant 8 : index
    %c0_77 = arith.constant 0 : index
    %273 = vector.load %arg10[%c8_76, %c0_77] : memref<512x256xf32, #tpu.memory_space<vmem>>, vector<8x256xf32>
    tpu.vector_store %arg10[%c8_76, %c0_77], %272 {strides = array<i32>} : memref<512x256xf32, #tpu.memory_space<vmem>>, vector<8x256xf32>,
    %274 = vector.extract_strided_slice %261 {offsets = [0, 79], sizes = [8, 256], strides = [1, 1]} : vector<8x512xf32> to vector<8x256xf32>
    %275 = vector.extract_strided_slice %0 {offsets = [2, 0], sizes = [1, 256], strides = [1, 1]} : vector<8x256xf32> to vector<1x256xf32>
    %276 = vector.broadcast %275 : vector<1x256xf32> to vector<8x256xf32>
    %277 = arith.mulf %274, %276 : vector<8x256xf32>
    %c16_78 = arith.constant 16 : index
    %c0_79 = arith.constant 0 : index
    %278 = vector.load %arg10[%c16_78, %c0_79] : memref<512x256xf32, #tpu.memory_space<vmem>>, vector<8x256xf32>
    tpu.vector_store %arg10[%c16_78, %c0_79], %277 {strides = array<i32>} : memref<512x256xf32, #tpu.memory_space<vmem>>, vector<8x256xf32>,
    %279 = vector.extract_strided_slice %261 {offsets = [0, 80], sizes = [8, 256], strides = [1, 1]} : vector<8x512xf32> to vector<8x256xf32>
    %280 = vector.extract_strided_slice %0 {offsets = [3, 0], sizes = [1, 256], strides = [1, 1]} : vector<8x256xf32> to vector<1x256xf32>
    %281 = vector.broadcast %280 : vector<1x256xf32> to vector<8x256xf32>
    %282 = arith.mulf %279, %281 : vector<8x256xf32>
    %c24_80 = arith.constant 24 : index
    %c0_81 = arith.constant 0 : index
    %283 = vector.load %arg10[%c24_80, %c0_81] : memref<512x256xf32, #tpu.memory_space<vmem>>, vector<8x256xf32>
    tpu.vector_store %arg10[%c24_80, %c0_81], %282 {strides = array<i32>} : memref<512x256xf32, #tpu.memory_space<vmem>>, vector<8x256xf32>,
    %284 = vector.extract_strided_slice %261 {offsets = [0, 81], sizes = [8, 256], strides = [1, 1]} : vector<8x512xf32> to vector<8x256xf32>
    %285 = vector.extract_strided_slice %0 {offsets = [4, 0], sizes = [1, 256], strides = [1, 1]} : vector<8x256xf32> to vector<1x256xf32>
    %286 = vector.broadcast %285 : vector<1x256xf32> to vector<8x256xf32>
    %287 = arith.mulf %284, %286 : vector<8x256xf32>
    %c32_82 = arith.constant 32 : index
    %c0_83 = arith.constant 0 : index
    %288 = vector.load %arg10[%c32_82, %c0_83] : memref<512x256xf32, #tpu.memory_space<vmem>>, vector<8x256xf32>
    tpu.vector_store %arg10[%c32_82, %c0_83], %287 {strides = array<i32>} : memref<512x256xf32, #tpu.memory_space<vmem>>, vector<8x256xf32>,
    %289 = vector.extract_strided_slice %261 {offsets = [0, 82], sizes = [8, 256], strides = [1, 1]} : vector<8x512xf32> to vector<8x256xf32>
    %290 = vector.extract_strided_slice %0 {offsets = [5, 0], sizes = [1, 256], strides = [1, 1]} : vector<8x256xf32> to vector<1x256xf32>
    %291 = vector.broadcast %290 : vector<1x256xf32> to vector<8x256xf32>
    %292 = arith.mulf %289, %291 : vector<8x256xf32>
    %c40_84 = arith.constant 40 : index
    %c0_85 = arith.constant 0 : index
    %293 = vector.load %arg10[%c40_84, %c0_85] : memref<512x256xf32, #tpu.memory_space<vmem>>, vector<8x256xf32>
    tpu.vector_store %arg10[%c40_84, %c0_85], %292 {strides = array<i32>} : memref<512x256xf32, #tpu.memory_space<vmem>>, vector<8x256xf32>,
    %294 = vector.extract_strided_slice %261 {offsets = [0, 83], sizes = [8, 256], strides = [1, 1]} : vector<8x512xf32> to vector<8x256xf32>
    %295 = vector.extract_strided_slice %0 {offsets = [6, 0], sizes = [1, 256], strides = [1, 1]} : vector<8x256xf32> to vector<1x256xf32>
    %296 = vector.broadcast %295 : vector<1x256xf32> to vector<8x256xf32>
    %297 = arith.mulf %294, %296 : vector<8x256xf32>
    %c48_86 = arith.constant 48 : index
    %c0_87 = arith.constant 0 : index
    %298 = vector.load %arg10[%c48_86, %c0_87] : memref<512x256xf32, #tpu.memory_space<vmem>>, vector<8x256xf32>
    tpu.vector_store %arg10[%c48_86, %c0_87], %297 {strides = array<i32>} : memref<512x256xf32, #tpu.memory_space<vmem>>, vector<8x256xf32>,
    %299 = vector.extract_strided_slice %261 {offsets = [0, 93], sizes = [8, 256], strides = [1, 1]} : vector<8x512xf32> to vector<8x256xf32>
    %300 = vector.extract_strided_slice %0 {offsets = [0, 0], sizes = [1, 256], strides = [1, 1]} : vector<8x256xf32> to vector<1x256xf32>
    %301 = vector.broadcast %300 : vector<1x256xf32> to vector<8x256xf32>
    %302 = arith.mulf %299, %301 : vector<8x256xf32>
    %c56_88 = arith.constant 56 : index
    %c0_89 = arith.constant 0 : index
    %303 = vector.load %arg10[%c56_88, %c0_89] : memref<512x256xf32, #tpu.memory_space<vmem>>, vector<8x256xf32>
    tpu.vector_store %arg10[%c56_88, %c0_89], %302 {strides = array<i32>} : memref<512x256xf32, #tpu.memory_space<vmem>>, vector<8x256xf32>,
    %304 = vector.extract_strided_slice %261 {offsets = [0, 94], sizes = [8, 256], strides = [1, 1]} : vector<8x512xf32> to vector<8x256xf32>
    %305 = vector.extract_strided_slice %0 {offsets = [1, 0], sizes = [1, 256], strides = [1, 1]} : vector<8x256xf32> to vector<1x256xf32>
    %306 = vector.broadcast %305 : vector<1x256xf32> to vector<8x256xf32>
    %307 = arith.mulf %304, %306 : vector<8x256xf32>
    %c64_90 = arith.constant 64 : index
    %c0_91 = arith.constant 0 : index
    %308 = vector.load %arg10[%c64_90, %c0_91] : memref<512x256xf32, #tpu.memory_space<vmem>>, vector<8x256xf32>
    tpu.vector_store %arg10[%c64_90, %c0_91], %307 {strides = array<i32>} : memref<512x256xf32, #tpu.memory_space<vmem>>, vector<8x256xf32>,
    %309 = vector.extract_strided_slice %261 {offsets = [0, 95], sizes = [8, 256], strides = [1, 1]} : vector<8x512xf32> to vector<8x256xf32>
    %310 = vector.extract_strided_slice %0 {offsets = [2, 0], sizes = [1, 256], strides = [1, 1]} : vector<8x256xf32> to vector<1x256xf32>
    %311 = vector.broadcast %310 : vector<1x256xf32> to vector<8x256xf32>
    %312 = arith.mulf %309, %311 : vector<8x256xf32>
    %c72_92 = arith.constant 72 : index
    %c0_93 = arith.constant 0 : index
    %313 = vector.load %arg10[%c72_92, %c0_93] : memref<512x256xf32, #tpu.memory_space<vmem>>, vector<8x256xf32>
    tpu.vector_store %arg10[%c72_92, %c0_93], %312 {strides = array<i32>} : memref<512x256xf32, #tpu.memory_space<vmem>>, vector<8x256xf32>,
    %314 = vector.extract_strided_slice %261 {offsets = [0, 96], sizes = [8, 256], strides = [1, 1]} : vector<8x512xf32> to vector<8x256xf32>
    %315 = vector.extract_strided_slice %0 {offsets = [3, 0], sizes = [1, 256], strides = [1, 1]} : vector<8x256xf32> to vector<1x256xf32>
    %316 = vector.broadcast %315 : vector<1x256xf32> to vector<8x256xf32>
    %317 = arith.mulf %314, %316 : vector<8x256xf32>
    %c80_94 = arith.constant 80 : index
    %c0_95 = arith.constant 0 : index
    %318 = vector.load %arg10[%c80_94, %c0_95] : memref<512x256xf32, #tpu.memory_space<vmem>>, vector<8x256xf32>
    tpu.vector_store %arg10[%c80_94, %c0_95], %317 {strides = array<i32>} : memref<512x256xf32, #tpu.memory_space<vmem>>, vector<8x256xf32>,
    %319 = vector.extract_strided_slice %261 {offsets = [0, 97], sizes = [8, 256], strides = [1, 1]} : vector<8x512xf32> to vector<8x256xf32>
    %320 = vector.extract_strided_slice %0 {offsets = [4, 0], sizes = [1, 256], strides = [1, 1]} : vector<8x256xf32> to vector<1x256xf32>
    %321 = vector.broadcast %320 : vector<1x256xf32> to vector<8x256xf32>
    %322 = arith.mulf %319, %321 : vector<8x256xf32>
    %c88_96 = arith.constant 88 : index
    %c0_97 = arith.constant 0 : index
    %323 = vector.load %arg10[%c88_96, %c0_97] : memref<512x256xf32, #tpu.memory_space<vmem>>, vector<8x256xf32>
    tpu.vector_store %arg10[%c88_96, %c0_97], %322 {strides = array<i32>} : memref<512x256xf32, #tpu.memory_space<vmem>>, vector<8x256xf32>,
    %324 = vector.extract_strided_slice %261 {offsets = [0, 98], sizes = [8, 256], strides = [1, 1]} : vector<8x512xf32> to vector<8x256xf32>
    %325 = vector.extract_strided_slice %0 {offsets = [5, 0], sizes = [1, 256], strides = [1, 1]} : vector<8x256xf32> to vector<1x256xf32>
    %326 = vector.broadcast %325 : vector<1x256xf32> to vector<8x256xf32>
    %327 = arith.mulf %324, %326 : vector<8x256xf32>
    %c96_98 = arith.constant 96 : index
    %c0_99 = arith.constant 0 : index
    %328 = vector.load %arg10[%c96_98, %c0_99] : memref<512x256xf32, #tpu.memory_space<vmem>>, vector<8x256xf32>
    tpu.vector_store %arg10[%c96_98, %c0_99], %327 {strides = array<i32>} : memref<512x256xf32, #tpu.memory_space<vmem>>, vector<8x256xf32>,
    %329 = vector.extract_strided_slice %261 {offsets = [0, 99], sizes = [8, 256], strides = [1, 1]} : vector<8x512xf32> to vector<8x256xf32>
    %330 = vector.extract_strided_slice %0 {offsets = [6, 0], sizes = [1, 256], strides = [1, 1]} : vector<8x256xf32> to vector<1x256xf32>
    %331 = vector.broadcast %330 : vector<1x256xf32> to vector<8x256xf32>
    %332 = arith.mulf %329, %331 : vector<8x256xf32>
    %c104_100 = arith.constant 104 : index
    %c0_101 = arith.constant 0 : index
    %333 = vector.load %arg10[%c104_100, %c0_101] : memref<512x256xf32, #tpu.memory_space<vmem>>, vector<8x256xf32>
    tpu.vector_store %arg10[%c104_100, %c0_101], %332 {strides = array<i32>} : memref<512x256xf32, #tpu.memory_space<vmem>>, vector<8x256xf32>,
    %334 = vector.extract_strided_slice %261 {offsets = [0, 109], sizes = [8, 256], strides = [1, 1]} : vector<8x512xf32> to vector<8x256xf32>
    %335 = vector.extract_strided_slice %0 {offsets = [0, 0], sizes = [1, 256], strides = [1, 1]} : vector<8x256xf32> to vector<1x256xf32>
    %336 = vector.broadcast %335 : vector<1x256xf32> to vector<8x256xf32>
    %337 = arith.mulf %334, %336 : vector<8x256xf32>
    %c112_102 = arith.constant 112 : index
    %c0_103 = arith.constant 0 : index
    %338 = vector.load %arg10[%c112_102, %c0_103] : memref<512x256xf32, #tpu.memory_space<vmem>>, vector<8x256xf32>
    tpu.vector_store %arg10[%c112_102, %c0_103], %337 {strides = array<i32>} : memref<512x256xf32, #tpu.memory_space<vmem>>, vector<8x256xf32>,
    %339 = vector.extract_strided_slice %261 {offsets = [0, 110], sizes = [8, 256], strides = [1, 1]} : vector<8x512xf32> to vector<8x256xf32>
    %340 = vector.extract_strided_slice %0 {offsets = [1, 0], sizes = [1, 256], strides = [1, 1]} : vector<8x256xf32> to vector<1x256xf32>
    %341 = vector.broadcast %340 : vector<1x256xf32> to vector<8x256xf32>
    %342 = arith.mulf %339, %341 : vector<8x256xf32>
    %c120_104 = arith.constant 120 : index
    %c0_105 = arith.constant 0 : index
    %343 = vector.load %arg10[%c120_104, %c0_105] : memref<512x256xf32, #tpu.memory_space<vmem>>, vector<8x256xf32>
    tpu.vector_store %arg10[%c120_104, %c0_105], %342 {strides = array<i32>} : memref<512x256xf32, #tpu.memory_space<vmem>>, vector<8x256xf32>,
    %344 = vector.extract_strided_slice %261 {offsets = [0, 111], sizes = [8, 256], strides = [1, 1]} : vector<8x512xf32> to vector<8x256xf32>
    %345 = vector.extract_strided_slice %0 {offsets = [2, 0], sizes = [1, 256], strides = [1, 1]} : vector<8x256xf32> to vector<1x256xf32>
    %346 = vector.broadcast %345 : vector<1x256xf32> to vector<8x256xf32>
    %347 = arith.mulf %344, %346 : vector<8x256xf32>
    %c128_106 = arith.constant 128 : index
    %c0_107 = arith.constant 0 : index
    %348 = vector.load %arg10[%c128_106, %c0_107] : memref<512x256xf32, #tpu.memory_space<vmem>>, vector<8x256xf32>
    tpu.vector_store %arg10[%c128_106, %c0_107], %347 {strides = array<i32>} : memref<512x256xf32, #tpu.memory_space<vmem>>, vector<8x256xf32>,
    %349 = vector.extract_strided_slice %261 {offsets = [0, 112], sizes = [8, 256], strides = [1, 1]} : vector<8x512xf32> to vector<8x256xf32>
    %350 = vector.extract_strided_slice %0 {offsets = [3, 0], sizes = [1, 256], strides = [1, 1]} : vector<8x256xf32> to vector<1x256xf32>
    %351 = vector.broadcast %350 : vector<1x256xf32> to vector<8x256xf32>
    %352 = arith.mulf %349, %351 : vector<8x256xf32>
    %c136_108 = arith.constant 136 : index
    %c0_109 = arith.constant 0 : index
    %353 = vector.load %arg10[%c136_108, %c0_109] : memref<512x256xf32, #tpu.memory_space<vmem>>, vector<8x256xf32>
    tpu.vector_store %arg10[%c136_108, %c0_109], %352 {strides = array<i32>} : memref<512x256xf32, #tpu.memory_space<vmem>>, vector<8x256xf32>,
    %354 = vector.extract_strided_slice %261 {offsets = [0, 113], sizes = [8, 256], strides = [1, 1]} : vector<8x512xf32> to vector<8x256xf32>
    %355 = vector.extract_strided_slice %0 {offsets = [4, 0], sizes = [1, 256], strides = [1, 1]} : vector<8x256xf32> to vector<1x256xf32>
    %356 = vector.broadcast %355 : vector<1x256xf32> to vector<8x256xf32>
    %357 = arith.mulf %354, %356 : vector<8x256xf32>
    %c144_110 = arith.constant 144 : index
    %c0_111 = arith.constant 0 : index
    %358 = vector.load %arg10[%c144_110, %c0_111] : memref<512x256xf32, #tpu.memory_space<vmem>>, vector<8x256xf32>
    tpu.vector_store %arg10[%c144_110, %c0_111], %357 {strides = array<i32>} : memref<512x256xf32, #tpu.memory_space<vmem>>, vector<8x256xf32>,
    %359 = vector.extract_strided_slice %261 {offsets = [0, 114], sizes = [8, 256], strides = [1, 1]} : vector<8x512xf32> to vector<8x256xf32>
    %360 = vector.extract_strided_slice %0 {offsets = [5, 0], sizes = [1, 256], strides = [1, 1]} : vector<8x256xf32> to vector<1x256xf32>
    %361 = vector.broadcast %360 : vector<1x256xf32> to vector<8x256xf32>
    %362 = arith.mulf %359, %361 : vector<8x256xf32>
    %c152_112 = arith.constant 152 : index
    %c0_113 = arith.constant 0 : index
    %363 = vector.load %arg10[%c152_112, %c0_113] : memref<512x256xf32, #tpu.memory_space<vmem>>, vector<8x256xf32>
    tpu.vector_store %arg10[%c152_112, %c0_113], %362 {strides = array<i32>} : memref<512x256xf32, #tpu.memory_space<vmem>>, vector<8x256xf32>,
    %364 = vector.extract_strided_slice %261 {offsets = [0, 115], sizes = [8, 256], strides = [1, 1]} : vector<8x512xf32> to vector<8x256xf32>
    %365 = vector.extract_strided_slice %0 {offsets = [6, 0], sizes = [1, 256], strides = [1, 1]} : vector<8x256xf32> to vector<1x256xf32>
    %366 = vector.broadcast %365 : vector<1x256xf32> to vector<8x256xf32>
    %367 = arith.mulf %364, %366 : vector<8x256xf32>
    %c160_114 = arith.constant 160 : index
    %c0_115 = arith.constant 0 : index
    %368 = vector.load %arg10[%c160_114, %c0_115] : memref<512x256xf32, #tpu.memory_space<vmem>>, vector<8x256xf32>
    tpu.vector_store %arg10[%c160_114, %c0_115], %367 {strides = array<i32>} : memref<512x256xf32, #tpu.memory_space<vmem>>, vector<8x256xf32>,
    %369 = vector.extract_strided_slice %261 {offsets = [0, 125], sizes = [8, 256], strides = [1, 1]} : vector<8x512xf32> to vector<8x256xf32>
    %370 = vector.extract_strided_slice %0 {offsets = [0, 0], sizes = [1, 256], strides = [1, 1]} : vector<8x256xf32> to vector<1x256xf32>
    %371 = vector.broadcast %370 : vector<1x256xf32> to vector<8x256xf32>
    %372 = arith.mulf %369, %371 : vector<8x256xf32>
    %c168_116 = arith.constant 168 : index
    %c0_117 = arith.constant 0 : index
    %373 = vector.load %arg10[%c168_116, %c0_117] : memref<512x256xf32, #tpu.memory_space<vmem>>, vector<8x256xf32>
    tpu.vector_store %arg10[%c168_116, %c0_117], %372 {strides = array<i32>} : memref<512x256xf32, #tpu.memory_space<vmem>>, vector<8x256xf32>,
    %374 = vector.extract_strided_slice %261 {offsets = [0, 126], sizes = [8, 256], strides = [1, 1]} : vector<8x512xf32> to vector<8x256xf32>
    %375 = vector.extract_strided_slice %0 {offsets = [1, 0], sizes = [1, 256], strides = [1, 1]} : vector<8x256xf32> to vector<1x256xf32>
    %376 = vector.broadcast %375 : vector<1x256xf32> to vector<8x256xf32>
    %377 = arith.mulf %374, %376 : vector<8x256xf32>
    %c176_118 = arith.constant 176 : index
    %c0_119 = arith.constant 0 : index
    %378 = vector.load %arg10[%c176_118, %c0_119] : memref<512x256xf32, #tpu.memory_space<vmem>>, vector<8x256xf32>
    tpu.vector_store %arg10[%c176_118, %c0_119], %377 {strides = array<i32>} : memref<512x256xf32, #tpu.memory_space<vmem>>, vector<8x256xf32>,
    %379 = vector.extract_strided_slice %261 {offsets = [0, 127], sizes = [8, 256], strides = [1, 1]} : vector<8x512xf32> to vector<8x256xf32>
    %380 = vector.extract_strided_slice %0 {offsets = [2, 0], sizes = [1, 256], strides = [1, 1]} : vector<8x256xf32> to vector<1x256xf32>
    %381 = vector.broadcast %380 : vector<1x256xf32> to vector<8x256xf32>
    %382 = arith.mulf %379, %381 : vector<8x256xf32>
    %c184_120 = arith.constant 184 : index
    %c0_121 = arith.constant 0 : index
    %383 = vector.load %arg10[%c184_120, %c0_121] : memref<512x256xf32, #tpu.memory_space<vmem>>, vector<8x256xf32>
    tpu.vector_store %arg10[%c184_120, %c0_121], %382 {strides = array<i32>} : memref<512x256xf32, #tpu.memory_space<vmem>>, vector<8x256xf32>,
    %384 = vector.extract_strided_slice %261 {offsets = [0, 128], sizes = [8, 256], strides = [1, 1]} : vector<8x512xf32> to vector<8x256xf32>
    %385 = vector.extract_strided_slice %0 {offsets = [3, 0], sizes = [1, 256], strides = [1, 1]} : vector<8x256xf32> to vector<1x256xf32>
    %386 = vector.broadcast %385 : vector<1x256xf32> to vector<8x256xf32>
    %387 = arith.mulf %384, %386 : vector<8x256xf32>
    %c192_122 = arith.constant 192 : index
    %c0_123 = arith.constant 0 : index
    %388 = vector.load %arg10[%c192_122, %c0_123] : memref<512x256xf32, #tpu.memory_space<vmem>>, vector<8x256xf32>
    tpu.vector_store %arg10[%c192_122, %c0_123], %387 {strides = array<i32>} : memref<512x256xf32, #tpu.memory_space<vmem>>, vector<8x256xf32>,
    %389 = vector.extract_strided_slice %261 {offsets = [0, 129], sizes = [8, 256], strides = [1, 1]} : vector<8x512xf32> to vector<8x256xf32>
    %390 = vector.extract_strided_slice %0 {offsets = [4, 0], sizes = [1, 256], strides = [1, 1]} : vector<8x256xf32> to vector<1x256xf32>
    %391 = vector.broadcast %390 : vector<1x256xf32> to vector<8x256xf32>
    %392 = arith.mulf %389, %391 : vector<8x256xf32>
    %c200 = arith.constant 200 : index
    %c0_124 = arith.constant 0 : index
    %393 = vector.load %arg10[%c200, %c0_124] : memref<512x256xf32, #tpu.memory_space<vmem>>, vector<8x256xf32>
    tpu.vector_store %arg10[%c200, %c0_124], %392 {strides = array<i32>} : memref<512x256xf32, #tpu.memory_space<vmem>>, vector<8x256xf32>,
    %394 = vector.extract_strided_slice %261 {offsets = [0, 130], sizes = [8, 256], strides = [1, 1]} : vector<8x512xf32> to vector<8x256xf32>
    %395 = vector.extract_strided_slice %0 {offsets = [5, 0], sizes = [1, 256], strides = [1, 1]} : vector<8x256xf32> to vector<1x256xf32>
    %396 = vector.broadcast %395 : vector<1x256xf32> to vector<8x256xf32>
    %397 = arith.mulf %394, %396 : vector<8x256xf32>
    %c208 = arith.constant 208 : index
    %c0_125 = arith.constant 0 : index
    %398 = vector.load %arg10[%c208, %c0_125] : memref<512x256xf32, #tpu.memory_space<vmem>>, vector<8x256xf32>
    tpu.vector_store %arg10[%c208, %c0_125], %397 {strides = array<i32>} : memref<512x256xf32, #tpu.memory_space<vmem>>, vector<8x256xf32>,
    %399 = vector.extract_strided_slice %261 {offsets = [0, 131], sizes = [8, 256], strides = [1, 1]} : vector<8x512xf32> to vector<8x256xf32>
    %400 = vector.extract_strided_slice %0 {offsets = [6, 0], sizes = [1, 256], strides = [1, 1]} : vector<8x256xf32> to vector<1x256xf32>
    %401 = vector.broadcast %400 : vector<1x256xf32> to vector<8x256xf32>
    %402 = arith.mulf %399, %401 : vector<8x256xf32>
    %c216 = arith.constant 216 : index
    %c0_126 = arith.constant 0 : index
    %403 = vector.load %arg10[%c216, %c0_126] : memref<512x256xf32, #tpu.memory_space<vmem>>, vector<8x256xf32>
    tpu.vector_store %arg10[%c216, %c0_126], %402 {strides = array<i32>} : memref<512x256xf32, #tpu.memory_space<vmem>>, vector<8x256xf32>,
    %404 = vector.extract_strided_slice %261 {offsets = [0, 141], sizes = [8, 256], strides = [1, 1]} : vector<8x512xf32> to vector<8x256xf32>
    %405 = vector.extract_strided_slice %0 {offsets = [0, 0], sizes = [1, 256], strides = [1, 1]} : vector<8x256xf32> to vector<1x256xf32>
    %406 = vector.broadcast %405 : vector<1x256xf32> to vector<8x256xf32>
    %407 = arith.mulf %404, %406 : vector<8x256xf32>
    %c224 = arith.constant 224 : index
    %c0_127 = arith.constant 0 : index
    %408 = vector.load %arg10[%c224, %c0_127] : memref<512x256xf32, #tpu.memory_space<vmem>>, vector<8x256xf32>
    tpu.vector_store %arg10[%c224, %c0_127], %407 {strides = array<i32>} : memref<512x256xf32, #tpu.memory_space<vmem>>, vector<8x256xf32>,
    %409 = vector.extract_strided_slice %261 {offsets = [0, 142], sizes = [8, 256], strides = [1, 1]} : vector<8x512xf32> to vector<8x256xf32>
    %410 = vector.extract_strided_slice %0 {offsets = [1, 0], sizes = [1, 256], strides = [1, 1]} : vector<8x256xf32> to vector<1x256xf32>
    %411 = vector.broadcast %410 : vector<1x256xf32> to vector<8x256xf32>
    %412 = arith.mulf %409, %411 : vector<8x256xf32>
    %c232 = arith.constant 232 : index
    %c0_128 = arith.constant 0 : index
    %413 = vector.load %arg10[%c232, %c0_128] : memref<512x256xf32, #tpu.memory_space<vmem>>, vector<8x256xf32>
    tpu.vector_store %arg10[%c232, %c0_128], %412 {strides = array<i32>} : memref<512x256xf32, #tpu.memory_space<vmem>>, vector<8x256xf32>,
    %414 = vector.extract_strided_slice %261 {offsets = [0, 143], sizes = [8, 256], strides = [1, 1]} : vector<8x512xf32> to vector<8x256xf32>
    %415 = vector.extract_strided_slice %0 {offsets = [2, 0], sizes = [1, 256], strides = [1, 1]} : vector<8x256xf32> to vector<1x256xf32>
    %416 = vector.broadcast %415 : vector<1x256xf32> to vector<8x256xf32>
    %417 = arith.mulf %414, %416 : vector<8x256xf32>
    %c240 = arith.constant 240 : index
    %c0_129 = arith.constant 0 : index
    %418 = vector.load %arg10[%c240, %c0_129] : memref<512x256xf32, #tpu.memory_space<vmem>>, vector<8x256xf32>
    tpu.vector_store %arg10[%c240, %c0_129], %417 {strides = array<i32>} : memref<512x256xf32, #tpu.memory_space<vmem>>, vector<8x256xf32>,
    %419 = vector.extract_strided_slice %261 {offsets = [0, 144], sizes = [8, 256], strides = [1, 1]} : vector<8x512xf32> to vector<8x256xf32>
    %420 = vector.extract_strided_slice %0 {offsets = [3, 0], sizes = [1, 256], strides = [1, 1]} : vector<8x256xf32> to vector<1x256xf32>
    %421 = vector.broadcast %420 : vector<1x256xf32> to vector<8x256xf32>
    %422 = arith.mulf %419, %421 : vector<8x256xf32>
    %c248 = arith.constant 248 : index
    %c0_130 = arith.constant 0 : index
    %423 = vector.load %arg10[%c248, %c0_130] : memref<512x256xf32, #tpu.memory_space<vmem>>, vector<8x256xf32>
    tpu.vector_store %arg10[%c248, %c0_130], %422 {strides = array<i32>} : memref<512x256xf32, #tpu.memory_space<vmem>>, vector<8x256xf32>,
    %424 = vector.extract_strided_slice %261 {offsets = [0, 145], sizes = [8, 256], strides = [1, 1]} : vector<8x512xf32> to vector<8x256xf32>
    %425 = vector.extract_strided_slice %0 {offsets = [4, 0], sizes = [1, 256], strides = [1, 1]} : vector<8x256xf32> to vector<1x256xf32>
    %426 = vector.broadcast %425 : vector<1x256xf32> to vector<8x256xf32>
    %427 = arith.mulf %424, %426 : vector<8x256xf32>
    %c256 = arith.constant 256 : index
    %c0_131 = arith.constant 0 : index
    %428 = vector.load %arg10[%c256, %c0_131] : memref<512x256xf32, #tpu.memory_space<vmem>>, vector<8x256xf32>
    tpu.vector_store %arg10[%c256, %c0_131], %427 {strides = array<i32>} : memref<512x256xf32, #tpu.memory_space<vmem>>, vector<8x256xf32>,
    %429 = vector.extract_strided_slice %261 {offsets = [0, 146], sizes = [8, 256], strides = [1, 1]} : vector<8x512xf32> to vector<8x256xf32>
    %430 = vector.extract_strided_slice %0 {offsets = [5, 0], sizes = [1, 256], strides = [1, 1]} : vector<8x256xf32> to vector<1x256xf32>
    %431 = vector.broadcast %430 : vector<1x256xf32> to vector<8x256xf32>
    %432 = arith.mulf %429, %431 : vector<8x256xf32>
    %c264 = arith.constant 264 : index
    %c0_132 = arith.constant 0 : index
    %433 = vector.load %arg10[%c264, %c0_132] : memref<512x256xf32, #tpu.memory_space<vmem>>, vector<8x256xf32>
    tpu.vector_store %arg10[%c264, %c0_132], %432 {strides = array<i32>} : memref<512x256xf32, #tpu.memory_space<vmem>>, vector<8x256xf32>,
    %434 = vector.extract_strided_slice %261 {offsets = [0, 147], sizes = [8, 256], strides = [1, 1]} : vector<8x512xf32> to vector<8x256xf32>
    %435 = vector.extract_strided_slice %0 {offsets = [6, 0], sizes = [1, 256], strides = [1, 1]} : vector<8x256xf32> to vector<1x256xf32>
    %436 = vector.broadcast %435 : vector<1x256xf32> to vector<8x256xf32>
    %437 = arith.mulf %434, %436 : vector<8x256xf32>
    %c272 = arith.constant 272 : index
    %c0_133 = arith.constant 0 : index
    %438 = vector.load %arg10[%c272, %c0_133] : memref<512x256xf32, #tpu.memory_space<vmem>>, vector<8x256xf32>
    tpu.vector_store %arg10[%c272, %c0_133], %437 {strides = array<i32>} : memref<512x256xf32, #tpu.memory_space<vmem>>, vector<8x256xf32>,
    %439 = vector.extract_strided_slice %261 {offsets = [0, 157], sizes = [8, 256], strides = [1, 1]} : vector<8x512xf32> to vector<8x256xf32>
    %440 = vector.extract_strided_slice %0 {offsets = [0, 0], sizes = [1, 256], strides = [1, 1]} : vector<8x256xf32> to vector<1x256xf32>
    %441 = vector.broadcast %440 : vector<1x256xf32> to vector<8x256xf32>
    %442 = arith.mulf %439, %441 : vector<8x256xf32>
    %c280 = arith.constant 280 : index
    %c0_134 = arith.constant 0 : index
    %443 = vector.load %arg10[%c280, %c0_134] : memref<512x256xf32, #tpu.memory_space<vmem>>, vector<8x256xf32>
    tpu.vector_store %arg10[%c280, %c0_134], %442 {strides = array<i32>} : memref<512x256xf32, #tpu.memory_space<vmem>>, vector<8x256xf32>,
    %444 = vector.extract_strided_slice %261 {offsets = [0, 158], sizes = [8, 256], strides = [1, 1]} : vector<8x512xf32> to vector<8x256xf32>
    %445 = vector.extract_strided_slice %0 {offsets = [1, 0], sizes = [1, 256], strides = [1, 1]} : vector<8x256xf32> to vector<1x256xf32>
    %446 = vector.broadcast %445 : vector<1x256xf32> to vector<8x256xf32>
    %447 = arith.mulf %444, %446 : vector<8x256xf32>
    %c288 = arith.constant 288 : index
    %c0_135 = arith.constant 0 : index
    %448 = vector.load %arg10[%c288, %c0_135] : memref<512x256xf32, #tpu.memory_space<vmem>>, vector<8x256xf32>
    tpu.vector_store %arg10[%c288, %c0_135], %447 {strides = array<i32>} : memref<512x256xf32, #tpu.memory_space<vmem>>, vector<8x256xf32>,
    %449 = vector.extract_strided_slice %261 {offsets = [0, 159], sizes = [8, 256], strides = [1, 1]} : vector<8x512xf32> to vector<8x256xf32>
    %450 = vector.extract_strided_slice %0 {offsets = [2, 0], sizes = [1, 256], strides = [1, 1]} : vector<8x256xf32> to vector<1x256xf32>
    %451 = vector.broadcast %450 : vector<1x256xf32> to vector<8x256xf32>
    %452 = arith.mulf %449, %451 : vector<8x256xf32>
    %c296 = arith.constant 296 : index
    %c0_136 = arith.constant 0 : index
    %453 = vector.load %arg10[%c296, %c0_136] : memref<512x256xf32, #tpu.memory_space<vmem>>, vector<8x256xf32>
    tpu.vector_store %arg10[%c296, %c0_136], %452 {strides = array<i32>} : memref<512x256xf32, #tpu.memory_space<vmem>>, vector<8x256xf32>,
    %454 = vector.extract_strided_slice %261 {offsets = [0, 160], sizes = [8, 256], strides = [1, 1]} : vector<8x512xf32> to vector<8x256xf32>
    %455 = vector.extract_strided_slice %0 {offsets = [3, 0], sizes = [1, 256], strides = [1, 1]} : vector<8x256xf32> to vector<1x256xf32>
    %456 = vector.broadcast %455 : vector<1x256xf32> to vector<8x256xf32>
    %457 = arith.mulf %454, %456 : vector<8x256xf32>
    %c304 = arith.constant 304 : index
    %c0_137 = arith.constant 0 : index
    %458 = vector.load %arg10[%c304, %c0_137] : memref<512x256xf32, #tpu.memory_space<vmem>>, vector<8x256xf32>
    tpu.vector_store %arg10[%c304, %c0_137], %457 {strides = array<i32>} : memref<512x256xf32, #tpu.memory_space<vmem>>, vector<8x256xf32>,
    %459 = vector.extract_strided_slice %261 {offsets = [0, 161], sizes = [8, 256], strides = [1, 1]} : vector<8x512xf32> to vector<8x256xf32>
    %460 = vector.extract_strided_slice %0 {offsets = [4, 0], sizes = [1, 256], strides = [1, 1]} : vector<8x256xf32> to vector<1x256xf32>
    %461 = vector.broadcast %460 : vector<1x256xf32> to vector<8x256xf32>
    %462 = arith.mulf %459, %461 : vector<8x256xf32>
    %c312 = arith.constant 312 : index
    %c0_138 = arith.constant 0 : index
    %463 = vector.load %arg10[%c312, %c0_138] : memref<512x256xf32, #tpu.memory_space<vmem>>, vector<8x256xf32>
    tpu.vector_store %arg10[%c312, %c0_138], %462 {strides = array<i32>} : memref<512x256xf32, #tpu.memory_space<vmem>>, vector<8x256xf32>,
    %464 = vector.extract_strided_slice %261 {offsets = [0, 162], sizes = [8, 256], strides = [1, 1]} : vector<8x512xf32> to vector<8x256xf32>
    %465 = vector.extract_strided_slice %0 {offsets = [5, 0], sizes = [1, 256], strides = [1, 1]} : vector<8x256xf32> to vector<1x256xf32>
    %466 = vector.broadcast %465 : vector<1x256xf32> to vector<8x256xf32>
    %467 = arith.mulf %464, %466 : vector<8x256xf32>
    %c320 = arith.constant 320 : index
    %c0_139 = arith.constant 0 : index
    %468 = vector.load %arg10[%c320, %c0_139] : memref<512x256xf32, #tpu.memory_space<vmem>>, vector<8x256xf32>
    tpu.vector_store %arg10[%c320, %c0_139], %467 {strides = array<i32>} : memref<512x256xf32, #tpu.memory_space<vmem>>, vector<8x256xf32>,
    %469 = vector.extract_strided_slice %261 {offsets = [0, 163], sizes = [8, 256], strides = [1, 1]} : vector<8x512xf32> to vector<8x256xf32>
    %470 = vector.extract_strided_slice %0 {offsets = [6, 0], sizes = [1, 256], strides = [1, 1]} : vector<8x256xf32> to vector<1x256xf32>
    %471 = vector.broadcast %470 : vector<1x256xf32> to vector<8x256xf32>
    %472 = arith.mulf %469, %471 : vector<8x256xf32>
    %c328 = arith.constant 328 : index
    %c0_140 = arith.constant 0 : index
    %473 = vector.load %arg10[%c328, %c0_140] : memref<512x256xf32, #tpu.memory_space<vmem>>, vector<8x256xf32>
    tpu.vector_store %arg10[%c328, %c0_140], %472 {strides = array<i32>} : memref<512x256xf32, #tpu.memory_space<vmem>>, vector<8x256xf32>,
    %474 = vector.extract_strided_slice %261 {offsets = [0, 173], sizes = [8, 256], strides = [1, 1]} : vector<8x512xf32> to vector<8x256xf32>
    %475 = vector.extract_strided_slice %0 {offsets = [0, 0], sizes = [1, 256], strides = [1, 1]} : vector<8x256xf32> to vector<1x256xf32>
    %476 = vector.broadcast %475 : vector<1x256xf32> to vector<8x256xf32>
    %477 = arith.mulf %474, %476 : vector<8x256xf32>
    %c336 = arith.constant 336 : index
    %c0_141 = arith.constant 0 : index
    %478 = vector.load %arg10[%c336, %c0_141] : memref<512x256xf32, #tpu.memory_space<vmem>>, vector<8x256xf32>
    tpu.vector_store %arg10[%c336, %c0_141], %477 {strides = array<i32>} : memref<512x256xf32, #tpu.memory_space<vmem>>, vector<8x256xf32>,
    %479 = vector.extract_strided_slice %261 {offsets = [0, 174], sizes = [8, 256], strides = [1, 1]} : vector<8x512xf32> to vector<8x256xf32>
    %480 = vector.extract_strided_slice %0 {offsets = [1, 0], sizes = [1, 256], strides = [1, 1]} : vector<8x256xf32> to vector<1x256xf32>
    %481 = vector.broadcast %480 : vector<1x256xf32> to vector<8x256xf32>
    %482 = arith.mulf %479, %481 : vector<8x256xf32>
    %c344 = arith.constant 344 : index
    %c0_142 = arith.constant 0 : index
    %483 = vector.load %arg10[%c344, %c0_142] : memref<512x256xf32, #tpu.memory_space<vmem>>, vector<8x256xf32>
    tpu.vector_store %arg10[%c344, %c0_142], %482 {strides = array<i32>} : memref<512x256xf32, #tpu.memory_space<vmem>>, vector<8x256xf32>,
    %484 = vector.extract_strided_slice %261 {offsets = [0, 175], sizes = [8, 256], strides = [1, 1]} : vector<8x512xf32> to vector<8x256xf32>
    %485 = vector.extract_strided_slice %0 {offsets = [2, 0], sizes = [1, 256], strides = [1, 1]} : vector<8x256xf32> to vector<1x256xf32>
    %486 = vector.broadcast %485 : vector<1x256xf32> to vector<8x256xf32>
    %487 = arith.mulf %484, %486 : vector<8x256xf32>
    %c352 = arith.constant 352 : index
    %c0_143 = arith.constant 0 : index
    %488 = vector.load %arg10[%c352, %c0_143] : memref<512x256xf32, #tpu.memory_space<vmem>>, vector<8x256xf32>
    tpu.vector_store %arg10[%c352, %c0_143], %487 {strides = array<i32>} : memref<512x256xf32, #tpu.memory_space<vmem>>, vector<8x256xf32>,
    %489 = vector.extract_strided_slice %261 {offsets = [0, 176], sizes = [8, 256], strides = [1, 1]} : vector<8x512xf32> to vector<8x256xf32>
    %490 = vector.extract_strided_slice %0 {offsets = [3, 0], sizes = [1, 256], strides = [1, 1]} : vector<8x256xf32> to vector<1x256xf32>
    %491 = vector.broadcast %490 : vector<1x256xf32> to vector<8x256xf32>
    %492 = arith.mulf %489, %491 : vector<8x256xf32>
    %c360 = arith.constant 360 : index
    %c0_144 = arith.constant 0 : index
    %493 = vector.load %arg10[%c360, %c0_144] : memref<512x256xf32, #tpu.memory_space<vmem>>, vector<8x256xf32>
    tpu.vector_store %arg10[%c360, %c0_144], %492 {strides = array<i32>} : memref<512x256xf32, #tpu.memory_space<vmem>>, vector<8x256xf32>,
    %494 = vector.extract_strided_slice %261 {offsets = [0, 177], sizes = [8, 256], strides = [1, 1]} : vector<8x512xf32> to vector<8x256xf32>
    %495 = vector.extract_strided_slice %0 {offsets = [4, 0], sizes = [1, 256], strides = [1, 1]} : vector<8x256xf32> to vector<1x256xf32>
    %496 = vector.broadcast %495 : vector<1x256xf32> to vector<8x256xf32>
    %497 = arith.mulf %494, %496 : vector<8x256xf32>
    %c368 = arith.constant 368 : index
    %c0_145 = arith.constant 0 : index
    %498 = vector.load %arg10[%c368, %c0_145] : memref<512x256xf32, #tpu.memory_space<vmem>>, vector<8x256xf32>
    tpu.vector_store %arg10[%c368, %c0_145], %497 {strides = array<i32>} : memref<512x256xf32, #tpu.memory_space<vmem>>, vector<8x256xf32>,
    %499 = vector.extract_strided_slice %261 {offsets = [0, 178], sizes = [8, 256], strides = [1, 1]} : vector<8x512xf32> to vector<8x256xf32>
    %500 = vector.extract_strided_slice %0 {offsets = [5, 0], sizes = [1, 256], strides = [1, 1]} : vector<8x256xf32> to vector<1x256xf32>
    %501 = vector.broadcast %500 : vector<1x256xf32> to vector<8x256xf32>
    %502 = arith.mulf %499, %501 : vector<8x256xf32>
    %c376 = arith.constant 376 : index
    %c0_146 = arith.constant 0 : index
    %503 = vector.load %arg10[%c376, %c0_146] : memref<512x256xf32, #tpu.memory_space<vmem>>, vector<8x256xf32>
    tpu.vector_store %arg10[%c376, %c0_146], %502 {strides = array<i32>} : memref<512x256xf32, #tpu.memory_space<vmem>>, vector<8x256xf32>,
    %504 = vector.extract_strided_slice %261 {offsets = [0, 179], sizes = [8, 256], strides = [1, 1]} : vector<8x512xf32> to vector<8x256xf32>
    %505 = vector.extract_strided_slice %0 {offsets = [6, 0], sizes = [1, 256], strides = [1, 1]} : vector<8x256xf32> to vector<1x256xf32>
    %506 = vector.broadcast %505 : vector<1x256xf32> to vector<8x256xf32>
    %507 = arith.mulf %504, %506 : vector<8x256xf32>
    %c384 = arith.constant 384 : index
    %c0_147 = arith.constant 0 : index
    %508 = vector.load %arg10[%c384, %c0_147] : memref<512x256xf32, #tpu.memory_space<vmem>>, vector<8x256xf32>
    tpu.vector_store %arg10[%c384, %c0_147], %507 {strides = array<i32>} : memref<512x256xf32, #tpu.memory_space<vmem>>, vector<8x256xf32>,
    %c0_148 = arith.constant 0 : index
    %c0_149 = arith.constant 0 : index
    %509 = vector.load %arg4[%c0_148, %c0_149] : memref<8x512xf32, #tpu.memory_space<vmem>>, vector<8x512xf32>
    %c0_150 = arith.constant 0 : index
    %c0_151 = arith.constant 0 : index
    %510 = vector.load %arg10[%c0_150, %c0_151] : memref<512x256xf32, #tpu.memory_space<vmem>>, vector<512x256xf32>
    %cst_152 = arith.constant dense<0.000000e+00> : vector<8x256xf32>
    %511 = tpu.matmul %509, %510, %cst_152 {dimension_numbers = #tpu.dot_dimension_numbers<[1], [0], [0], [1], [0, 0, 1, 1], [], []>} : vector<8x512xf32>, vector<512x256xf32>, vector<8x256xf32> -> vector<8x256xf32>
    %c0_153 = arith.constant 0 : index
    %c0_154 = arith.constant 0 : index
    %512 = vector.load %arg5[%c0_153, %c0_154] : memref<8x1xf32, #tpu.memory_space<vmem>>, vector<8x1xf32>
    %513 = vector.broadcast %512 : vector<8x1xf32> to vector<8x256xf32>
    %514 = arith.addf %511, %513 : vector<8x256xf32>
    %cst_155 = arith.constant 0.000000e+00 : f32
    %515 = vector.broadcast %cst_155 : f32 to vector<8x256xf32>
    %516 = arith.maximumf %514, %515 : vector<8x256xf32>
    %c0_156 = arith.constant 0 : index
    %c0_157 = arith.constant 0 : index
    %c0_158 = arith.constant 0 : index
    %517 = vector.load %arg7[%c0_156, %c0_157, %c0_158] : memref<1x8x256xf32, #tpu.memory_space<vmem>>, vector<1x8x256xf32>
    %518 = vector.shape_cast %517 : vector<1x8x256xf32> to vector<8x256xf32>
    %519 = vector.shape_cast %516 : vector<8x256xf32> to vector<1x8x256xf32>
    tpu.vector_store %arg7[%c0_156, %c0_157, %c0_158], %519 {strides = array<i32>} : memref<1x8x256xf32, #tpu.memory_space<vmem>>, vector<1x8x256xf32>,
    return
  }
  func.func @transform_0(%arg0: i32) -> (i32, i32, i32) {
    %c0_i32 = arith.constant 0 : i32
    %c0_i32_0 = arith.constant 0 : i32
    %c0_i32_1 = arith.constant 0 : i32
    return %arg0, %c0_i32, %c0_i32_0 : i32, i32, i32
  }
  func.func @transform_1(%arg0: i32) -> (i32, i32) {
    %c0_i32 = arith.constant 0 : i32
    %c0_i32_0 = arith.constant 0 : i32
    %c0_i32_1 = arith.constant 0 : i32
    return %c0_i32, %c0_i32_0 : i32, i32
  }
  func.func @transform_2(%arg0: i32) -> (i32, i32) {
    %c0_i32 = arith.constant 0 : i32
    %c0_i32_0 = arith.constant 0 : i32
    %c0_i32_1 = arith.constant 0 : i32
    return %c0_i32, %c0_i32_0 : i32, i32
  }
  func.func @transform_3(%arg0: i32) -> (i32, i32) {
    %c0_i32 = arith.constant 0 : i32
    %c0_i32_0 = arith.constant 0 : i32
    %c0_i32_1 = arith.constant 0 : i32
    return %c0_i32, %c0_i32_0 : i32, i32
  }
  func.func @transform_4(%arg0: i32) -> (i32, i32) {
    %c0_i32 = arith.constant 0 : i32
    %c0_i32_0 = arith.constant 0 : i32
    %c0_i32_1 = arith.constant 0 : i32
    return %c0_i32, %c0_i32_0 : i32, i32
  }
  func.func @transform_5(%arg0: i32) -> (i32, i32) {
    %c0_i32 = arith.constant 0 : i32
    %c0_i32_0 = arith.constant 0 : i32
    %c0_i32_1 = arith.constant 0 : i32
    return %c0_i32, %c0_i32_0 : i32, i32
  }
  func.func @transform_6(%arg0: i32) -> (i32, i32, i32) {
    %c0_i32 = arith.constant 0 : i32
    %c0_i32_0 = arith.constant 0 : i32
    %c0_i32_1 = arith.constant 0 : i32
    return %arg0, %c0_i32, %c0_i32_0 : i32, i32, i32
  }
}

</mosaic_0001>

<llo_original>
// kernel: inconv_1_forward.1
$region0: #{inconv_1_forward.1}
  #allocation0 [shape = 'u32[]', space=smem, size = 0x4, offset = 0x4, fixed_abs, tag = 'smem constant byte address 0x4 - core index']
  #allocation1 [shape = 'u32[144,128]{1,0:T(1,128)}', space=vmem, size = 0x12000, scoped, tag = 'internal scratch']
  #allocation2 [shape = 'f32[256,256]{1,0:T(8,128)}', space=vmem, size = 0x40000, scoped, tag = 'scratch operand']
  #allocation3 [shape = 'f32[8,512]{1,0:T(8,128)}', space=vmem, size = 0x4000, scoped, tag = 'scratch operand']
  #allocation4 [shape = 'f32[512,256]{1,0:T(8,128)}', space=vmem, size = 0x80000, scoped, tag = 'scratch operand']
  %s0 = inlined_call_operand.vmem [shape: f32[2,4,384], index: 0, kind: input, shape index: {}]
  %s1 = inlined_call_operand.vmem [shape: f32[8,256], index: 1, kind: input, shape index: {}]
  %s2 = inlined_call_operand.vmem [shape: f32[8,1], index: 2, kind: input, shape index: {}]
  %s3 = inlined_call_operand.vmem [shape: f32[8,512], index: 3, kind: input, shape index: {}]
  %s4 = inlined_call_operand.vmem [shape: f32[8,1], index: 4, kind: input, shape index: {}]
  %s5 = inlined_call_operand.vmem [shape: f32[8,256], index: 5, kind: input, shape index: {}]
  %s6 = inlined_call_operand.vmem [shape: f32[2,8,256], index: 6, kind: output, shape index: {}]
  %s7 = sld [smem:[#allocation0]]
  $region57: #{inconv_1_forward.1} parent=0
    _
  %s9 = ssub.s32 1, %s7
  %s10 = scalar_select 0, %s9, %s7
  loop: start=0, step=1, limit=4
  $region2: #{inconv_1_forward.1} parent=0 // loop_pre_header
    _
  $region3: #{inconv_1_forward.1} parent=0 // loop_header
    %s12 = sphi 0, %s16
    %p13 = scmp.ge.s32.totalorder %s12, 4
    %s22 = sphi 0, %s24
    %s25 = sphi 0, %s22
    %s26 = sphi 0, %s25
    %s42 = sphi 0, %s26
    %s46 = sphi 0, %s46
    %s48 = sphi 0, %s46
    %s49 = sphi 0, %s48
    %s63 = sphi 0, %s49
    %s67 = sphi 0, %s67
    %s69 = sphi 0, %s67
    %s70 = sphi 0, %s69
    %s84 = sphi 0, %s70
    %s88 = sphi 0, %s88
    %s90 = sphi 0, %s88
    %s91 = sphi 0, %s90
    %s105 = sphi 0, %s91
    %s109 = sphi 0, %s109
    %s111 = sphi 0, %s109
    %s112 = sphi 0, %s111
    %s126 = sphi 0, %s112
    %s130 = sphi 0, %s130
    %s132 = sphi 0, %s130
    %s133 = sphi 0, %s132
    %s147 = sphi 0, %s133
    %s153 = sphi 0, %s155
    %s156 = sphi 0, %s153
    %s157 = sphi 0, %s156
    %s173 = sphi 0, %s157
  $region4: #{inconv_1_forward.1} parent=0 // loop_header_branch
    %15 = sbr.rel (%p13) target = $region8
  $region5: #{inconv_1_forward.1} parent=0 // loop_body
    %s17 = ssub.s32 %s12, 1
    %s18 = ssub.s32 %s12, 2
    %s19 = sadd.s32 %s12, 1
    %s20 = ssub.s32 %s12, %s19
    %p21 = scmp.eq.s32.totalorder %s20, 0
    %s23 = sadd.s32 %s22, 1
    %s24 = scalar_select %p21, %s22, %s23
    %p27 = pneg %p21
    %p28 = scmp.eq.s32.totalorder %s12, 1
    %p29 = por %p27, %p28
    %p30 = scmp.ne.s32.totalorder %s22, %s25
    %p31 = scmp.eq.s32.totalorder %s12, 0
    %p32 = por %p30, %p31
    %p33 = scmp.ne.s32.totalorder %s22, %s25
    %p34 = scmp.eq.s32.totalorder %s17, 1
    %p35 = por %p33, %p34
    %p36 = scmp.ne.s32.totalorder %s25, %s26
    %p37 = scmp.eq.s32.totalorder %s17, 0
    %p38 = por %p36, %p37
    %p39 = scmp.ne.s32.totalorder %s25, %s26
    %p40 = scmp.eq.s32.totalorder %s18, 1
    %p41 = por %p39, %p40
    %p43 = scmp.ne.s32.totalorder %s26, %s42
    %p44 = scmp.eq.s32.totalorder %s18, 0
    %p45 = por %p43, %p44
    %s47 = sadd.s32 %s46, 1
    %p50 = scmp.eq.s32.totalorder %s12, 1
    %p51 = scmp.ne.s32.totalorder %s46, %s48
    %p52 = scmp.eq.s32.totalorder %s12, 0
    %p53 = por %p51, %p52
    %p54 = scmp.ne.s32.totalorder %s46, %s48
    %p55 = scmp.eq.s32.totalorder %s17, 1
    %p56 = por %p54, %p55
    %p57 = scmp.ne.s32.totalorder %s48, %s49
    %p58 = scmp.eq.s32.totalorder %s17, 0
    %p59 = por %p57, %p58
    %p60 = scmp.ne.s32.totalorder %s48, %s49
    %p61 = scmp.eq.s32.totalorder %s18, 1
    %p62 = por %p60, %p61
    %p64 = scmp.ne.s32.totalorder %s49, %s63
    %p65 = scmp.eq.s32.totalorder %s18, 0
    %p66 = por %p64, %p65
    %s68 = sadd.s32 %s67, 1
    %p71 = scmp.eq.s32.totalorder %s12, 1
    %p72 = scmp.ne.s32.totalorder %s67, %s69
    %p73 = scmp.eq.s32.totalorder %s12, 0
    %p74 = por %p72, %p73
    %p75 = scmp.ne.s32.totalorder %s67, %s69
    %p76 = scmp.eq.s32.totalorder %s17, 1
    %p77 = por %p75, %p76
    %p78 = scmp.ne.s32.totalorder %s69, %s70
    %p79 = scmp.eq.s32.totalorder %s17, 0
    %p80 = por %p78, %p79
    %p81 = scmp.ne.s32.totalorder %s69, %s70
    %p82 = scmp.eq.s32.totalorder %s18, 1
    %p83 = por %p81, %p82
    %p85 = scmp.ne.s32.totalorder %s70, %s84
    %p86 = scmp.eq.s32.totalorder %s18, 0
    %p87 = por %p85, %p86
    %s89 = sadd.s32 %s88, 1
    %p92 = scmp.eq.s32.totalorder %s12, 1
    %p93 = scmp.ne.s32.totalorder %s88, %s90
    %p94 = scmp.eq.s32.totalorder %s12, 0
    %p95 = por %p93, %p94
    %p96 = scmp.ne.s32.totalorder %s88, %s90
    %p97 = scmp.eq.s32.totalorder %s17, 1
    %p98 = por %p96, %p97
    %p99 = scmp.ne.s32.totalorder %s90, %s91
    %p100 = scmp.eq.s32.totalorder %s17, 0
    %p101 = por %p99, %p100
    %p102 = scmp.ne.s32.totalorder %s90, %s91
    %p103 = scmp.eq.s32.totalorder %s18, 1
    %p104 = por %p102, %p103
    %p106 = scmp.ne.s32.totalorder %s91, %s105
    %p107 = scmp.eq.s32.totalorder %s18, 0
    %p108 = por %p106, %p107
    %s110 = sadd.s32 %s109, 1
    %p113 = scmp.eq.s32.totalorder %s12, 1
    %p114 = scmp.ne.s32.totalorder %s109, %s111
    %p115 = scmp.eq.s32.totalorder %s12, 0
    %p116 = por %p114, %p115
    %p117 = scmp.ne.s32.totalorder %s109, %s111
    %p118 = scmp.eq.s32.totalorder %s17, 1
    %p119 = por %p117, %p118
    %p120 = scmp.ne.s32.totalorder %s111, %s112
    %p121 = scmp.eq.s32.totalorder %s17, 0
    %p122 = por %p120, %p121
    %p123 = scmp.ne.s32.totalorder %s111, %s112
    %p124 = scmp.eq.s32.totalorder %s18, 1
    %p125 = por %p123, %p124
    %p127 = scmp.ne.s32.totalorder %s112, %s126
    %p128 = scmp.eq.s32.totalorder %s18, 0
    %p129 = por %p127, %p128
    %s131 = sadd.s32 %s130, 1
    %p134 = scmp.eq.s32.totalorder %s12, 1
    %p135 = scmp.ne.s32.totalorder %s130, %s132
    %p136 = scmp.eq.s32.totalorder %s12, 0
    %p137 = por %p135, %p136
    %p138 = scmp.ne.s32.totalorder %s130, %s132
    %p139 = scmp.eq.s32.totalorder %s17, 1
    %p140 = por %p138, %p139
    %p141 = scmp.ne.s32.totalorder %s132, %s133
    %p142 = scmp.eq.s32.totalorder %s17, 0
    %p143 = por %p141, %p142
    %p144 = scmp.ne.s32.totalorder %s132, %s133
    %p145 = scmp.eq.s32.totalorder %s18, 1
    %p146 = por %p144, %p145
    %p148 = scmp.ne.s32.totalorder %s133, %s147
    %p149 = scmp.eq.s32.totalorder %s18, 0
    %p150 = por %p148, %p149
    %s151 = ssub.s32 %s12, %s19
    %p152 = scmp.eq.s32.totalorder %s151, 0
    %s154 = sadd.s32 %s153, 1
    %s155 = scalar_select %p152, %s153, %s154
    %p158 = pneg %p152
    %p159 = scmp.eq.s32.totalorder %s12, 1
    %p160 = por %p158, %p159
    %p161 = scmp.ne.s32.totalorder %s153, %s156
    %p162 = scmp.eq.s32.totalorder %s12, 0
    %p163 = por %p161, %p162
    %p164 = scmp.ne.s32.totalorder %s153, %s156
    %p165 = scmp.eq.s32.totalorder %s17, 1
    %p166 = por %p164, %p165
    %p167 = scmp.ne.s32.totalorder %s156, %s157
    %p168 = scmp.eq.s32.totalorder %s17, 0
    %p169 = por %p167, %p168
    %p170 = scmp.ne.s32.totalorder %s156, %s157
    %p171 = scmp.eq.s32.totalorder %s18, 1
    %p172 = por %p170, %p171
    %p174 = scmp.ne.s32.totalorder %s157, %s173
    %p175 = scmp.eq.s32.totalorder %s18, 0
    %p176 = por %p174, %p175
    %p177 = scmp.le.s32.totalorder 1, %s12
    %p178 = scmp.lt.s32.totalorder %s12, 3
    %p179 = pnand %p177, %p178
    %p180 = pneg %p179
    // Predicated region
    $region9: #{inconv_1_forward.1} parent=5 // pred_check
      _
    $region10: #{inconv_1_forward.1} parent=5 // pred_check_branch
      %182 = sbr.rel (%p179) target = $region12
    $region11: #{inconv_1_forward.1} parent=5 // pred_region
      %s183 = ssub.s32 %s12, 1
      // Predicated region
      $region13: #{inconv_1_forward.1} parent=11 // pred_check
        %p184 = pneg %p59
      $region14: #{inconv_1_forward.1} parent=11 // pred_check_branch
        %186 = sbr.rel (%p184) target = $region16
      $region15: #{inconv_1_forward.1} parent=11 // pred_region
        _
      $region16: #{inconv_1_forward.1} parent=11 // pred_fallthru
        _
      // Predicated region
      $region17: #{inconv_1_forward.1} parent=11 // pred_check
        %p187 = pneg %p80
      $region18: #{inconv_1_forward.1} parent=11 // pred_check_branch
        %189 = sbr.rel (%p187) target = $region20
      $region19: #{inconv_1_forward.1} parent=11 // pred_region
        _
      $region20: #{inconv_1_forward.1} parent=11 // pred_fallthru
        _
      // Predicated region
      $region21: #{inconv_1_forward.1} parent=11 // pred_check
        %p190 = pneg %p101
      $region22: #{inconv_1_forward.1} parent=11 // pred_check_branch
        %192 = sbr.rel (%p190) target = $region24
      $region23: #{inconv_1_forward.1} parent=11 // pred_region
        _
      $region24: #{inconv_1_forward.1} parent=11 // pred_fallthru
        _
      // Predicated region
      $region25: #{inconv_1_forward.1} parent=11 // pred_check
        %p193 = pneg %p122
      $region26: #{inconv_1_forward.1} parent=11 // pred_check_branch
        %195 = sbr.rel (%p193) target = $region28
      $region27: #{inconv_1_forward.1} parent=11 // pred_region
        _
      $region28: #{inconv_1_forward.1} parent=11 // pred_fallthru
        _
      // Predicated region
      $region29: #{inconv_1_forward.1} parent=11 // pred_check
        %p196 = pneg %p143
      $region30: #{inconv_1_forward.1} parent=11 // pred_check_branch
        %198 = sbr.rel (%p196) target = $region32
      $region31: #{inconv_1_forward.1} parent=11 // pred_region
        _
      $region32: #{inconv_1_forward.1} parent=11 // pred_fallthru
        _
    $region12: #{inconv_1_forward.1} parent=5 // pred_fallthru
      _
    %p199 = scmp.lt.s32.totalorder %s12, 2
    // Predicated region
    $region33: #{inconv_1_forward.1} parent=5 // pred_check
      %p200 = pneg %p199
    $region34: #{inconv_1_forward.1} parent=5 // pred_check_branch
      %202 = sbr.rel (%p200) target = $region36
    $region35: #{inconv_1_forward.1} parent=5 // pred_region
      // Predicated region
      $region37: #{inconv_1_forward.1} parent=35 // pred_check
        %p203 = pneg %p32
      $region38: #{inconv_1_forward.1} parent=35 // pred_check_branch
        %205 = sbr.rel (%p203) target = $region40
      $region39: #{inconv_1_forward.1} parent=35 // pred_region
        %p206 = scmp.lt.s32.totalorder %s12, 1
        %s207 = scalar_select %p206, %s12, 1
        %s208 = smul.addr %s207, 3
        %s209 = smul.addr %s208, 4
        %s210 = scalar_lea.vmem %s0, %s209
      $region40: #{inconv_1_forward.1} parent=35 // pred_fallthru
        _
    $region36: #{inconv_1_forward.1} parent=5 // pred_fallthru
      _
    %p211 = scmp.le.s32.totalorder 1, %s12
    %p212 = scmp.lt.s32.totalorder %s12, 3
    %p213 = pnand %p211, %p212
    %p214 = pneg %p213
    // Predicated region
    $region41: #{inconv_1_forward.1} parent=5 // pred_check
      _
    $region42: #{inconv_1_forward.1} parent=5 // pred_check_branch
      %216 = sbr.rel (%p213) target = $region44
    $region43: #{inconv_1_forward.1} parent=5 // pred_region
      %s217 = ssub.s32 %s12, 1
      %p218 = scmp.lt.s32.totalorder %s17, 1
      %s219 = scalar_select %p218, %s17, 1
      %s220 = smul.addr %s219, 3
      %s221 = smul.addr %s220, 4
      %s222 = scalar_lea.vmem %s0, %s221
      %p223 = pneg %p38
      %p224 = pneg %p35
      %p225 = pneg %p59
      %p226 = pneg %p56
      %p227 = pneg %p80
      %p228 = pneg %p77
      %p229 = pneg %p101
      %p230 = pneg %p98
      %p231 = pneg %p122
      %p232 = pneg %p119
      %p233 = pneg %p143
      %p234 = pneg %p140
      %p235 = pneg %p169
      %p236 = pneg %p166
      %p237 = scmp.lt.s32.totalorder %s17, 1
      %s238 = scalar_select %p237, %s17, 1
      %s239 = smul.addr %s238, 2
      %s240 = smul.addr %s239, 8
      %s241 = scalar_lea.vmem %s6, %s240
      %p242 = scmp.lt.s32.totalorder %s17, 1
      %s243 = scalar_select %p242, %s17, 1
      %s244 = smul.addr %s243, 3
      %s245 = smul.addr %s244, 4
      %s246 = scalar_lea.vmem %s0, %s245
      %p247 = scmp.lt.s32.totalorder %s17, 1
      %s248 = scalar_select %p247, %s17, 1
      %s249 = smul.addr %s248, 2
      %s250 = smul.addr %s249, 8
      %s251 = scalar_lea.vmem %s6, %s250
      %v252 = vld [vmem:[%s5] sm:$0xff]
      %v253 = vld [vmem:[%s5 + $0x8] sm:$0xff]
      %v254 = vld [vmem:[%s246] sm:$0xff]
      %v255 = vld [vmem:[%s246 + $0x8] sm:$0xf]
      %256 = vst [vmem:[#allocation2] sm:$0xff] 0.0
      %257 = vst [vmem:[#allocation2 + $0x8] sm:$0xff] 0.0
      %258 = vst [vmem:[#allocation2 + $0x10] sm:$0xff] 0.0
      %259 = vst [vmem:[#allocation2 + $0x18] sm:$0xff] 0.0
      %260 = vst [vmem:[#allocation2 + $0x20] sm:$0xff] 0.0
      %261 = vst [vmem:[#allocation2 + $0x28] sm:$0xff] 0.0
      %262 = vst [vmem:[#allocation2 + $0x30] sm:$0xff] 0.0
      %263 = vst [vmem:[#allocation2 + $0x38] sm:$0xff] 0.0
      %264 = vst [vmem:[#allocation2 + $0x40] sm:$0xff] 0.0
      %265 = vst [vmem:[#allocation2 + $0x48] sm:$0xff] 0.0
      %266 = vst [vmem:[#allocation2 + $0x50] sm:$0xff] 0.0
      %267 = vst [vmem:[#allocation2 + $0x58] sm:$0xff] 0.0
      %268 = vst [vmem:[#allocation2 + $0x60] sm:$0xff] 0.0
      %269 = vst [vmem:[#allocation2 + $0x68] sm:$0xff] 0.0
      %270 = vst [vmem:[#allocation2 + $0x70] sm:$0xff] 0.0
      %271 = vst [vmem:[#allocation2 + $0x78] sm:$0xff] 0.0
      %272 = vst [vmem:[#allocation2 + $0x80] sm:$0xff] 0.0
      %273 = vst [vmem:[#allocation2 + $0x88] sm:$0xff] 0.0
      %274 = vst [vmem:[#allocation2 + $0x90] sm:$0xff] 0.0
      %275 = vst [vmem:[#allocation2 + $0x98] sm:$0xff] 0.0
      %276 = vst [vmem:[#allocation2 + $0xa0] sm:$0xff] 0.0
      %277 = vst [vmem:[#allocation2 + $0xa8] sm:$0xff] 0.0
      %278 = vst [vmem:[#allocation2 + $0xb0] sm:$0xff] 0.0
      %279 = vst [vmem:[#allocation2 + $0xb8] sm:$0xff] 0.0
      %280 = vst [vmem:[#allocation2 + $0xc0] sm:$0xff] 0.0
      %281 = vst [vmem:[#allocation2 + $0xc8] sm:$0xff] 0.0
      %282 = vst [vmem:[#allocation2 + $0xd0] sm:$0xff] 0.0
      %283 = vst [vmem:[#allocation2 + $0xd8] sm:$0xff] 0.0
      %284 = vst [vmem:[#allocation2 + $0xe0] sm:$0xff] 0.0
      %285 = vst [vmem:[#allocation2 + $0xe8] sm:$0xff] 0.0
      %286 = vst [vmem:[#allocation2 + $0xf0] sm:$0xff] 0.0
      %287 = vst [vmem:[#allocation2 + $0xf8] sm:$0xff] 0.0
      %288 = vst [vmem:[#allocation2 + $0x100] sm:$0xff] 0.0
      %289 = vst [vmem:[#allocation2 + $0x108] sm:$0xff] 0.0
      %290 = vst [vmem:[#allocation2 + $0x110] sm:$0xff] 0.0
      %291 = vst [vmem:[#allocation2 + $0x118] sm:$0xff] 0.0
      %292 = vst [vmem:[#allocation2 + $0x120] sm:$0xff] 0.0
      %293 = vst [vmem:[#allocation2 + $0x128] sm:$0xff] 0.0
      %294 = vst [vmem:[#allocation2 + $0x130] sm:$0xff] 0.0
      %295 = vst [vmem:[#allocation2 + $0x138] sm:$0xff] 0.0
      %296 = vst [vmem:[#allocation2 + $0x140] sm:$0xff] 0.0
      %297 = vst [vmem:[#allocation2 + $0x148] sm:$0xff] 0.0
      %298 = vst [vmem:[#allocation2 + $0x150] sm:$0xff] 0.0
      %299 = vst [vmem:[#allocation2 + $0x158] sm:$0xff] 0.0
      %300 = vst [vmem:[#allocation2 + $0x160] sm:$0xff] 0.0
      %301 = vst [vmem:[#allocation2 + $0x168] sm:$0xff] 0.0
      %302 = vst [vmem:[#allocation2 + $0x170] sm:$0xff] 0.0
      %303 = vst [vmem:[#allocation2 + $0x178] sm:$0xff] 0.0
      %304 = vst [vmem:[#allocation2 + $0x180] sm:$0xff] 0.0
      %305 = vst [vmem:[#allocation2 + $0x188] sm:$0xff] 0.0
      %306 = vst [vmem:[#allocation2 + $0x190] sm:$0xff] 0.0
      %307 = vst [vmem:[#allocation2 + $0x198] sm:$0xff] 0.0
      %308 = vst [vmem:[#allocation2 + $0x1a0] sm:$0xff] 0.0
      %309 = vst [vmem:[#allocation2 + $0x1a8] sm:$0xff] 0.0
      %310 = vst [vmem:[#allocation2 + $0x1b0] sm:$0xff] 0.0
      %311 = vst [vmem:[#allocation2 + $0x1b8] sm:$0xff] 0.0
      %312 = vst [vmem:[#allocation2 + $0x1c0] sm:$0xff] 0.0
      %313 = vst [vmem:[#allocation2 + $0x1c8] sm:$0xff] 0.0
      %314 = vst [vmem:[#allocation2 + $0x1d0] sm:$0xff] 0.0
      %315 = vst [vmem:[#allocation2 + $0x1d8] sm:$0xff] 0.0
      %316 = vst [vmem:[#allocation2 + $0x1e0] sm:$0xff] 0.0
      %317 = vst [vmem:[#allocation2 + $0x1e8] sm:$0xff] 0.0
      %318 = vst [vmem:[#allocation2 + $0x1f0] sm:$0xff] 0.0
      %319 = vst [vmem:[#allocation2 + $0x1f8] sm:$0xff] 0.0
      %v320 = vlaneseq
      %v321 = vshrl.u32 %v320, 7
      %v322 = vsub.s32 0, %v321
      %v323 = vrot.slane %v252, %v322
      %v324 = vlaneseq
      %v325 = vshrl.u32 %v324, 7
      %v326 = vsub.s32 0, %v325
      %v327 = vrot.slane %v253, %v326
      %v330 = vcombine.low %v323, %v327
      %v332 = vmul.f32 %v254, %v330
      %v334 = vcombine.high %v332, %v332
      %336 = vst [vmem:[#allocation2] sm:$0xf] %v332
      %337 = vst [vmem:[#allocation2 + $0x8] sm:$0xf] %v334
      %v338 = vlaneseq
      %v339 = vshrl.u32 %v338, 7
      %v340 = vsub.s32 1, %v339
      %v341 = vrot.slane %v252, %v340
      %v342 = vlaneseq
      %v343 = vshrl.u32 %v342, 7
      %v344 = vsub.s32 1, %v343
      %v345 = vrot.slane %v253, %v344
      %v348 = vcombine.low %v341, %v345
      %349 = vrot.lane.b32.xlu0 %v348, 1
      %v350 = vpop.permute.xlu0 %349
      %v351 = vrot.slane %v350, 4
      %vm352 = vcmask 7168
      %v353 = vsel %vm352, %v351, %v350
      %v356 = vmul.f32 %v254, %v353
      %v357 = vmul.f32 %v255, %v351
      %v360 = vcombine.low %v356, %v356
      %v361 = vcombine.low %v357, %v357
      %362 = vrot.lane.b32.xlu0 %v360, 127
      %v363 = vpop.permute.xlu0 %362
      %364 = vrot.lane.b32.xlu0 %v356, 127
      %v365 = vpop.permute.xlu0 %364
      %366 = vrot.lane.b32.xlu0 %v361, 127
      %v367 = vpop.permute.xlu0 %366
      %vm368 = vcmask 1039360
      %v369 = vsel %vm368, %v363, %v365
      %v370 = vsel %vm368, %v365, %v367
      %373 = vst [vmem:[#allocation2] sm:$0xf0] %v369
      %374 = vst [vmem:[#allocation2 + $0x8] sm:$0xf0] %v370
      %v375 = vlaneseq
      %v376 = vshrl.u32 %v375, 7
      %v377 = vsub.s32 2, %v376
      %v378 = vrot.slane %v252, %v377
      %v379 = vlaneseq
      %v380 = vshrl.u32 %v379, 7
      %v381 = vsub.s32 2, %v380
      %v382 = vrot.slane %v253, %v381
      %v385 = vcombine.low %v378, %v382
      %386 = vrot.lane.b32.xlu0 %v385, 2
      %v387 = vpop.permute.xlu0 %386
      %v388 = vrot.slane %v387, 4
      %vm389 = vcmask 15360
      %v390 = vsel %vm389, %v388, %v387
      %v393 = vmul.f32 %v254, %v390
      %v394 = vmul.f32 %v255, %v388
      %v397 = vcombine.high %v393, %v393
      %398 = vrot.lane.b32.xlu0 %v393, 126
      %v399 = vpop.permute.xlu0 %398
      %400 = vrot.lane.b32.xlu0 %v397, 126
      %v401 = vpop.permute.xlu0 %400
      %402 = vrot.lane.b32.xlu0 %v394, 126
      %v403 = vpop.permute.xlu0 %402
      %vm404 = vcmask 1031168
      %v405 = vsel %vm404, %v399, %v401
      %v406 = vsel %vm404, %v401, %v403
      %409 = vst [vmem:[#allocation2 + $0x10] sm:$0xf] %v405
      %410 = vst [vmem:[#allocation2 + $0x18] sm:$0xf] %v406
      %v411 = vlaneseq
      %v412 = vshrl.u32 %v411, 7
      %v413 = vsub.s32 3, %v412
      %v414 = vrot.slane %v252, %v413
      %v415 = vlaneseq
      %v416 = vshrl.u32 %v415, 7
      %v417 = vsub.s32 3, %v416
      %v418 = vrot.slane %v253, %v417
      %v421 = vcombine.low %v414, %v418
      %422 = vrot.lane.b32.xlu0 %v421, 3
      %v423 = vpop.permute.xlu0 %422
      %v424 = vrot.slane %v423, 4
      %vm425 = vcmask 23552
      %v426 = vsel %vm425, %v424, %v423
      %v429 = vmul.f32 %v254, %v426
      %v430 = vmul.f32 %v255, %v424
      %v433 = vcombine.low %v429, %v429
      %v434 = vcombine.low %v430, %v430
      %435 = vrot.lane.b32.xlu0 %v433, 125
      %v436 = vpop.permute.xlu0 %435
      %437 = vrot.lane.b32.xlu0 %v429, 125
      %v438 = vpop.permute.xlu0 %437
      %439 = vrot.lane.b32.xlu0 %v434, 125
      %v440 = vpop.permute.xlu0 %439
      %vm441 = vcmask 1022976
      %v442 = vsel %vm441, %v436, %v438
      %v443 = vsel %vm441, %v438, %v440
      %446 = vst [vmem:[#allocation2 + $0x10] sm:$0xf0] %v442
      %447 = vst [vmem:[#allocation2 + $0x18] sm:$0xf0] %v443
      %v448 = vlaneseq
      %v449 = vshrl.u32 %v448, 7
      %v450 = vsub.s32 4, %v449
      %v451 = vrot.slane %v252, %v450
      %v452 = vlaneseq
      %v453 = vshrl.u32 %v452, 7
      %v454 = vsub.s32 4, %v453
      %v455 = vrot.slane %v253, %v454
      %v458 = vcombine.low %v451, %v455
      %459 = vrot.lane.b32.xlu0 %v458, 4
      %v460 = vpop.permute.xlu0 %459
      %v461 = vrot.slane %v460, 4
      %vm462 = vcmask 31744
      %v463 = vsel %vm462, %v461, %v460
      %v466 = vmul.f32 %v254, %v463
      %v467 = vmul.f32 %v255, %v461
      %v470 = vcombine.high %v466, %v466
      %471 = vrot.lane.b32.xlu0 %v466, 124
      %v472 = vpop.permute.xlu0 %471
      %473 = vrot.lane.b32.xlu0 %v470, 124
      %v474 = vpop.permute.xlu0 %473
      %475 = vrot.lane.b32.xlu0 %v467, 124
      %v476 = vpop.permute.xlu0 %475
      %vm477 = vcmask 1014784
      %v478 = vsel %vm477, %v472, %v474
      %v479 = vsel %vm477, %v474, %v476
      %482 = vst [vmem:[#allocation2 + $0x20] sm:$0xf] %v478
      %483 = vst [vmem:[#allocation2 + $0x28] sm:$0xf] %v479
      %v484 = vlaneseq
      %v485 = vshrl.u32 %v484, 7
      %v486 = vsub.s32 5, %v485
      %v487 = vrot.slane %v252, %v486
      %v488 = vlaneseq
      %v489 = vshrl.u32 %v488, 7
      %v490 = vsub.s32 5, %v489
      %v491 = vrot.slane %v253, %v490
      %v494 = vcombine.low %v487, %v491
      %495 = vrot.lane.b32.xlu0 %v494, 5
      %v496 = vpop.permute.xlu0 %495
      %v497 = vrot.slane %v496, 4
      %vm498 = vcmask 39936
      %v499 = vsel %vm498, %v497, %v496
      %v502 = vmul.f32 %v254, %v499
      %v503 = vmul.f32 %v255, %v497
      %v506 = vcombine.low %v502, %v502
      %v507 = vcombine.low %v503, %v503
      %508 = vrot.lane.b32.xlu0 %v506, 123
      %v509 = vpop.permute.xlu0 %508
      %510 = vrot.lane.b32.xlu0 %v502, 123
      %v511 = vpop.permute.xlu0 %510
      %512 = vrot.lane.b32.xlu0 %v507, 123
      %v513 = vpop.permute.xlu0 %512
      %vm514 = vcmask 1006592
      %v515 = vsel %vm514, %v509, %v511
      %v516 = vsel %vm514, %v511, %v513
      %519 = vst [vmem:[#allocation2 + $0x20] sm:$0xf0] %v515
      %520 = vst [vmem:[#allocation2 + $0x28] sm:$0xf0] %v516
      %v521 = vlaneseq
      %v522 = vshrl.u32 %v521, 7
      %v523 = vsub.s32 6, %v522
      %v524 = vrot.slane %v252, %v523
      %v525 = vlaneseq
      %v526 = vshrl.u32 %v525, 7
      %v527 = vsub.s32 6, %v526
      %v528 = vrot.slane %v253, %v527
      %v531 = vcombine.low %v524, %v528
      %532 = vrot.lane.b32.xlu0 %v531, 6
      %v533 = vpop.permute.xlu0 %532
      %v534 = vrot.slane %v533, 4
      %vm535 = vcmask 48128
      %v536 = vsel %vm535, %v534, %v533
      %v539 = vmul.f32 %v254, %v536
      %v540 = vmul.f32 %v255, %v534
      %v543 = vcombine.high %v539, %v539
      %544 = vrot.lane.b32.xlu0 %v539, 122
      %v545 = vpop.permute.xlu0 %544
      %546 = vrot.lane.b32.xlu0 %v543, 122
      %v547 = vpop.permute.xlu0 %546
      %548 = vrot.lane.b32.xlu0 %v540, 122
      %v549 = vpop.permute.xlu0 %548
      %vm550 = vcmask 998400
      %v551 = vsel %vm550, %v545, %v547
      %v552 = vsel %vm550, %v547, %v549
      %555 = vst [vmem:[#allocation2 + $0x30] sm:$0xf] %v551
      %556 = vst [vmem:[#allocation2 + $0x38] sm:$0xf] %v552
      %557 = vrot.lane.b32.xlu0 %v330, 16
      %v558 = vpop.permute.xlu0 %557
      %v559 = vrot.slane %v558, 4
      %vm560 = vcmask 130048
      %v561 = vsel %vm560, %v559, %v558
      %v564 = vmul.f32 %v254, %v561
      %v565 = vmul.f32 %v255, %v559
      %v568 = vcombine.low %v564, %v564
      %v569 = vcombine.low %v565, %v565
      %570 = vrot.lane.b32.xlu0 %v568, 112
      %v571 = vpop.permute.xlu0 %570
      %572 = vrot.lane.b32.xlu0 %v564, 112
      %v573 = vpop.permute.xlu0 %572
      %574 = vrot.lane.b32.xlu0 %v569, 112
      %v575 = vpop.permute.xlu0 %574
      %vm576 = vcmask 916480
      %v577 = vsel %vm576, %v571, %v573
      %v578 = vsel %vm576, %v573, %v575
      %581 = vst [vmem:[#allocation2 + $0x30] sm:$0xf0] %v577
      %582 = vst [vmem:[#allocation2 + $0x38] sm:$0xf0] %v578
      %583 = vrot.lane.b32.xlu0 %v348, 17
      %v584 = vpop.permute.xlu0 %583
      %v585 = vrot.slane %v584, 4
      %vm586 = vcmask 138240
      %v587 = vsel %vm586, %v585, %v584
      %v590 = vmul.f32 %v254, %v587
      %v591 = vmul.f32 %v255, %v585
      %v594 = vcombine.high %v590, %v590
      %595 = vrot.lane.b32.xlu0 %v590, 111
      %v596 = vpop.permute.xlu0 %595
      %597 = vrot.lane.b32.xlu0 %v594, 111
      %v598 = vpop.permute.xlu0 %597
      %599 = vrot.lane.b32.xlu0 %v591, 111
      %v600 = vpop.permute.xlu0 %599
      %vm601 = vcmask 908288
      %v602 = vsel %vm601, %v596, %v598
      %v603 = vsel %vm601, %v598, %v600
      %606 = vst [vmem:[#allocation2 + $0x40] sm:$0xf] %v602
      %607 = vst [vmem:[#allocation2 + $0x48] sm:$0xf] %v603
      %608 = vrot.lane.b32.xlu0 %v385, 18
      %v609 = vpop.permute.xlu0 %608
      %v610 = vrot.slane %v609, 4
      %vm611 = vcmask 146432
      %v612 = vsel %vm611, %v610, %v609
      %v615 = vmul.f32 %v254, %v612
      %v616 = vmul.f32 %v255, %v610
      %v619 = vcombine.low %v615, %v615
      %v620 = vcombine.low %v616, %v616
      %621 = vrot.lane.b32.xlu0 %v619, 110
      %v622 = vpop.permute.xlu0 %621
      %623 = vrot.lane.b32.xlu0 %v615, 110
      %v624 = vpop.permute.xlu0 %623
      %625 = vrot.lane.b32.xlu0 %v620, 110
      %v626 = vpop.permute.xlu0 %625
      %vm627 = vcmask 900096
      %v628 = vsel %vm627, %v622, %v624
      %v629 = vsel %vm627, %v624, %v626
      %632 = vst [vmem:[#allocation2 + $0x40] sm:$0xf0] %v628
      %633 = vst [vmem:[#allocation2 + $0x48] sm:$0xf0] %v629
      %634 = vrot.lane.b32.xlu0 %v421, 19
      %v635 = vpop.permute.xlu0 %634
      %v636 = vrot.slane %v635, 4
      %vm637 = vcmask 154624
      %v638 = vsel %vm637, %v636, %v635
      %v641 = vmul.f32 %v254, %v638
      %v642 = vmul.f32 %v255, %v636
      %v645 = vcombine.high %v641, %v641
      %646 = vrot.lane.b32.xlu0 %v641, 109
      %v647 = vpop.permute.xlu0 %646
      %648 = vrot.lane.b32.xlu0 %v645, 109
      %v649 = vpop.permute.xlu0 %648
      %650 = vrot.lane.b32.xlu0 %v642, 109
      %v651 = vpop.permute.xlu0 %650
      %vm652 = vcmask 891904
      %v653 = vsel %vm652, %v647, %v649
      %v654 = vsel %vm652, %v649, %v651
      %657 = vst [vmem:[#allocation2 + $0x50] sm:$0xf] %v653
      %658 = vst [vmem:[#allocation2 + $0x58] sm:$0xf] %v654
      %659 = vrot.lane.b32.xlu0 %v458, 20
      %v660 = vpop.permute.xlu0 %659
      %v661 = vrot.slane %v660, 4
      %vm662 = vcmask 162816
      %v663 = vsel %vm662, %v661, %v660
      %v666 = vmul.f32 %v254, %v663
      %v667 = vmul.f32 %v255, %v661
      %v670 = vcombine.low %v666, %v666
      %v671 = vcombine.low %v667, %v667
      %672 = vrot.lane.b32.xlu0 %v670, 108
      %v673 = vpop.permute.xlu0 %672
      %674 = vrot.lane.b32.xlu0 %v666, 108
      %v675 = vpop.permute.xlu0 %674
      %676 = vrot.lane.b32.xlu0 %v671, 108
      %v677 = vpop.permute.xlu0 %676
      %vm678 = vcmask 883712
      %v679 = vsel %vm678, %v673, %v675
      %v680 = vsel %vm678, %v675, %v677
      %683 = vst [vmem:[#allocation2 + $0x50] sm:$0xf0] %v679
      %684 = vst [vmem:[#allocation2 + $0x58] sm:$0xf0] %v680
      %685 = vrot.lane.b32.xlu0 %v494, 21
      %v686 = vpop.permute.xlu0 %685
      %v687 = vrot.slane %v686, 4
      %vm688 = vcmask 171008
      %v689 = vsel %vm688, %v687, %v686
      %v692 = vmul.f32 %v254, %v689
      %v693 = vmul.f32 %v255, %v687
      %v696 = vcombine.high %v692, %v692
      %697 = vrot.lane.b32.xlu0 %v692, 107
      %v698 = vpop.permute.xlu0 %697
      %699 = vrot.lane.b32.xlu0 %v696, 107
      %v700 = vpop.permute.xlu0 %699
      %701 = vrot.lane.b32.xlu0 %v693, 107
      %v702 = vpop.permute.xlu0 %701
      %vm703 = vcmask 875520
      %v704 = vsel %vm703, %v698, %v700
      %v705 = vsel %vm703, %v700, %v702
      %708 = vst [vmem:[#allocation2 + $0x60] sm:$0xf] %v704
      %709 = vst [vmem:[#allocation2 + $0x68] sm:$0xf] %v705
      %710 = vrot.lane.b32.xlu0 %v531, 22
      %v711 = vpop.permute.xlu0 %710
      %v712 = vrot.slane %v711, 4
      %vm713 = vcmask 179200
      %v714 = vsel %vm713, %v712, %v711
      %v717 = vmul.f32 %v254, %v714
      %v718 = vmul.f32 %v255, %v712
      %v721 = vcombine.low %v717, %v717
      %v722 = vcombine.low %v718, %v718
      %723 = vrot.lane.b32.xlu0 %v721, 106
      %v724 = vpop.permute.xlu0 %723
      %725 = vrot.lane.b32.xlu0 %v717, 106
      %v726 = vpop.permute.xlu0 %725
      %727 = vrot.lane.b32.xlu0 %v722, 106
      %v728 = vpop.permute.xlu0 %727
      %vm729 = vcmask 867328
      %v730 = vsel %vm729, %v724, %v726
      %v731 = vsel %vm729, %v726, %v728
      %734 = vst [vmem:[#allocation2 + $0x60] sm:$0xf0] %v730
      %735 = vst [vmem:[#allocation2 + $0x68] sm:$0xf0] %v731
      %736 = vrot.lane.b32.xlu0 %v330, 32
      %v737 = vpop.permute.xlu0 %736
      %v738 = vrot.slane %v737, 4
      %vm739 = vcmask 261120
      %v740 = vsel %vm739, %v738, %v737
      %v743 = vmul.f32 %v254, %v740
      %v744 = vmul.f32 %v255, %v738
      %v747 = vcombine.high %v743, %v743
      %748 = vrot.lane.b32.xlu0 %v743, 96
      %v749 = vpop.permute.xlu0 %748
      %750 = vrot.lane.b32.xlu0 %v747, 96
      %v751 = vpop.permute.xlu0 %750
      %752 = vrot.lane.b32.xlu0 %v744, 96
      %v753 = vpop.permute.xlu0 %752
      %vm754 = vcmask 785408
      %v755 = vsel %vm754, %v749, %v751
      %v756 = vsel %vm754, %v751, %v753
      %759 = vst [vmem:[#allocation2 + $0x70] sm:$0xf] %v755
      %760 = vst [vmem:[#allocation2 + $0x78] sm:$0xf] %v756
      %761 = vrot.lane.b32.xlu0 %v348, 33
      %v762 = vpop.permute.xlu0 %761
      %v763 = vrot.slane %v762, 4
      %vm764 = vcmask 269312
      %v765 = vsel %vm764, %v763, %v762
      %v768 = vmul.f32 %v254, %v765
      %v769 = vmul.f32 %v255, %v763
      %v772 = vcombine.low %v768, %v768
      %v773 = vcombine.low %v769, %v769
      %774 = vrot.lane.b32.xlu0 %v772, 95
      %v775 = vpop.permute.xlu0 %774
      %776 = vrot.lane.b32.xlu0 %v768, 95
      %v777 = vpop.permute.xlu0 %776
      %778 = vrot.lane.b32.xlu0 %v773, 95
      %v779 = vpop.permute.xlu0 %778
      %vm780 = vcmask 777216
      %v781 = vsel %vm780, %v775, %v777
      %v782 = vsel %vm780, %v777, %v779
      %785 = vst [vmem:[#allocation2 + $0x70] sm:$0xf0] %v781
      %786 = vst [vmem:[#allocation2 + $0x78] sm:$0xf0] %v782
      %787 = vrot.lane.b32.xlu0 %v385, 34
      %v788 = vpop.permute.xlu0 %787
      %v789 = vrot.slane %v788, 4
      %vm790 = vcmask 277504
      %v791 = vsel %vm790, %v789, %v788
      %v794 = vmul.f32 %v254, %v791
      %v795 = vmul.f32 %v255, %v789
      %v798 = vcombine.high %v794, %v794
      %799 = vrot.lane.b32.xlu0 %v794, 94
      %v800 = vpop.permute.xlu0 %799
      %801 = vrot.lane.b32.xlu0 %v798, 94
      %v802 = vpop.permute.xlu0 %801
      %803 = vrot.lane.b32.xlu0 %v795, 94
      %v804 = vpop.permute.xlu0 %803
      %vm805 = vcmask 769024
      %v806 = vsel %vm805, %v800, %v802
      %v807 = vsel %vm805, %v802, %v804
      %810 = vst [vmem:[#allocation2 + $0x80] sm:$0xf] %v806
      %811 = vst [vmem:[#allocation2 + $0x88] sm:$0xf] %v807
      %812 = vrot.lane.b32.xlu0 %v421, 35
      %v813 = vpop.permute.xlu0 %812
      %v814 = vrot.slane %v813, 4
      %vm815 = vcmask 285696
      %v816 = vsel %vm815, %v814, %v813
      %v819 = vmul.f32 %v254, %v816
      %v820 = vmul.f32 %v255, %v814
      %v823 = vcombine.low %v819, %v819
      %v824 = vcombine.low %v820, %v820
      %825 = vrot.lane.b32.xlu0 %v823, 93
      %v826 = vpop.permute.xlu0 %825
      %827 = vrot.lane.b32.xlu0 %v819, 93
      %v828 = vpop.permute.xlu0 %827
      %829 = vrot.lane.b32.xlu0 %v824, 93
      %v830 = vpop.permute.xlu0 %829
      %vm831 = vcmask 760832
      %v832 = vsel %vm831, %v826, %v828
      %v833 = vsel %vm831, %v828, %v830
      %836 = vst [vmem:[#allocation2 + $0x80] sm:$0xf0] %v832
      %837 = vst [vmem:[#allocation2 + $0x88] sm:$0xf0] %v833
      %838 = vrot.lane.b32.xlu0 %v458, 36
      %v839 = vpop.permute.xlu0 %838
      %v840 = vrot.slane %v839, 4
      %vm841 = vcmask 293888
      %v842 = vsel %vm841, %v840, %v839
      %v845 = vmul.f32 %v254, %v842
      %v846 = vmul.f32 %v255, %v840
      %v849 = vcombine.high %v845, %v845
      %850 = vrot.lane.b32.xlu0 %v845, 92
      %v851 = vpop.permute.xlu0 %850
      %852 = vrot.lane.b32.xlu0 %v849, 92
      %v853 = vpop.permute.xlu0 %852
      %854 = vrot.lane.b32.xlu0 %v846, 92
      %v855 = vpop.permute.xlu0 %854
      %vm856 = vcmask 752640
      %v857 = vsel %vm856, %v851, %v853
      %v858 = vsel %vm856, %v853, %v855
      %861 = vst [vmem:[#allocation2 + $0x90] sm:$0xf] %v857
      %862 = vst [vmem:[#allocation2 + $0x98] sm:$0xf] %v858
      %863 = vrot.lane.b32.xlu0 %v494, 37
      %v864 = vpop.permute.xlu0 %863
      %v865 = vrot.slane %v864, 4
      %vm866 = vcmask 302080
      %v867 = vsel %vm866, %v865, %v864
      %v870 = vmul.f32 %v254, %v867
      %v871 = vmul.f32 %v255, %v865
      %v874 = vcombine.low %v870, %v870
      %v875 = vcombine.low %v871, %v871
      %876 = vrot.lane.b32.xlu0 %v874, 91
      %v877 = vpop.permute.xlu0 %876
      %878 = vrot.lane.b32.xlu0 %v870, 91
      %v879 = vpop.permute.xlu0 %878
      %880 = vrot.lane.b32.xlu0 %v875, 91
      %v881 = vpop.permute.xlu0 %880
      %vm882 = vcmask 744448
      %v883 = vsel %vm882, %v877, %v879
      %v884 = vsel %vm882, %v879, %v881
      %887 = vst [vmem:[#allocation2 + $0x90] sm:$0xf0] %v883
      %888 = vst [vmem:[#allocation2 + $0x98] sm:$0xf0] %v884
      %889 = vrot.lane.b32.xlu0 %v531, 38
      %v890 = vpop.permute.xlu0 %889
      %v891 = vrot.slane %v890, 4
      %vm892 = vcmask 310272
      %v893 = vsel %vm892, %v891, %v890
      %v896 = vmul.f32 %v254, %v893
      %v897 = vmul.f32 %v255, %v891
      %v900 = vcombine.high %v896, %v896
      %901 = vrot.lane.b32.xlu0 %v896, 90
      %v902 = vpop.permute.xlu0 %901
      %903 = vrot.lane.b32.xlu0 %v900, 90
      %v904 = vpop.permute.xlu0 %903
      %905 = vrot.lane.b32.xlu0 %v897, 90
      %v906 = vpop.permute.xlu0 %905
      %vm907 = vcmask 736256
      %v908 = vsel %vm907, %v902, %v904
      %v909 = vsel %vm907, %v904, %v906
      %912 = vst [vmem:[#allocation2 + $0xa0] sm:$0xf] %v908
      %913 = vst [vmem:[#allocation2 + $0xa8] sm:$0xf] %v909
      %914 = vrot.lane.b32.xlu0 %v330, 48
      %v915 = vpop.permute.xlu0 %914
      %v916 = vrot.slane %v915, 4
      %vm917 = vcmask 392192
      %v918 = vsel %vm917, %v916, %v915
      %v921 = vmul.f32 %v254, %v918
      %v922 = vmul.f32 %v255, %v916
      %v925 = vcombine.low %v921, %v921
      %v926 = vcombine.low %v922, %v922
      %927 = vrot.lane.b32.xlu0 %v925, 80
      %v928 = vpop.permute.xlu0 %927
      %929 = vrot.lane.b32.xlu0 %v921, 80
      %v930 = vpop.permute.xlu0 %929
      %931 = vrot.lane.b32.xlu0 %v926, 80
      %v932 = vpop.permute.xlu0 %931
      %vm933 = vcmask 654336
      %v934 = vsel %vm933, %v928, %v930
      %v935 = vsel %vm933, %v930, %v932
      %938 = vst [vmem:[#allocation2 + $0xa0] sm:$0xf0] %v934
      %939 = vst [vmem:[#allocation2 + $0xa8] sm:$0xf0] %v935
      %940 = vrot.lane.b32.xlu0 %v348, 49
      %v941 = vpop.permute.xlu0 %940
      %v942 = vrot.slane %v941, 4
      %vm943 = vcmask 400384
      %v944 = vsel %vm943, %v942, %v941
      %v947 = vmul.f32 %v254, %v944
      %v948 = vmul.f32 %v255, %v942
      %v951 = vcombine.high %v947, %v947
      %952 = vrot.lane.b32.xlu0 %v947, 79
      %v953 = vpop.permute.xlu0 %952
      %954 = vrot.lane.b32.xlu0 %v951, 79
      %v955 = vpop.permute.xlu0 %954
      %956 = vrot.lane.b32.xlu0 %v948, 79
      %v957 = vpop.permute.xlu0 %956
      %vm958 = vcmask 646144
      %v959 = vsel %vm958, %v953, %v955
      %v960 = vsel %vm958, %v955, %v957
      %963 = vst [vmem:[#allocation2 + $0xb0] sm:$0xf] %v959
      %964 = vst [vmem:[#allocation2 + $0xb8] sm:$0xf] %v960
      %965 = vrot.lane.b32.xlu0 %v385, 50
      %v966 = vpop.permute.xlu0 %965
      %v967 = vrot.slane %v966, 4
      %vm968 = vcmask 408576
      %v969 = vsel %vm968, %v967, %v966
      %v972 = vmul.f32 %v254, %v969
      %v973 = vmul.f32 %v255, %v967
      %v976 = vcombine.low %v972, %v972
      %v977 = vcombine.low %v973, %v973
      %978 = vrot.lane.b32.xlu0 %v976, 78
      %v979 = vpop.permute.xlu0 %978
      %980 = vrot.lane.b32.xlu0 %v972, 78
      %v981 = vpop.permute.xlu0 %980
      %982 = vrot.lane.b32.xlu0 %v977, 78
      %v983 = vpop.permute.xlu0 %982
      %vm984 = vcmask 637952
      %v985 = vsel %vm984, %v979, %v981
      %v986 = vsel %vm984, %v981, %v983
      %989 = vst [vmem:[#allocation2 + $0xb0] sm:$0xf0] %v985
      %990 = vst [vmem:[#allocation2 + $0xb8] sm:$0xf0] %v986
      %991 = vrot.lane.b32.xlu0 %v421, 51
      %v992 = vpop.permute.xlu0 %991
      %v993 = vrot.slane %v992, 4
      %vm994 = vcmask 416768
      %v995 = vsel %vm994, %v993, %v992
      %v998 = vmul.f32 %v254, %v995
      %v999 = vmul.f32 %v255, %v993
      %v1002 = vcombine.high %v998, %v998
      %1003 = vrot.lane.b32.xlu0 %v998, 77
      %v1004 = vpop.permute.xlu0 %1003
      %1005 = vrot.lane.b32.xlu0 %v1002, 77
      %v1006 = vpop.permute.xlu0 %1005
      %1007 = vrot.lane.b32.xlu0 %v999, 77
      %v1008 = vpop.permute.xlu0 %1007
      %vm1009 = vcmask 629760
      %v1010 = vsel %vm1009, %v1004, %v1006
      %v1011 = vsel %vm1009, %v1006, %v1008
      %1014 = vst [vmem:[#allocation2 + $0xc0] sm:$0xf] %v1010
      %1015 = vst [vmem:[#allocation2 + $0xc8] sm:$0xf] %v1011
      %1016 = vrot.lane.b32.xlu0 %v458, 52
      %v1017 = vpop.permute.xlu0 %1016
      %v1018 = vrot.slane %v1017, 4
      %vm1019 = vcmask 424960
      %v1020 = vsel %vm1019, %v1018, %v1017
      %v1023 = vmul.f32 %v254, %v1020
      %v1024 = vmul.f32 %v255, %v1018
      %v1027 = vcombine.low %v1023, %v1023
      %v1028 = vcombine.low %v1024, %v1024
      %1029 = vrot.lane.b32.xlu0 %v1027, 76
      %v1030 = vpop.permute.xlu0 %1029
      %1031 = vrot.lane.b32.xlu0 %v1023, 76
      %v1032 = vpop.permute.xlu0 %1031
      %1033 = vrot.lane.b32.xlu0 %v1028, 76
      %v1034 = vpop.permute.xlu0 %1033
      %vm1035 = vcmask 621568
      %v1036 = vsel %vm1035, %v1030, %v1032
      %v1037 = vsel %vm1035, %v1032, %v1034
      %1040 = vst [vmem:[#allocation2 + $0xc0] sm:$0xf0] %v1036
      %1041 = vst [vmem:[#allocation2 + $0xc8] sm:$0xf0] %v1037
      %1042 = vrot.lane.b32.xlu0 %v494, 53
      %v1043 = vpop.permute.xlu0 %1042
      %v1044 = vrot.slane %v1043, 4
      %vm1045 = vcmask 433152
      %v1046 = vsel %vm1045, %v1044, %v1043
      %v1049 = vmul.f32 %v254, %v1046
      %v1050 = vmul.f32 %v255, %v1044
      %v1053 = vcombine.high %v1049, %v1049
      %1054 = vrot.lane.b32.xlu0 %v1049, 75
      %v1055 = vpop.permute.xlu0 %1054
      %1056 = vrot.lane.b32.xlu0 %v1053, 75
      %v1057 = vpop.permute.xlu0 %1056
      %1058 = vrot.lane.b32.xlu0 %v1050, 75
      %v1059 = vpop.permute.xlu0 %1058
      %vm1060 = vcmask 613376
      %v1061 = vsel %vm1060, %v1055, %v1057
      %v1062 = vsel %vm1060, %v1057, %v1059
      %1065 = vst [vmem:[#allocation2 + $0xd0] sm:$0xf] %v1061
      %1066 = vst [vmem:[#allocation2 + $0xd8] sm:$0xf] %v1062
      %1067 = vrot.lane.b32.xlu0 %v531, 54
      %v1068 = vpop.permute.xlu0 %1067
      %v1069 = vrot.slane %v1068, 4
      %vm1070 = vcmask 441344
      %v1071 = vsel %vm1070, %v1069, %v1068
      %v1074 = vmul.f32 %v254, %v1071
      %v1075 = vmul.f32 %v255, %v1069
      %v1078 = vcombine.low %v1074, %v1074
      %v1079 = vcombine.low %v1075, %v1075
      %1080 = vrot.lane.b32.xlu0 %v1078, 74
      %v1081 = vpop.permute.xlu0 %1080
      %1082 = vrot.lane.b32.xlu0 %v1074, 74
      %v1083 = vpop.permute.xlu0 %1082
      %1084 = vrot.lane.b32.xlu0 %v1079, 74
      %v1085 = vpop.permute.xlu0 %1084
      %vm1086 = vcmask 605184
      %v1087 = vsel %vm1086, %v1081, %v1083
      %v1088 = vsel %vm1086, %v1083, %v1085
      %1091 = vst [vmem:[#allocation2 + $0xd0] sm:$0xf0] %v1087
      %1092 = vst [vmem:[#allocation2 + $0xd8] sm:$0xf0] %v1088
      %1093 = vrot.lane.b32.xlu0 %v330, 64
      %v1094 = vpop.permute.xlu0 %1093
      %v1095 = vrot.slane %v1094, 4
      %vm1096 = vcmask 523264
      %v1097 = vsel %vm1096, %v1095, %v1094
      %v1100 = vmul.f32 %v254, %v1097
      %v1101 = vmul.f32 %v255, %v1095
      %v1104 = vcombine.high %v1100, %v1100
      %1105 = vrot.lane.b32.xlu0 %v1100, 64
      %v1106 = vpop.permute.xlu0 %1105
      %1107 = vrot.lane.b32.xlu0 %v1104, 64
      %v1108 = vpop.permute.xlu0 %1107
      %1109 = vrot.lane.b32.xlu0 %v1101, 64
      %v1110 = vpop.permute.xlu0 %1109
      %v1111 = vsel %vm1096, %v1106, %v1108
      %v1112 = vsel %vm1096, %v1108, %v1110
      %1115 = vst [vmem:[#allocation2 + $0xe0] sm:$0xf] %v1111
      %1116 = vst [vmem:[#allocation2 + $0xe8] sm:$0xf] %v1112
      %1117 = vrot.lane.b32.xlu0 %v348, 65
      %v1118 = vpop.permute.xlu0 %1117
      %v1119 = vrot.slane %v1118, 4
      %vm1120 = vcmask 531456
      %v1121 = vsel %vm1120, %v1119, %v1118
      %v1124 = vmul.f32 %v254, %v1121
      %v1125 = vmul.f32 %v255, %v1119
      %v1128 = vcombine.low %v1124, %v1124
      %v1129 = vcombine.low %v1125, %v1125
      %1130 = vrot.lane.b32.xlu0 %v1128, 63
      %v1131 = vpop.permute.xlu0 %1130
      %1132 = vrot.lane.b32.xlu0 %v1124, 63
      %v1133 = vpop.permute.xlu0 %1132
      %1134 = vrot.lane.b32.xlu0 %v1129, 63
      %v1135 = vpop.permute.xlu0 %1134
      %vm1136 = vcmask 515072
      %v1137 = vsel %vm1136, %v1131, %v1133
      %v1138 = vsel %vm1136, %v1133, %v1135
      %1141 = vst [vmem:[#allocation2 + $0xe0] sm:$0xf0] %v1137
      %1142 = vst [vmem:[#allocation2 + $0xe8] sm:$0xf0] %v1138
      %1143 = vrot.lane.b32.xlu0 %v385, 66
      %v1144 = vpop.permute.xlu0 %1143
      %v1145 = vrot.slane %v1144, 4
      %vm1146 = vcmask 539648
      %v1147 = vsel %vm1146, %v1145, %v1144
      %v1150 = vmul.f32 %v254, %v1147
      %v1151 = vmul.f32 %v255, %v1145
      %v1154 = vcombine.high %v1150, %v1150
      %1155 = vrot.lane.b32.xlu0 %v1150, 62
      %v1156 = vpop.permute.xlu0 %1155
      %1157 = vrot.lane.b32.xlu0 %v1154, 62
      %v1158 = vpop.permute.xlu0 %1157
      %1159 = vrot.lane.b32.xlu0 %v1151, 62
      %v1160 = vpop.permute.xlu0 %1159
      %vm1161 = vcmask 506880
      %v1162 = vsel %vm1161, %v1156, %v1158
      %v1163 = vsel %vm1161, %v1158, %v1160
      %1166 = vst [vmem:[#allocation2 + $0xf0] sm:$0xf] %v1162
      %1167 = vst [vmem:[#allocation2 + $0xf8] sm:$0xf] %v1163
      %1168 = vrot.lane.b32.xlu0 %v421, 67
      %v1169 = vpop.permute.xlu0 %1168
      %v1170 = vrot.slane %v1169, 4
      %vm1171 = vcmask 547840
      %v1172 = vsel %vm1171, %v1170, %v1169
      %v1175 = vmul.f32 %v254, %v1172
      %v1176 = vmul.f32 %v255, %v1170
      %v1179 = vcombine.low %v1175, %v1175
      %v1180 = vcombine.low %v1176, %v1176
      %1181 = vrot.lane.b32.xlu0 %v1179, 61
      %v1182 = vpop.permute.xlu0 %1181
      %1183 = vrot.lane.b32.xlu0 %v1175, 61
      %v1184 = vpop.permute.xlu0 %1183
      %1185 = vrot.lane.b32.xlu0 %v1180, 61
      %v1186 = vpop.permute.xlu0 %1185
      %vm1187 = vcmask 498688
      %v1188 = vsel %vm1187, %v1182, %v1184
      %v1189 = vsel %vm1187, %v1184, %v1186
      %1192 = vst [vmem:[#allocation2 + $0xf0] sm:$0xf0] %v1188
      %1193 = vst [vmem:[#allocation2 + $0xf8] sm:$0xf0] %v1189
      %1194 = vrot.lane.b32.xlu0 %v458, 68
      %v1195 = vpop.permute.xlu0 %1194
      %v1196 = vrot.slane %v1195, 4
      %vm1197 = vcmask 556032
      %v1198 = vsel %vm1197, %v1196, %v1195
      %v1201 = vmul.f32 %v254, %v1198
      %v1202 = vmul.f32 %v255, %v1196
      %v1205 = vcombine.high %v1201, %v1201
      %1206 = vrot.lane.b32.xlu0 %v1201, 60
      %v1207 = vpop.permute.xlu0 %1206
      %1208 = vrot.lane.b32.xlu0 %v1205, 60
      %v1209 = vpop.permute.xlu0 %1208
      %1210 = vrot.lane.b32.xlu0 %v1202, 60
      %v1211 = vpop.permute.xlu0 %1210
      %vm1212 = vcmask 490496
      %v1213 = vsel %vm1212, %v1207, %v1209
      %v1214 = vsel %vm1212, %v1209, %v1211
      %1217 = vst [vmem:[#allocation2 + $0x100] sm:$0xf] %v1213
      %1218 = vst [vmem:[#allocation2 + $0x108] sm:$0xf] %v1214
      %1219 = vrot.lane.b32.xlu0 %v494, 69
      %v1220 = vpop.permute.xlu0 %1219
      %v1221 = vrot.slane %v1220, 4
      %vm1222 = vcmask 564224
      %v1223 = vsel %vm1222, %v1221, %v1220
      %v1226 = vmul.f32 %v254, %v1223
      %v1227 = vmul.f32 %v255, %v1221
      %v1230 = vcombine.low %v1226, %v1226
      %v1231 = vcombine.low %v1227, %v1227
      %1232 = vrot.lane.b32.xlu0 %v1230, 59
      %v1233 = vpop.permute.xlu0 %1232
      %1234 = vrot.lane.b32.xlu0 %v1226, 59
      %v1235 = vpop.permute.xlu0 %1234
      %1236 = vrot.lane.b32.xlu0 %v1231, 59
      %v1237 = vpop.permute.xlu0 %1236
      %vm1238 = vcmask 482304
      %v1239 = vsel %vm1238, %v1233, %v1235
      %v1240 = vsel %vm1238, %v1235, %v1237
      %1243 = vst [vmem:[#allocation2 + $0x100] sm:$0xf0] %v1239
      %1244 = vst [vmem:[#allocation2 + $0x108] sm:$0xf0] %v1240
      %1245 = vrot.lane.b32.xlu0 %v531, 70
      %v1246 = vpop.permute.xlu0 %1245
      %v1247 = vrot.slane %v1246, 4
      %vm1248 = vcmask 572416
      %v1249 = vsel %vm1248, %v1247, %v1246
      %v1252 = vmul.f32 %v254, %v1249
      %v1253 = vmul.f32 %v255, %v1247
      %v1256 = vcombine.high %v1252, %v1252
      %1257 = vrot.lane.b32.xlu0 %v1252, 58
      %v1258 = vpop.permute.xlu0 %1257
      %1259 = vrot.lane.b32.xlu0 %v1256, 58
      %v1260 = vpop.permute.xlu0 %1259
      %1261 = vrot.lane.b32.xlu0 %v1253, 58
      %v1262 = vpop.permute.xlu0 %1261
      %vm1263 = vcmask 474112
      %v1264 = vsel %vm1263, %v1258, %v1260
      %v1265 = vsel %vm1263, %v1260, %v1262
      %1268 = vst [vmem:[#allocation2 + $0x110] sm:$0xf] %v1264
      %1269 = vst [vmem:[#allocation2 + $0x118] sm:$0xf] %v1265
      %1270 = vrot.lane.b32.xlu0 %v330, 80
      %v1271 = vpop.permute.xlu0 %1270
      %v1272 = vrot.slane %v1271, 4
      %v1273 = vsel %vm933, %v1272, %v1271
      %v1276 = vmul.f32 %v254, %v1273
      %v1277 = vmul.f32 %v255, %v1272
      %v1280 = vcombine.low %v1276, %v1276
      %v1281 = vcombine.low %v1277, %v1277
      %1282 = vrot.lane.b32.xlu0 %v1280, 48
      %v1283 = vpop.permute.xlu0 %1282
      %1284 = vrot.lane.b32.xlu0 %v1276, 48
      %v1285 = vpop.permute.xlu0 %1284
      %1286 = vrot.lane.b32.xlu0 %v1281, 48
      %v1287 = vpop.permute.xlu0 %1286
      %v1288 = vsel %vm917, %v1283, %v1285
      %v1289 = vsel %vm917, %v1285, %v1287
      %1292 = vst [vmem:[#allocation2 + $0x110] sm:$0xf0] %v1288
      %1293 = vst [vmem:[#allocation2 + $0x118] sm:$0xf0] %v1289
      %1294 = vrot.lane.b32.xlu0 %v348, 81
      %v1295 = vpop.permute.xlu0 %1294
      %v1296 = vrot.slane %v1295, 4
      %vm1297 = vcmask 662528
      %v1298 = vsel %vm1297, %v1296, %v1295
      %v1301 = vmul.f32 %v254, %v1298
      %v1302 = vmul.f32 %v255, %v1296
      %v1305 = vcombine.high %v1301, %v1301
      %1306 = vrot.lane.b32.xlu0 %v1301, 47
      %v1307 = vpop.permute.xlu0 %1306
      %1308 = vrot.lane.b32.xlu0 %v1305, 47
      %v1309 = vpop.permute.xlu0 %1308
      %1310 = vrot.lane.b32.xlu0 %v1302, 47
      %v1311 = vpop.permute.xlu0 %1310
      %vm1312 = vcmask 384000
      %v1313 = vsel %vm1312, %v1307, %v1309
      %v1314 = vsel %vm1312, %v1309, %v1311
      %1317 = vst [vmem:[#allocation2 + $0x120] sm:$0xf] %v1313
      %1318 = vst [vmem:[#allocation2 + $0x128] sm:$0xf] %v1314
      %1319 = vrot.lane.b32.xlu0 %v385, 82
      %v1320 = vpop.permute.xlu0 %1319
      %v1321 = vrot.slane %v1320, 4
      %vm1322 = vcmask 670720
      %v1323 = vsel %vm1322, %v1321, %v1320
      %v1326 = vmul.f32 %v254, %v1323
      %v1327 = vmul.f32 %v255, %v1321
      %v1330 = vcombine.low %v1326, %v1326
      %v1331 = vcombine.low %v1327, %v1327
      %1332 = vrot.lane.b32.xlu0 %v1330, 46
      %v1333 = vpop.permute.xlu0 %1332
      %1334 = vrot.lane.b32.xlu0 %v1326, 46
      %v1335 = vpop.permute.xlu0 %1334
      %1336 = vrot.lane.b32.xlu0 %v1331, 46
      %v1337 = vpop.permute.xlu0 %1336
      %vm1338 = vcmask 375808
      %v1339 = vsel %vm1338, %v1333, %v1335
      %v1340 = vsel %vm1338, %v1335, %v1337
      %1343 = vst [vmem:[#allocation2 + $0x120] sm:$0xf0] %v1339
      %1344 = vst [vmem:[#allocation2 + $0x128] sm:$0xf0] %v1340
      %1345 = vrot.lane.b32.xlu0 %v421, 83
      %v1346 = vpop.permute.xlu0 %1345
      %v1347 = vrot.slane %v1346, 4
      %vm1348 = vcmask 678912
      %v1349 = vsel %vm1348, %v1347, %v1346
      %v1352 = vmul.f32 %v254, %v1349
      %v1353 = vmul.f32 %v255, %v1347
      %v1356 = vcombine.high %v1352, %v1352
      %1357 = vrot.lane.b32.xlu0 %v1352, 45
      %v1358 = vpop.permute.xlu0 %1357
      %1359 = vrot.lane.b32.xlu0 %v1356, 45
      %v1360 = vpop.permute.xlu0 %1359
      %1361 = vrot.lane.b32.xlu0 %v1353, 45
      %v1362 = vpop.permute.xlu0 %1361
      %vm1363 = vcmask 367616
      %v1364 = vsel %vm1363, %v1358, %v1360
      %v1365 = vsel %vm1363, %v1360, %v1362
      %1368 = vst [vmem:[#allocation2 + $0x130] sm:$0xf] %v1364
      %1369 = vst [vmem:[#allocation2 + $0x138] sm:$0xf] %v1365
      %1370 = vrot.lane.b32.xlu0 %v458, 84
      %v1371 = vpop.permute.xlu0 %1370
      %v1372 = vrot.slane %v1371, 4
      %vm1373 = vcmask 687104
      %v1374 = vsel %vm1373, %v1372, %v1371
      %v1377 = vmul.f32 %v254, %v1374
      %v1378 = vmul.f32 %v255, %v1372
      %v1381 = vcombine.low %v1377, %v1377
      %v1382 = vcombine.low %v1378, %v1378
      %1383 = vrot.lane.b32.xlu0 %v1381, 44
      %v1384 = vpop.permute.xlu0 %1383
      %1385 = vrot.lane.b32.xlu0 %v1377, 44
      %v1386 = vpop.permute.xlu0 %1385
      %1387 = vrot.lane.b32.xlu0 %v1382, 44
      %v1388 = vpop.permute.xlu0 %1387
      %vm1389 = vcmask 359424
      %v1390 = vsel %vm1389, %v1384, %v1386
      %v1391 = vsel %vm1389, %v1386, %v1388
      %1394 = vst [vmem:[#allocation2 + $0x130] sm:$0xf0] %v1390
      %1395 = vst [vmem:[#allocation2 + $0x138] sm:$0xf0] %v1391
      %1396 = vrot.lane.b32.xlu0 %v494, 85
      %v1397 = vpop.permute.xlu0 %1396
      %v1398 = vrot.slane %v1397, 4
      %vm1399 = vcmask 695296
      %v1400 = vsel %vm1399, %v1398, %v1397
      %v1403 = vmul.f32 %v254, %v1400
      %v1404 = vmul.f32 %v255, %v1398
      %v1407 = vcombine.high %v1403, %v1403
      %1408 = vrot.lane.b32.xlu0 %v1403, 43
      %v1409 = vpop.permute.xlu0 %1408
      %1410 = vrot.lane.b32.xlu0 %v1407, 43
      %v1411 = vpop.permute.xlu0 %1410
      %1412 = vrot.lane.b32.xlu0 %v1404, 43
      %v1413 = vpop.permute.xlu0 %1412
      %vm1414 = vcmask 351232
      %v1415 = vsel %vm1414, %v1409, %v1411
      %v1416 = vsel %vm1414, %v1411, %v1413
      %1419 = vst [vmem:[#allocation2 + $0x140] sm:$0xf] %v1415
      %1420 = vst [vmem:[#allocation2 + $0x148] sm:$0xf] %v1416
      %1421 = vrot.lane.b32.xlu0 %v531, 86
      %v1422 = vpop.permute.xlu0 %1421
      %v1423 = vrot.slane %v1422, 4
      %vm1424 = vcmask 703488
      %v1425 = vsel %vm1424, %v1423, %v1422
      %v1428 = vmul.f32 %v254, %v1425
      %v1429 = vmul.f32 %v255, %v1423
      %v1432 = vcombine.low %v1428, %v1428
      %v1433 = vcombine.low %v1429, %v1429
      %1434 = vrot.lane.b32.xlu0 %v1432, 42
      %v1435 = vpop.permute.xlu0 %1434
      %1436 = vrot.lane.b32.xlu0 %v1428, 42
      %v1437 = vpop.permute.xlu0 %1436
      %1438 = vrot.lane.b32.xlu0 %v1433, 42
      %v1439 = vpop.permute.xlu0 %1438
      %vm1440 = vcmask 343040
      %v1441 = vsel %vm1440, %v1435, %v1437
      %v1442 = vsel %vm1440, %v1437, %v1439
      %1445 = vst [vmem:[#allocation2 + $0x140] sm:$0xf0] %v1441
      %1446 = vst [vmem:[#allocation2 + $0x148] sm:$0xf0] %v1442
      %1447 = vrot.lane.b32.xlu0 %v330, 96
      %v1448 = vpop.permute.xlu0 %1447
      %v1449 = vrot.slane %v1448, 4
      %v1450 = vsel %vm754, %v1449, %v1448
      %v1453 = vmul.f32 %v254, %v1450
      %v1454 = vmul.f32 %v255, %v1449
      %v1457 = vcombine.high %v1453, %v1453
      %1458 = vrot.lane.b32.xlu0 %v1453, 32
      %v1459 = vpop.permute.xlu0 %1458
      %1460 = vrot.lane.b32.xlu0 %v1457, 32
      %v1461 = vpop.permute.xlu0 %1460
      %1462 = vrot.lane.b32.xlu0 %v1454, 32
      %v1463 = vpop.permute.xlu0 %1462
      %v1464 = vsel %vm739, %v1459, %v1461
      %v1465 = vsel %vm739, %v1461, %v1463
      %1468 = vst [vmem:[#allocation2 + $0x150] sm:$0xf] %v1464
      %1469 = vst [vmem:[#allocation2 + $0x158] sm:$0xf] %v1465
      %1470 = vrot.lane.b32.xlu0 %v348, 97
      %v1471 = vpop.permute.xlu0 %1470
      %v1472 = vrot.slane %v1471, 4
      %vm1473 = vcmask 793600
      %v1474 = vsel %vm1473, %v1472, %v1471
      %v1477 = vmul.f32 %v254, %v1474
      %v1478 = vmul.f32 %v255, %v1472
      %v1481 = vcombine.low %v1477, %v1477
      %v1482 = vcombine.low %v1478, %v1478
      %1483 = vrot.lane.b32.xlu0 %v1481, 31
      %v1484 = vpop.permute.xlu0 %1483
      %1485 = vrot.lane.b32.xlu0 %v1477, 31
      %v1486 = vpop.permute.xlu0 %1485
      %1487 = vrot.lane.b32.xlu0 %v1482, 31
      %v1488 = vpop.permute.xlu0 %1487
      %vm1489 = vcmask 252928
      %v1490 = vsel %vm1489, %v1484, %v1486
      %v1491 = vsel %vm1489, %v1486, %v1488
      %1494 = vst [vmem:[#allocation2 + $0x150] sm:$0xf0] %v1490
      %1495 = vst [vmem:[#allocation2 + $0x158] sm:$0xf0] %v1491
      %1496 = vrot.lane.b32.xlu0 %v385, 98
      %v1497 = vpop.permute.xlu0 %1496
      %v1498 = vrot.slane %v1497, 4
      %vm1499 = vcmask 801792
      %v1500 = vsel %vm1499, %v1498, %v1497
      %v1503 = vmul.f32 %v254, %v1500
      %v1504 = vmul.f32 %v255, %v1498
      %v1507 = vcombine.high %v1503, %v1503
      %1508 = vrot.lane.b32.xlu0 %v1503, 30
      %v1509 = vpop.permute.xlu0 %1508
      %1510 = vrot.lane.b32.xlu0 %v1507, 30
      %v1511 = vpop.permute.xlu0 %1510
      %1512 = vrot.lane.b32.xlu0 %v1504, 30
      %v1513 = vpop.permute.xlu0 %1512
      %vm1514 = vcmask 244736
      %v1515 = vsel %vm1514, %v1509, %v1511
      %v1516 = vsel %vm1514, %v1511, %v1513
      %1519 = vst [vmem:[#allocation2 + $0x160] sm:$0xf] %v1515
      %1520 = vst [vmem:[#allocation2 + $0x168] sm:$0xf] %v1516
      %1521 = vrot.lane.b32.xlu0 %v421, 99
      %v1522 = vpop.permute.xlu0 %1521
      %v1523 = vrot.slane %v1522, 4
      %vm1524 = vcmask 809984
      %v1525 = vsel %vm1524, %v1523, %v1522
      %v1528 = vmul.f32 %v254, %v1525
      %v1529 = vmul.f32 %v255, %v1523
      %v1532 = vcombine.low %v1528, %v1528
      %v1533 = vcombine.low %v1529, %v1529
      %1534 = vrot.lane.b32.xlu0 %v1532, 29
      %v1535 = vpop.permute.xlu0 %1534
      %1536 = vrot.lane.b32.xlu0 %v1528, 29
      %v1537 = vpop.permute.xlu0 %1536
      %1538 = vrot.lane.b32.xlu0 %v1533, 29
      %v1539 = vpop.permute.xlu0 %1538
      %vm1540 = vcmask 236544
      %v1541 = vsel %vm1540, %v1535, %v1537
      %v1542 = vsel %vm1540, %v1537, %v1539
      %1545 = vst [vmem:[#allocation2 + $0x160] sm:$0xf0] %v1541
      %1546 = vst [vmem:[#allocation2 + $0x168] sm:$0xf0] %v1542
      %1547 = vrot.lane.b32.xlu0 %v458, 100
      %v1548 = vpop.permute.xlu0 %1547
      %v1549 = vrot.slane %v1548, 4
      %vm1550 = vcmask 818176
      %v1551 = vsel %vm1550, %v1549, %v1548
      %v1554 = vmul.f32 %v254, %v1551
      %v1555 = vmul.f32 %v255, %v1549
      %v1558 = vcombine.high %v1554, %v1554
      %1559 = vrot.lane.b32.xlu0 %v1554, 28
      %v1560 = vpop.permute.xlu0 %1559
      %1561 = vrot.lane.b32.xlu0 %v1558, 28
      %v1562 = vpop.permute.xlu0 %1561
      %1563 = vrot.lane.b32.xlu0 %v1555, 28
      %v1564 = vpop.permute.xlu0 %1563
      %vm1565 = vcmask 228352
      %v1566 = vsel %vm1565, %v1560, %v1562
      %v1567 = vsel %vm1565, %v1562, %v1564
      %1570 = vst [vmem:[#allocation2 + $0x170] sm:$0xf] %v1566
      %1571 = vst [vmem:[#allocation2 + $0x178] sm:$0xf] %v1567
      %1572 = vrot.lane.b32.xlu0 %v494, 101
      %v1573 = vpop.permute.xlu0 %1572
      %v1574 = vrot.slane %v1573, 4
      %vm1575 = vcmask 826368
      %v1576 = vsel %vm1575, %v1574, %v1573
      %v1579 = vmul.f32 %v254, %v1576
      %v1580 = vmul.f32 %v255, %v1574
      %v1583 = vcombine.low %v1579, %v1579
      %v1584 = vcombine.low %v1580, %v1580
      %1585 = vrot.lane.b32.xlu0 %v1583, 27
      %v1586 = vpop.permute.xlu0 %1585
      %1587 = vrot.lane.b32.xlu0 %v1579, 27
      %v1588 = vpop.permute.xlu0 %1587
      %1589 = vrot.lane.b32.xlu0 %v1584, 27
      %v1590 = vpop.permute.xlu0 %1589
      %vm1591 = vcmask 220160
      %v1592 = vsel %vm1591, %v1586, %v1588
      %v1593 = vsel %vm1591, %v1588, %v1590
      %1596 = vst [vmem:[#allocation2 + $0x170] sm:$0xf0] %v1592
      %1597 = vst [vmem:[#allocation2 + $0x178] sm:$0xf0] %v1593
      %1598 = vrot.lane.b32.xlu0 %v531, 102
      %v1599 = vpop.permute.xlu0 %1598
      %v1600 = vrot.slane %v1599, 4
      %vm1601 = vcmask 834560
      %v1602 = vsel %vm1601, %v1600, %v1599
      %v1605 = vmul.f32 %v254, %v1602
      %v1606 = vmul.f32 %v255, %v1600
      %v1609 = vcombine.high %v1605, %v1605
      %1610 = vrot.lane.b32.xlu0 %v1605, 26
      %v1611 = vpop.permute.xlu0 %1610
      %1612 = vrot.lane.b32.xlu0 %v1609, 26
      %v1613 = vpop.permute.xlu0 %1612
      %1614 = vrot.lane.b32.xlu0 %v1606, 26
      %v1615 = vpop.permute.xlu0 %1614
      %vm1616 = vcmask 211968
      %v1617 = vsel %vm1616, %v1611, %v1613
      %v1618 = vsel %vm1616, %v1613, %v1615
      %1621 = vst [vmem:[#allocation2 + $0x180] sm:$0xf] %v1617
      %1622 = vst [vmem:[#allocation2 + $0x188] sm:$0xf] %v1618
      %v1623 = vld [vmem:[%s1] sm:$0xff]
      %v1624 = vld [vmem:[%s1 + $0x8] sm:$0xff]
      %v1625 = vld [vmem:[#allocation2] sm:$0xff]
      %v1626 = vld [vmem:[#allocation2 + $0x8] sm:$0xff]
      %v1627 = vld [vmem:[#allocation2 + $0x10] sm:$0xff]
      %v1628 = vld [vmem:[#allocation2 + $0x18] sm:$0xff]
      %v1629 = vld [vmem:[#allocation2 + $0x20] sm:$0xff]
      %v1630 = vld [vmem:[#allocation2 + $0x28] sm:$0xff]
      %v1631 = vld [vmem:[#allocation2 + $0x30] sm:$0xff]
      %v1632 = vld [vmem:[#allocation2 + $0x38] sm:$0xff]
      %v1633 = vld [vmem:[#allocation2 + $0x40] sm:$0xff]
      %v1634 = vld [vmem:[#allocation2 + $0x48] sm:$0xff]
      %v1635 = vld [vmem:[#allocation2 + $0x50] sm:$0xff]
      %v1636 = vld [vmem:[#allocation2 + $0x58] sm:$0xff]
      %v1637 = vld [vmem:[#allocation2 + $0x60] sm:$0xff]
      %v1638 = vld [vmem:[#allocation2 + $0x68] sm:$0xff]
      %v1639 = vld [vmem:[#allocation2 + $0x70] sm:$0xff]
      %v1640 = vld [vmem:[#allocation2 + $0x78] sm:$0xff]
      %v1641 = vld [vmem:[#allocation2 + $0x80] sm:$0xff]
      %v1642 = vld [vmem:[#allocation2 + $0x88] sm:$0xff]
      %v1643 = vld [vmem:[#allocation2 + $0x90] sm:$0xff]
      %v1644 = vld [vmem:[#allocation2 + $0x98] sm:$0xff]
      %v1645 = vld [vmem:[#allocation2 + $0xa0] sm:$0xff]
      %v1646 = vld [vmem:[#allocation2 + $0xa8] sm:$0xff]
      %v1647 = vld [vmem:[#allocation2 + $0xb0] sm:$0xff]
      %v1648 = vld [vmem:[#allocation2 + $0xb8] sm:$0xff]
      %v1649 = vld [vmem:[#allocation2 + $0xc0] sm:$0xff]
      %v1650 = vld [vmem:[#allocation2 + $0xc8] sm:$0xff]
      %v1651 = vld [vmem:[#allocation2 + $0xd0] sm:$0xff]
      %v1652 = vld [vmem:[#allocation2 + $0xd8] sm:$0xff]
      %v1653 = vld [vmem:[#allocation2 + $0xe0] sm:$0xff]
      %v1654 = vld [vmem:[#allocation2 + $0xe8] sm:$0xff]
      %v1655 = vld [vmem:[#allocation2 + $0xf0] sm:$0xff]
      %v1656 = vld [vmem:[#allocation2 + $0xf8] sm:$0xff]
      %v1657 = vld [vmem:[#allocation2 + $0x100] sm:$0xff]
      %v1658 = vld [vmem:[#allocation2 + $0x108] sm:$0xff]
      %v1659 = vld [vmem:[#allocation2 + $0x110] sm:$0xff]
      %v1660 = vld [vmem:[#allocation2 + $0x118] sm:$0xff]
      %v1661 = vld [vmem:[#allocation2 + $0x120] sm:$0xff]
      %v1662 = vld [vmem:[#allocation2 + $0x128] sm:$0xff]
      %v1663 = vld [vmem:[#allocation2 + $0x130] sm:$0xff]
      %v1664 = vld [vmem:[#allocation2 + $0x138] sm:$0xff]
      %v1665 = vld [vmem:[#allocation2 + $0x140] sm:$0xff]
      %v1666 = vld [vmem:[#allocation2 + $0x148] sm:$0xff]
      %v1667 = vld [vmem:[#allocation2 + $0x150] sm:$0xff]
      %v1668 = vld [vmem:[#allocation2 + $0x158] sm:$0xff]
      %v1669 = vld [vmem:[#allocation2 + $0x160] sm:$0xff]
      %v1670 = vld [vmem:[#allocation2 + $0x168] sm:$0xff]
      %v1671 = vld [vmem:[#allocation2 + $0x170] sm:$0xff]
      %v1672 = vld [vmem:[#allocation2 + $0x178] sm:$0xff]
      %v1673 = vld [vmem:[#allocation2 + $0x180] sm:$0xff]
      %v1674 = vld [vmem:[#allocation2 + $0x188] sm:$0xff]
      %v1675 = vld [vmem:[#allocation2 + $0x190] sm:$0xff]
      %v1676 = vld [vmem:[#allocation2 + $0x198] sm:$0xff]
      %v1677 = vld [vmem:[#allocation2 + $0x1a0] sm:$0xff]
      %v1678 = vld [vmem:[#allocation2 + $0x1a8] sm:$0xff]
      %v1679 = vld [vmem:[#allocation2 + $0x1b0] sm:$0xff]
      %v1680 = vld [vmem:[#allocation2 + $0x1b8] sm:$0xff]
      %v1681 = vld [vmem:[#allocation2 + $0x1c0] sm:$0xff]
      %v1682 = vld [vmem:[#allocation2 + $0x1c8] sm:$0xff]
      %v1683 = vld [vmem:[#allocation2 + $0x1d0] sm:$0xff]
      %v1684 = vld [vmem:[#allocation2 + $0x1d8] sm:$0xff]
      %v1685 = vld [vmem:[#allocation2 + $0x1e0] sm:$0xff]
      %v1686 = vld [vmem:[#allocation2 + $0x1e8] sm:$0xff]
      %v1687 = vld [vmem:[#allocation2 + $0x1f0] sm:$0xff]
      %v1688 = vld [vmem:[#allocation2 + $0x1f8] sm:$0xff]
      %v1689 = vld [vmem:[%s2] sm:$0xff]
      %1691 = vset.pattern.permute.xlu0 0
      %1692 = vperm.xlu0 %1691, %v1689
      %v1693 = vpop.permute.xlu0 %1692
      %1695 = vmatprep.subr.mxu0 %v1626
      %1696 = vmatpush1.msra.mxu0 %v1625
      %1697 = vmatprep.subr.mxu0 %v1628
      %1698 = vmatpush1.msra.mxu0 %v1627
      %1699 = vmatprep.subr.mxu0 %v1630
      %1700 = vmatpush1.msra.mxu0 %v1629
      %1701 = vmatprep.subr.mxu0 %v1632
      %1702 = vmatpush1.msra.mxu0 %v1631
      %1703 = vmatprep.subr.mxu0 %v1634
      %1704 = vmatpush1.msra.mxu0 %v1633
      %1705 = vmatprep.subr.mxu0 %v1636
      %1706 = vmatpush1.msra.mxu0 %v1635
      %1707 = vmatprep.subr.mxu0 %v1638
      %1708 = vmatpush1.msra.mxu0 %v1637
      %1709 = vmatprep.subr.mxu0 %v1640
      %1710 = vmatpush1.msra.mxu0 %v1639
      %1711 = vmatprep.subr.mxu0 %v1642
      %1712 = vmatpush1.msra.mxu0 %v1641
      %1713 = vmatprep.subr.mxu0 %v1644
      %1714 = vmatpush1.msra.mxu0 %v1643
      %1715 = vmatprep.subr.mxu0 %v1646
      %1716 = vmatpush1.msra.mxu0 %v1645
      %1717 = vmatprep.subr.mxu0 %v1648
      %1718 = vmatpush1.msra.mxu0 %v1647
      %1719 = vmatprep.subr.mxu0 %v1650
      %1720 = vmatpush1.msra.mxu0 %v1649
      %1721 = vmatprep.subr.mxu0 %v1652
      %1722 = vmatpush1.msra.mxu0 %v1651
      %1723 = vmatprep.subr.mxu0 %v1654
      %1724 = vmatpush1.msra.mxu0 %v1653
      %1725 = vmatprep.subr.mxu0 %v1656
      %1726 = vmatpush1.msra.mxu0 %v1655
      %1727 = vmatprep.subr.mxu0 %v1658
      %1728 = vmatpush1.msra.mxu0 %v1657
      %1729 = vmatprep.subr.mxu0 %v1660
      %1730 = vmatpush1.msra.mxu0 %v1659
      %1731 = vmatprep.subr.mxu0 %v1662
      %1732 = vmatpush1.msra.mxu0 %v1661
      %1733 = vmatprep.subr.mxu0 %v1664
      %1734 = vmatpush1.msra.mxu0 %v1663
      %1735 = vmatprep.subr.mxu0 %v1666
      %1736 = vmatpush1.msra.mxu0 %v1665
      %1737 = vmatprep.subr.mxu0 %v1668
      %1738 = vmatpush1.msra.mxu0 %v1667
      %1739 = vmatprep.subr.mxu0 %v1670
      %1740 = vmatpush1.msra.mxu0 %v1669
      %1741 = vmatprep.subr.mxu0 %v1672
      %1742 = vmatpush1.msra.mxu0 %v1671
      %1743 = vmatprep.subr.mxu0 %v1674
      %1744 = vmatpush1.msra.mxu0 %v1673
      %1745 = vmatprep.subr.mxu0 %v1676
      %1746 = vmatpush1.msra.mxu0 %v1675
      %1747 = vmatprep.subr.mxu0 %v1678
      %1748 = vmatpush1.msra.mxu0 %v1677
      %1749 = vmatprep.subr.mxu0 %v1680
      %1750 = vmatpush1.msra.mxu0 %v1679
      %1751 = vmatprep.subr.mxu0 %v1682
      %1752 = vmatpush1.msra.mxu0 %v1681
      %1753 = vmatprep.subr.mxu0 %v1684
      %1754 = vmatpush1.msra.mxu0 %v1683
      %1755 = vmatprep.subr.mxu0 %v1686
      %1756 = vmatpush1.msra.mxu0 %v1685
      %1757 = vmatprep.subr.mxu0 %v1688
      %1758 = vmatpush1.msra.mxu0 %v1687
      %1759 = vmatprep.mubr.f32.mxu0 %v1624
      %1760 = vmatmul.mubr.f32.gmra.mrb[0].mxu0 %v1623
      %v1761 = vpop.f32.mrb[0].mxu0
      %v1762 = vadd.f32 %v1693, %v1761
      %v1763 = vpop.f32.mrb[0].mxu0
      %v1764 = vadd.f32 %v1693, %v1763
      %1765 = vdwg.mxu0
      %v1766 = vmax.f32 %v1762, 0.0
      %v1767 = vmax.f32 %v1764, 0.0
      %1768 = vst [vmem:[#allocation3] sm:$0xff] 0.0
      %1769 = vst [vmem:[#allocation3 + $0x8] sm:$0xff] 0.0
      %1770 = vst [vmem:[#allocation3 + $0x10] sm:$0xff] 0.0
      %1771 = vst [vmem:[#allocation3 + $0x18] sm:$0xff] 0.0
      %1772 = vst [vmem:[#allocation3 + $0x8] sm:$0xff] %v1766
      %1773 = vst [vmem:[#allocation3 + $0x10] sm:$0xff] %v1767
      %v1774 = vld [vmem:[#allocation3] sm:$0xff]
      %v1775 = vld [vmem:[#allocation3 + $0x8] sm:$0xff]
      %v1776 = vld [vmem:[#allocation3 + $0x10] sm:$0xff]
      %v1777 = vld [vmem:[#allocation3 + $0x18] sm:$0xff]
      %1778 = vst [vmem:[#allocation4] sm:$0xff] 0.0
      %1779 = vst [vmem:[#allocation4 + $0x8] sm:$0xff] 0.0
      %1780 = vst [vmem:[#allocation4 + $0x10] sm:$0xff] 0.0
      %1781 = vst [vmem:[#allocation4 + $0x18] sm:$0xff] 0.0
      %1782 = vst [vmem:[#allocation4 + $0x20] sm:$0xff] 0.0
      %1783 = vst [vmem:[#allocation4 + $0x28] sm:$0xff] 0.0
      %1784 = vst [vmem:[#allocation4 + $0x30] sm:$0xff] 0.0
      %1785 = vst [vmem:[#allocation4 + $0x38] sm:$0xff] 0.0
      %1786 = vst [vmem:[#allocation4 + $0x40] sm:$0xff] 0.0
      %1787 = vst [vmem:[#allocation4 + $0x48] sm:$0xff] 0.0
      %1788 = vst [vmem:[#allocation4 + $0x50] sm:$0xff] 0.0
      %1789 = vst [vmem:[#allocation4 + $0x58] sm:$0xff] 0.0
      %1790 = vst [vmem:[#allocation4 + $0x60] sm:$0xff] 0.0
      %1791 = vst [vmem:[#allocation4 + $0x68] sm:$0xff] 0.0
      %1792 = vst [vmem:[#allocation4 + $0x70] sm:$0xff] 0.0
      %1793 = vst [vmem:[#allocation4 + $0x78] sm:$0xff] 0.0
      %1794 = vst [vmem:[#allocation4 + $0x80] sm:$0xff] 0.0
      %1795 = vst [vmem:[#allocation4 + $0x88] sm:$0xff] 0.0
      %1796 = vst [vmem:[#allocation4 + $0x90] sm:$0xff] 0.0
      %1797 = vst [vmem:[#allocation4 + $0x98] sm:$0xff] 0.0
      %1798 = vst [vmem:[#allocation4 + $0xa0] sm:$0xff] 0.0
      %1799 = vst [vmem:[#allocation4 + $0xa8] sm:$0xff] 0.0
      %1800 = vst [vmem:[#allocation4 + $0xb0] sm:$0xff] 0.0
      %1801 = vst [vmem:[#allocation4 + $0xb8] sm:$0xff] 0.0
      %1802 = vst [vmem:[#allocation4 + $0xc0] sm:$0xff] 0.0
      %1803 = vst [vmem:[#allocation4 + $0xc8] sm:$0xff] 0.0
      %1804 = vst [vmem:[#allocation4 + $0xd0] sm:$0xff] 0.0
      %1805 = vst [vmem:[#allocation4 + $0xd8] sm:$0xff] 0.0
      %1806 = vst [vmem:[#allocation4 + $0xe0] sm:$0xff] 0.0
      %1807 = vst [vmem:[#allocation4 + $0xe8] sm:$0xff] 0.0
      %1808 = vst [vmem:[#allocation4 + $0xf0] sm:$0xff] 0.0
      %1809 = vst [vmem:[#allocation4 + $0xf8] sm:$0xff] 0.0
      %1810 = vst [vmem:[#allocation4 + $0x100] sm:$0xff] 0.0
      %1811 = vst [vmem:[#allocation4 + $0x108] sm:$0xff] 0.0
      %1812 = vst [vmem:[#allocation4 + $0x110] sm:$0xff] 0.0
      %1813 = vst [vmem:[#allocation4 + $0x118] sm:$0xff] 0.0
      %1814 = vst [vmem:[#allocation4 + $0x120] sm:$0xff] 0.0
      %1815 = vst [vmem:[#allocation4 + $0x128] sm:$0xff] 0.0
      %1816 = vst [vmem:[#allocation4 + $0x130] sm:$0xff] 0.0
      %1817 = vst [vmem:[#allocation4 + $0x138] sm:$0xff] 0.0
      %1818 = vst [vmem:[#allocation4 + $0x140] sm:$0xff] 0.0
      %1819 = vst [vmem:[#allocation4 + $0x148] sm:$0xff] 0.0
      %1820 = vst [vmem:[#allocation4 + $0x150] sm:$0xff] 0.0
      %1821 = vst [vmem:[#allocation4 + $0x158] sm:$0xff] 0.0
      %1822 = vst [vmem:[#allocation4 + $0x160] sm:$0xff] 0.0
      %1823 = vst [vmem:[#allocation4 + $0x168] sm:$0xff] 0.0
      %1824 = vst [vmem:[#allocation4 + $0x170] sm:$0xff] 0.0
      %1825 = vst [vmem:[#allocation4 + $0x178] sm:$0xff] 0.0
      %1826 = vst [vmem:[#allocation4 + $0x180] sm:$0xff] 0.0
      %1827 = vst [vmem:[#allocation4 + $0x188] sm:$0xff] 0.0
      %1828 = vst [vmem:[#allocation4 + $0x190] sm:$0xff] 0.0
      %1829 = vst [vmem:[#allocation4 + $0x198] sm:$0xff] 0.0
      %1830 = vst [vmem:[#allocation4 + $0x1a0] sm:$0xff] 0.0
      %1831 = vst [vmem:[#allocation4 + $0x1a8] sm:$0xff] 0.0
      %1832 = vst [vmem:[#allocation4 + $0x1b0] sm:$0xff] 0.0
      %1833 = vst [vmem:[#allocation4 + $0x1b8] sm:$0xff] 0.0
      %1834 = vst [vmem:[#allocation4 + $0x1c0] sm:$0xff] 0.0
      %1835 = vst [vmem:[#allocation4 + $0x1c8] sm:$0xff] 0.0
      %1836 = vst [vmem:[#allocation4 + $0x1d0] sm:$0xff] 0.0
      %1837 = vst [vmem:[#allocation4 + $0x1d8] sm:$0xff] 0.0
      %1838 = vst [vmem:[#allocation4 + $0x1e0] sm:$0xff] 0.0
      %1839 = vst [vmem:[#allocation4 + $0x1e8] sm:$0xff] 0.0
      %1840 = vst [vmem:[#allocation4 + $0x1f0] sm:$0xff] 0.0
      %1841 = vst [vmem:[#allocation4 + $0x1f8] sm:$0xff] 0.0
      %1842 = vst [vmem:[#allocation4 + $0x200] sm:$0xff] 0.0
      %1843 = vst [vmem:[#allocation4 + $0x208] sm:$0xff] 0.0
      %1844 = vst [vmem:[#allocation4 + $0x210] sm:$0xff] 0.0
      %1845 = vst [vmem:[#allocation4 + $0x218] sm:$0xff] 0.0
      %1846 = vst [vmem:[#allocation4 + $0x220] sm:$0xff] 0.0
      %1847 = vst [vmem:[#allocation4 + $0x228] sm:$0xff] 0.0
      %1848 = vst [vmem:[#allocation4 + $0x230] sm:$0xff] 0.0
      %1849 = vst [vmem:[#allocation4 + $0x238] sm:$0xff] 0.0
      %1850 = vst [vmem:[#allocation4 + $0x240] sm:$0xff] 0.0
      %1851 = vst [vmem:[#allocation4 + $0x248] sm:$0xff] 0.0
      %1852 = vst [vmem:[#allocation4 + $0x250] sm:$0xff] 0.0
      %1853 = vst [vmem:[#allocation4 + $0x258] sm:$0xff] 0.0
      %1854 = vst [vmem:[#allocation4 + $0x260] sm:$0xff] 0.0
      %1855 = vst [vmem:[#allocation4 + $0x268] sm:$0xff] 0.0
      %1856 = vst [vmem:[#allocation4 + $0x270] sm:$0xff] 0.0
      %1857 = vst [vmem:[#allocation4 + $0x278] sm:$0xff] 0.0
      %1858 = vst [vmem:[#allocation4 + $0x280] sm:$0xff] 0.0
      %1859 = vst [vmem:[#allocation4 + $0x288] sm:$0xff] 0.0
      %1860 = vst [vmem:[#allocation4 + $0x290] sm:$0xff] 0.0
      %1861 = vst [vmem:[#allocation4 + $0x298] sm:$0xff] 0.0
      %1862 = vst [vmem:[#allocation4 + $0x2a0] sm:$0xff] 0.0
      %1863 = vst [vmem:[#allocation4 + $0x2a8] sm:$0xff] 0.0
      %1864 = vst [vmem:[#allocation4 + $0x2b0] sm:$0xff] 0.0
      %1865 = vst [vmem:[#allocation4 + $0x2b8] sm:$0xff] 0.0
      %1866 = vst [vmem:[#allocation4 + $0x2c0] sm:$0xff] 0.0
      %1867 = vst [vmem:[#allocation4 + $0x2c8] sm:$0xff] 0.0
      %1868 = vst [vmem:[#allocation4 + $0x2d0] sm:$0xff] 0.0
      %1869 = vst [vmem:[#allocation4 + $0x2d8] sm:$0xff] 0.0
      %1870 = vst [vmem:[#allocation4 + $0x2e0] sm:$0xff] 0.0
      %1871 = vst [vmem:[#allocation4 + $0x2e8] sm:$0xff] 0.0
      %1872 = vst [vmem:[#allocation4 + $0x2f0] sm:$0xff] 0.0
      %1873 = vst [vmem:[#allocation4 + $0x2f8] sm:$0xff] 0.0
      %1874 = vst [vmem:[#allocation4 + $0x300] sm:$0xff] 0.0
      %1875 = vst [vmem:[#allocation4 + $0x308] sm:$0xff] 0.0
      %1876 = vst [vmem:[#allocation4 + $0x310] sm:$0xff] 0.0
      %1877 = vst [vmem:[#allocation4 + $0x318] sm:$0xff] 0.0
      %1878 = vst [vmem:[#allocation4 + $0x320] sm:$0xff] 0.0
      %1879 = vst [vmem:[#allocation4 + $0x328] sm:$0xff] 0.0
      %1880 = vst [vmem:[#allocation4 + $0x330] sm:$0xff] 0.0
      %1881 = vst [vmem:[#allocation4 + $0x338] sm:$0xff] 0.0
      %1882 = vst [vmem:[#allocation4 + $0x340] sm:$0xff] 0.0
      %1883 = vst [vmem:[#allocation4 + $0x348] sm:$0xff] 0.0
      %1884 = vst [vmem:[#allocation4 + $0x350] sm:$0xff] 0.0
      %1885 = vst [vmem:[#allocation4 + $0x358] sm:$0xff] 0.0
      %1886 = vst [vmem:[#allocation4 + $0x360] sm:$0xff] 0.0
      %1887 = vst [vmem:[#allocation4 + $0x368] sm:$0xff] 0.0
      %1888 = vst [vmem:[#allocation4 + $0x370] sm:$0xff] 0.0
      %1889 = vst [vmem:[#allocation4 + $0x378] sm:$0xff] 0.0
      %1890 = vst [vmem:[#allocation4 + $0x380] sm:$0xff] 0.0
      %1891 = vst [vmem:[#allocation4 + $0x388] sm:$0xff] 0.0
      %1892 = vst [vmem:[#allocation4 + $0x390] sm:$0xff] 0.0
      %1893 = vst [vmem:[#allocation4 + $0x398] sm:$0xff] 0.0
      %1894 = vst [vmem:[#allocation4 + $0x3a0] sm:$0xff] 0.0
      %1895 = vst [vmem:[#allocation4 + $0x3a8] sm:$0xff] 0.0
      %1896 = vst [vmem:[#allocation4 + $0x3b0] sm:$0xff] 0.0
      %1897 = vst [vmem:[#allocation4 + $0x3b8] sm:$0xff] 0.0
      %1898 = vst [vmem:[#allocation4 + $0x3c0] sm:$0xff] 0.0
      %1899 = vst [vmem:[#allocation4 + $0x3c8] sm:$0xff] 0.0
      %1900 = vst [vmem:[#allocation4 + $0x3d0] sm:$0xff] 0.0
      %1901 = vst [vmem:[#allocation4 + $0x3d8] sm:$0xff] 0.0
      %1902 = vst [vmem:[#allocation4 + $0x3e0] sm:$0xff] 0.0
      %1903 = vst [vmem:[#allocation4 + $0x3e8] sm:$0xff] 0.0
      %1904 = vst [vmem:[#allocation4 + $0x3f0] sm:$0xff] 0.0
      %1905 = vst [vmem:[#allocation4 + $0x3f8] sm:$0xff] 0.0
      %1906 = vrot.lane.b32.xlu0 %v323, 77
      %v1907 = vpop.permute.xlu0 %1906
      %1908 = vrot.lane.b32.xlu0 %v327, 77
      %v1909 = vpop.permute.xlu0 %1908
      %v1910 = vsel %vm1009, %v1907, %v1909
      %v1914 = vmul.f32 %v1774, %v1907
      %v1915 = vmul.f32 %v1775, %v1910
      %v1916 = vmul.f32 %v1776, %v1909
      %1920 = vrot.lane.b32.xlu0 %v1914, 51
      %v1921 = vpop.permute.xlu0 %1920
      %1922 = vrot.lane.b32.xlu0 %v1915, 51
      %v1923 = vpop.permute.xlu0 %1922
      %1924 = vrot.lane.b32.xlu0 %v1916, 51
      %v1925 = vpop.permute.xlu0 %1924
      %v1926 = vsel %vm994, %v1921, %v1923
      %v1927 = vsel %vm994, %v1923, %v1925
      %1930 = vst [vmem:[#allocation4] sm:$0xff] %v1926
      %1931 = vst [vmem:[#allocation4 + $0x8] sm:$0xff] %v1927
      %1932 = vrot.lane.b32.xlu0 %v341, 78
      %v1933 = vpop.permute.xlu0 %1932
      %1934 = vrot.lane.b32.xlu0 %v345, 78
      %v1935 = vpop.permute.xlu0 %1934
      %v1936 = vsel %vm984, %v1933, %v1935
      %v1940 = vmul.f32 %v1774, %v1933
      %v1941 = vmul.f32 %v1775, %v1936
      %v1942 = vmul.f32 %v1776, %v1935
      %1946 = vrot.lane.b32.xlu0 %v1940, 50
      %v1947 = vpop.permute.xlu0 %1946
      %1948 = vrot.lane.b32.xlu0 %v1941, 50
      %v1949 = vpop.permute.xlu0 %1948
      %1950 = vrot.lane.b32.xlu0 %v1942, 50
      %v1951 = vpop.permute.xlu0 %1950
      %v1952 = vsel %vm968, %v1947, %v1949
      %v1953 = vsel %vm968, %v1949, %v1951
      %1956 = vst [vmem:[#allocation4 + $0x10] sm:$0xff] %v1952
      %1957 = vst [vmem:[#allocation4 + $0x18] sm:$0xff] %v1953
      %1958 = vrot.lane.b32.xlu0 %v378, 79
      %v1959 = vpop.permute.xlu0 %1958
      %1960 = vrot.lane.b32.xlu0 %v382, 79
      %v1961 = vpop.permute.xlu0 %1960
      %v1962 = vsel %vm958, %v1959, %v1961
      %v1966 = vmul.f32 %v1774, %v1959
      %v1967 = vmul.f32 %v1775, %v1962
      %v1968 = vmul.f32 %v1776, %v1961
      %1972 = vrot.lane.b32.xlu0 %v1966, 49
      %v1973 = vpop.permute.xlu0 %1972
      %1974 = vrot.lane.b32.xlu0 %v1967, 49
      %v1975 = vpop.permute.xlu0 %1974
      %1976 = vrot.lane.b32.xlu0 %v1968, 49
      %v1977 = vpop.permute.xlu0 %1976
      %v1978 = vsel %vm943, %v1973, %v1975
      %v1979 = vsel %vm943, %v1975, %v1977
      %1982 = vst [vmem:[#allocation4 + $0x20] sm:$0xff] %v1978
      %1983 = vst [vmem:[#allocation4 + $0x28] sm:$0xff] %v1979
      %1984 = vrot.lane.b32.xlu0 %v414, 80
      %v1985 = vpop.permute.xlu0 %1984
      %1986 = vrot.lane.b32.xlu0 %v418, 80
      %v1987 = vpop.permute.xlu0 %1986
      %v1988 = vsel %vm933, %v1985, %v1987
      %v1992 = vmul.f32 %v1774, %v1985
      %v1993 = vmul.f32 %v1775, %v1988
      %v1994 = vmul.f32 %v1776, %v1987
      %1998 = vrot.lane.b32.xlu0 %v1992, 48
      %v1999 = vpop.permute.xlu0 %1998
      %2000 = vrot.lane.b32.xlu0 %v1993, 48
      %v2001 = vpop.permute.xlu0 %2000
      %2002 = vrot.lane.b32.xlu0 %v1994, 48
      %v2003 = vpop.permute.xlu0 %2002
      %v2004 = vsel %vm917, %v1999, %v2001
      %v2005 = vsel %vm917, %v2001, %v2003
      %2008 = vst [vmem:[#allocation4 + $0x30] sm:$0xff] %v2004
      %2009 = vst [vmem:[#allocation4 + $0x38] sm:$0xff] %v2005
      %2010 = vrot.lane.b32.xlu0 %v451, 81
      %v2011 = vpop.permute.xlu0 %2010
      %2012 = vrot.lane.b32.xlu0 %v455, 81
      %v2013 = vpop.permute.xlu0 %2012
      %v2014 = vsel %vm1297, %v2011, %v2013
      %v2018 = vmul.f32 %v1774, %v2011
      %v2019 = vmul.f32 %v1775, %v2014
      %v2020 = vmul.f32 %v1776, %v2013
      %2024 = vrot.lane.b32.xlu0 %v2018, 47
      %v2025 = vpop.permute.xlu0 %2024
      %2026 = vrot.lane.b32.xlu0 %v2019, 47
      %v2027 = vpop.permute.xlu0 %2026
      %2028 = vrot.lane.b32.xlu0 %v2020, 47
      %v2029 = vpop.permute.xlu0 %2028
      %v2030 = vsel %vm1312, %v2025, %v2027
      %v2031 = vsel %vm1312, %v2027, %v2029
      %2034 = vst [vmem:[#allocation4 + $0x40] sm:$0xff] %v2030
      %2035 = vst [vmem:[#allocation4 + $0x48] sm:$0xff] %v2031
      %2036 = vrot.lane.b32.xlu0 %v487, 82
      %v2037 = vpop.permute.xlu0 %2036
      %2038 = vrot.lane.b32.xlu0 %v491, 82
      %v2039 = vpop.permute.xlu0 %2038
      %v2040 = vsel %vm1322, %v2037, %v2039
      %v2044 = vmul.f32 %v1774, %v2037
      %v2045 = vmul.f32 %v1775, %v2040
      %v2046 = vmul.f32 %v1776, %v2039
      %2050 = vrot.lane.b32.xlu0 %v2044, 46
      %v2051 = vpop.permute.xlu0 %2050
      %2052 = vrot.lane.b32.xlu0 %v2045, 46
      %v2053 = vpop.permute.xlu0 %2052
      %2054 = vrot.lane.b32.xlu0 %v2046, 46
      %v2055 = vpop.permute.xlu0 %2054
      %v2056 = vsel %vm1338, %v2051, %v2053
      %v2057 = vsel %vm1338, %v2053, %v2055
      %2060 = vst [vmem:[#allocation4 + $0x50] sm:$0xff] %v2056
      %2061 = vst [vmem:[#allocation4 + $0x58] sm:$0xff] %v2057
      %2062 = vrot.lane.b32.xlu0 %v524, 83
      %v2063 = vpop.permute.xlu0 %2062
      %2064 = vrot.lane.b32.xlu0 %v528, 83
      %v2065 = vpop.permute.xlu0 %2064
      %v2066 = vsel %vm1348, %v2063, %v2065
      %v2070 = vmul.f32 %v1774, %v2063
      %v2071 = vmul.f32 %v1775, %v2066
      %v2072 = vmul.f32 %v1776, %v2065
      %2076 = vrot.lane.b32.xlu0 %v2070, 45
      %v2077 = vpop.permute.xlu0 %2076
      %2078 = vrot.lane.b32.xlu0 %v2071, 45
      %v2079 = vpop.permute.xlu0 %2078
      %2080 = vrot.lane.b32.xlu0 %v2072, 45
      %v2081 = vpop.permute.xlu0 %2080
      %v2082 = vsel %vm1363, %v2077, %v2079
      %v2083 = vsel %vm1363, %v2079, %v2081
      %2086 = vst [vmem:[#allocation4 + $0x60] sm:$0xff] %v2082
      %2087 = vst [vmem:[#allocation4 + $0x68] sm:$0xff] %v2083
      %2088 = vrot.lane.b32.xlu0 %v323, 93
      %v2089 = vpop.permute.xlu0 %2088
      %2090 = vrot.lane.b32.xlu0 %v327, 93
      %v2091 = vpop.permute.xlu0 %2090
      %v2092 = vsel %vm831, %v2089, %v2091
      %v2096 = vmul.f32 %v1774, %v2089
      %v2097 = vmul.f32 %v1775, %v2092
      %v2098 = vmul.f32 %v1776, %v2091
      %2102 = vrot.lane.b32.xlu0 %v2096, 35
      %v2103 = vpop.permute.xlu0 %2102
      %2104 = vrot.lane.b32.xlu0 %v2097, 35
      %v2105 = vpop.permute.xlu0 %2104
      %2106 = vrot.lane.b32.xlu0 %v2098, 35
      %v2107 = vpop.permute.xlu0 %2106
      %v2108 = vsel %vm815, %v2103, %v2105
      %v2109 = vsel %vm815, %v2105, %v2107
      %2112 = vst [vmem:[#allocation4 + $0x70] sm:$0xff] %v2108
      %2113 = vst [vmem:[#allocation4 + $0x78] sm:$0xff] %v2109
      %2114 = vrot.lane.b32.xlu0 %v341, 94
      %v2115 = vpop.permute.xlu0 %2114
      %2116 = vrot.lane.b32.xlu0 %v345, 94
      %v2117 = vpop.permute.xlu0 %2116
      %v2118 = vsel %vm805, %v2115, %v2117
      %v2122 = vmul.f32 %v1774, %v2115
      %v2123 = vmul.f32 %v1775, %v2118
      %v2124 = vmul.f32 %v1776, %v2117
      %2128 = vrot.lane.b32.xlu0 %v2122, 34
      %v2129 = vpop.permute.xlu0 %2128
      %2130 = vrot.lane.b32.xlu0 %v2123, 34
      %v2131 = vpop.permute.xlu0 %2130
      %2132 = vrot.lane.b32.xlu0 %v2124, 34
      %v2133 = vpop.permute.xlu0 %2132
      %v2134 = vsel %vm790, %v2129, %v2131
      %v2135 = vsel %vm790, %v2131, %v2133
      %2138 = vst [vmem:[#allocation4 + $0x80] sm:$0xff] %v2134
      %2139 = vst [vmem:[#allocation4 + $0x88] sm:$0xff] %v2135
      %2140 = vrot.lane.b32.xlu0 %v378, 95
      %v2141 = vpop.permute.xlu0 %2140
      %2142 = vrot.lane.b32.xlu0 %v382, 95
      %v2143 = vpop.permute.xlu0 %2142
      %v2144 = vsel %vm780, %v2141, %v2143
      %v2148 = vmul.f32 %v1774, %v2141
      %v2149 = vmul.f32 %v1775, %v2144
      %v2150 = vmul.f32 %v1776, %v2143
      %2154 = vrot.lane.b32.xlu0 %v2148, 33
      %v2155 = vpop.permute.xlu0 %2154
      %2156 = vrot.lane.b32.xlu0 %v2149, 33
      %v2157 = vpop.permute.xlu0 %2156
      %2158 = vrot.lane.b32.xlu0 %v2150, 33
      %v2159 = vpop.permute.xlu0 %2158
      %v2160 = vsel %vm764, %v2155, %v2157
      %v2161 = vsel %vm764, %v2157, %v2159
      %2164 = vst [vmem:[#allocation4 + $0x90] sm:$0xff] %v2160
      %2165 = vst [vmem:[#allocation4 + $0x98] sm:$0xff] %v2161
      %2166 = vrot.lane.b32.xlu0 %v414, 96
      %v2167 = vpop.permute.xlu0 %2166
      %2168 = vrot.lane.b32.xlu0 %v418, 96
      %v2169 = vpop.permute.xlu0 %2168
      %v2170 = vsel %vm754, %v2167, %v2169
      %v2174 = vmul.f32 %v1774, %v2167
      %v2175 = vmul.f32 %v1775, %v2170
      %v2176 = vmul.f32 %v1776, %v2169
      %2180 = vrot.lane.b32.xlu0 %v2174, 32
      %v2181 = vpop.permute.xlu0 %2180
      %2182 = vrot.lane.b32.xlu0 %v2175, 32
      %v2183 = vpop.permute.xlu0 %2182
      %2184 = vrot.lane.b32.xlu0 %v2176, 32
      %v2185 = vpop.permute.xlu0 %2184
      %v2186 = vsel %vm739, %v2181, %v2183
      %v2187 = vsel %vm739, %v2183, %v2185
      %2190 = vst [vmem:[#allocation4 + $0xa0] sm:$0xff] %v2186
      %2191 = vst [vmem:[#allocation4 + $0xa8] sm:$0xff] %v2187
      %2192 = vrot.lane.b32.xlu0 %v451, 97
      %v2193 = vpop.permute.xlu0 %2192
      %2194 = vrot.lane.b32.xlu0 %v455, 97
      %v2195 = vpop.permute.xlu0 %2194
      %v2196 = vsel %vm1473, %v2193, %v2195
      %v2200 = vmul.f32 %v1774, %v2193
      %v2201 = vmul.f32 %v1775, %v2196
      %v2202 = vmul.f32 %v1776, %v2195
      %2206 = vrot.lane.b32.xlu0 %v2200, 31
      %v2207 = vpop.permute.xlu0 %2206
      %2208 = vrot.lane.b32.xlu0 %v2201, 31
      %v2209 = vpop.permute.xlu0 %2208
      %2210 = vrot.lane.b32.xlu0 %v2202, 31
      %v2211 = vpop.permute.xlu0 %2210
      %v2212 = vsel %vm1489, %v2207, %v2209
      %v2213 = vsel %vm1489, %v2209, %v2211
      %2216 = vst [vmem:[#allocation4 + $0xb0] sm:$0xff] %v2212
      %2217 = vst [vmem:[#allocation4 + $0xb8] sm:$0xff] %v2213
      %2218 = vrot.lane.b32.xlu0 %v487, 98
      %v2219 = vpop.permute.xlu0 %2218
      %2220 = vrot.lane.b32.xlu0 %v491, 98
      %v2221 = vpop.permute.xlu0 %2220
      %v2222 = vsel %vm1499, %v2219, %v2221
      %v2226 = vmul.f32 %v1774, %v2219
      %v2227 = vmul.f32 %v1775, %v2222
      %v2228 = vmul.f32 %v1776, %v2221
      %2232 = vrot.lane.b32.xlu0 %v2226, 30
      %v2233 = vpop.permute.xlu0 %2232
      %2234 = vrot.lane.b32.xlu0 %v2227, 30
      %v2235 = vpop.permute.xlu0 %2234
      %2236 = vrot.lane.b32.xlu0 %v2228, 30
      %v2237 = vpop.permute.xlu0 %2236
      %v2238 = vsel %vm1514, %v2233, %v2235
      %v2239 = vsel %vm1514, %v2235, %v2237
      %2242 = vst [vmem:[#allocation4 + $0xc0] sm:$0xff] %v2238
      %2243 = vst [vmem:[#allocation4 + $0xc8] sm:$0xff] %v2239
      %2244 = vrot.lane.b32.xlu0 %v524, 99
      %v2245 = vpop.permute.xlu0 %2244
      %2246 = vrot.lane.b32.xlu0 %v528, 99
      %v2247 = vpop.permute.xlu0 %2246
      %v2248 = vsel %vm1524, %v2245, %v2247
      %v2252 = vmul.f32 %v1774, %v2245
      %v2253 = vmul.f32 %v1775, %v2248
      %v2254 = vmul.f32 %v1776, %v2247
      %2258 = vrot.lane.b32.xlu0 %v2252, 29
      %v2259 = vpop.permute.xlu0 %2258
      %2260 = vrot.lane.b32.xlu0 %v2253, 29
      %v2261 = vpop.permute.xlu0 %2260
      %2262 = vrot.lane.b32.xlu0 %v2254, 29
      %v2263 = vpop.permute.xlu0 %2262
      %v2264 = vsel %vm1540, %v2259, %v2261
      %v2265 = vsel %vm1540, %v2261, %v2263
      %2268 = vst [vmem:[#allocation4 + $0xd0] sm:$0xff] %v2264
      %2269 = vst [vmem:[#allocation4 + $0xd8] sm:$0xff] %v2265
      %2270 = vrot.lane.b32.xlu0 %v323, 109
      %v2271 = vpop.permute.xlu0 %2270
      %2272 = vrot.lane.b32.xlu0 %v327, 109
      %v2273 = vpop.permute.xlu0 %2272
      %v2274 = vsel %vm652, %v2271, %v2273
      %v2278 = vmul.f32 %v1774, %v2271
      %v2279 = vmul.f32 %v1775, %v2274
      %v2280 = vmul.f32 %v1776, %v2273
      %2284 = vrot.lane.b32.xlu0 %v2278, 19
      %v2285 = vpop.permute.xlu0 %2284
      %2286 = vrot.lane.b32.xlu0 %v2279, 19
      %v2287 = vpop.permute.xlu0 %2286
      %2288 = vrot.lane.b32.xlu0 %v2280, 19
      %v2289 = vpop.permute.xlu0 %2288
      %v2290 = vsel %vm637, %v2285, %v2287
      %v2291 = vsel %vm637, %v2287, %v2289
      %2294 = vst [vmem:[#allocation4 + $0xe0] sm:$0xff] %v2290
      %2295 = vst [vmem:[#allocation4 + $0xe8] sm:$0xff] %v2291
      %2296 = vrot.lane.b32.xlu0 %v341, 110
      %v2297 = vpop.permute.xlu0 %2296
      %2298 = vrot.lane.b32.xlu0 %v345, 110
      %v2299 = vpop.permute.xlu0 %2298
      %v2300 = vsel %vm627, %v2297, %v2299
      %v2304 = vmul.f32 %v1774, %v2297
      %v2305 = vmul.f32 %v1775, %v2300
      %v2306 = vmul.f32 %v1776, %v2299
      %2310 = vrot.lane.b32.xlu0 %v2304, 18
      %v2311 = vpop.permute.xlu0 %2310
      %2312 = vrot.lane.b32.xlu0 %v2305, 18
      %v2313 = vpop.permute.xlu0 %2312
      %2314 = vrot.lane.b32.xlu0 %v2306, 18
      %v2315 = vpop.permute.xlu0 %2314
      %v2316 = vsel %vm611, %v2311, %v2313
      %v2317 = vsel %vm611, %v2313, %v2315
      %2320 = vst [vmem:[#allocation4 + $0xf0] sm:$0xff] %v2316
      %2321 = vst [vmem:[#allocation4 + $0xf8] sm:$0xff] %v2317
      %2322 = vrot.lane.b32.xlu0 %v378, 111
      %v2323 = vpop.permute.xlu0 %2322
      %2324 = vrot.lane.b32.xlu0 %v382, 111
      %v2325 = vpop.permute.xlu0 %2324
      %v2326 = vsel %vm601, %v2323, %v2325
      %v2330 = vmul.f32 %v1774, %v2323
      %v2331 = vmul.f32 %v1775, %v2326
      %v2332 = vmul.f32 %v1776, %v2325
      %2336 = vrot.lane.b32.xlu0 %v2330, 17
      %v2337 = vpop.permute.xlu0 %2336
      %2338 = vrot.lane.b32.xlu0 %v2331, 17
      %v2339 = vpop.permute.xlu0 %2338
      %2340 = vrot.lane.b32.xlu0 %v2332, 17
      %v2341 = vpop.permute.xlu0 %2340
      %v2342 = vsel %vm586, %v2337, %v2339
      %v2343 = vsel %vm586, %v2339, %v2341
      %2346 = vst [vmem:[#allocation4 + $0x100] sm:$0xff] %v2342
      %2347 = vst [vmem:[#allocation4 + $0x108] sm:$0xff] %v2343
      %2348 = vrot.lane.b32.xlu0 %v414, 112
      %v2349 = vpop.permute.xlu0 %2348
      %2350 = vrot.lane.b32.xlu0 %v418, 112
      %v2351 = vpop.permute.xlu0 %2350
      %v2352 = vsel %vm576, %v2349, %v2351
      %v2356 = vmul.f32 %v1774, %v2349
      %v2357 = vmul.f32 %v1775, %v2352
      %v2358 = vmul.f32 %v1776, %v2351
      %2362 = vrot.lane.b32.xlu0 %v2356, 16
      %v2363 = vpop.permute.xlu0 %2362
      %2364 = vrot.lane.b32.xlu0 %v2357, 16
      %v2365 = vpop.permute.xlu0 %2364
      %2366 = vrot.lane.b32.xlu0 %v2358, 16
      %v2367 = vpop.permute.xlu0 %2366
      %v2368 = vsel %vm560, %v2363, %v2365
      %v2369 = vsel %vm560, %v2365, %v2367
      %2372 = vst [vmem:[#allocation4 + $0x110] sm:$0xff] %v2368
      %2373 = vst [vmem:[#allocation4 + $0x118] sm:$0xff] %v2369
      %2374 = vrot.lane.b32.xlu0 %v451, 113
      %v2375 = vpop.permute.xlu0 %2374
      %2376 = vrot.lane.b32.xlu0 %v455, 113
      %v2377 = vpop.permute.xlu0 %2376
      %vm2378 = vcmask 924672
      %v2379 = vsel %vm2378, %v2375, %v2377
      %v2383 = vmul.f32 %v1774, %v2375
      %v2384 = vmul.f32 %v1775, %v2379
      %v2385 = vmul.f32 %v1776, %v2377
      %2389 = vrot.lane.b32.xlu0 %v2383, 15
      %v2390 = vpop.permute.xlu0 %2389
      %2391 = vrot.lane.b32.xlu0 %v2384, 15
      %v2392 = vpop.permute.xlu0 %2391
      %2393 = vrot.lane.b32.xlu0 %v2385, 15
      %v2394 = vpop.permute.xlu0 %2393
      %vm2395 = vcmask 121856
      %v2396 = vsel %vm2395, %v2390, %v2392
      %v2397 = vsel %vm2395, %v2392, %v2394
      %2400 = vst [vmem:[#allocation4 + $0x120] sm:$0xff] %v2396
      %2401 = vst [vmem:[#allocation4 + $0x128] sm:$0xff] %v2397
      %2402 = vrot.lane.b32.xlu0 %v487, 114
      %v2403 = vpop.permute.xlu0 %2402
      %2404 = vrot.lane.b32.xlu0 %v491, 114
      %v2405 = vpop.permute.xlu0 %2404
      %vm2406 = vcmask 932864
      %v2407 = vsel %vm2406, %v2403, %v2405
      %v2411 = vmul.f32 %v1774, %v2403
      %v2412 = vmul.f32 %v1775, %v2407
      %v2413 = vmul.f32 %v1776, %v2405
      %2417 = vrot.lane.b32.xlu0 %v2411, 14
      %v2418 = vpop.permute.xlu0 %2417
      %2419 = vrot.lane.b32.xlu0 %v2412, 14
      %v2420 = vpop.permute.xlu0 %2419
      %2421 = vrot.lane.b32.xlu0 %v2413, 14
      %v2422 = vpop.permute.xlu0 %2421
      %vm2423 = vcmask 113664
      %v2424 = vsel %vm2423, %v2418, %v2420
      %v2425 = vsel %vm2423, %v2420, %v2422
      %2428 = vst [vmem:[#allocation4 + $0x130] sm:$0xff] %v2424
      %2429 = vst [vmem:[#allocation4 + $0x138] sm:$0xff] %v2425
      %2430 = vrot.lane.b32.xlu0 %v524, 115
      %v2431 = vpop.permute.xlu0 %2430
      %2432 = vrot.lane.b32.xlu0 %v528, 115
      %v2433 = vpop.permute.xlu0 %2432
      %vm2434 = vcmask 941056
      %v2435 = vsel %vm2434, %v2431, %v2433
      %v2439 = vmul.f32 %v1774, %v2431
      %v2440 = vmul.f32 %v1775, %v2435
      %v2441 = vmul.f32 %v1776, %v2433
      %2445 = vrot.lane.b32.xlu0 %v2439, 13
      %v2446 = vpop.permute.xlu0 %2445
      %2447 = vrot.lane.b32.xlu0 %v2440, 13
      %v2448 = vpop.permute.xlu0 %2447
      %2449 = vrot.lane.b32.xlu0 %v2441, 13
      %v2450 = vpop.permute.xlu0 %2449
      %vm2451 = vcmask 105472
      %v2452 = vsel %vm2451, %v2446, %v2448
      %v2453 = vsel %vm2451, %v2448, %v2450
      %2456 = vst [vmem:[#allocation4 + $0x140] sm:$0xff] %v2452
      %2457 = vst [vmem:[#allocation4 + $0x148] sm:$0xff] %v2453
      %2458 = vrot.lane.b32.xlu0 %v323, 125
      %v2459 = vpop.permute.xlu0 %2458
      %2460 = vrot.lane.b32.xlu0 %v327, 125
      %v2461 = vpop.permute.xlu0 %2460
      %v2462 = vsel %vm441, %v2459, %v2461
      %v2466 = vmul.f32 %v1774, %v2459
      %v2467 = vmul.f32 %v1775, %v2462
      %v2468 = vmul.f32 %v1776, %v2461
      %2472 = vrot.lane.b32.xlu0 %v2466, 3
      %v2473 = vpop.permute.xlu0 %2472
      %2474 = vrot.lane.b32.xlu0 %v2467, 3
      %v2475 = vpop.permute.xlu0 %2474
      %2476 = vrot.lane.b32.xlu0 %v2468, 3
      %v2477 = vpop.permute.xlu0 %2476
      %v2478 = vsel %vm425, %v2473, %v2475
      %v2479 = vsel %vm425, %v2475, %v2477
      %2482 = vst [vmem:[#allocation4 + $0x150] sm:$0xff] %v2478
      %2483 = vst [vmem:[#allocation4 + $0x158] sm:$0xff] %v2479
      %2484 = vrot.lane.b32.xlu0 %v341, 126
      %v2485 = vpop.permute.xlu0 %2484
      %2486 = vrot.lane.b32.xlu0 %v345, 126
      %v2487 = vpop.permute.xlu0 %2486
      %v2488 = vsel %vm404, %v2485, %v2487
      %v2492 = vmul.f32 %v1774, %v2485
      %v2493 = vmul.f32 %v1775, %v2488
      %v2494 = vmul.f32 %v1776, %v2487
      %2498 = vrot.lane.b32.xlu0 %v2492, 2
      %v2499 = vpop.permute.xlu0 %2498
      %2500 = vrot.lane.b32.xlu0 %v2493, 2
      %v2501 = vpop.permute.xlu0 %2500
      %2502 = vrot.lane.b32.xlu0 %v2494, 2
      %v2503 = vpop.permute.xlu0 %2502
      %v2504 = vsel %vm389, %v2499, %v2501
      %v2505 = vsel %vm389, %v2501, %v2503
      %2508 = vst [vmem:[#allocation4 + $0x160] sm:$0xff] %v2504
      %2509 = vst [vmem:[#allocation4 + $0x168] sm:$0xff] %v2505
      %2510 = vrot.lane.b32.xlu0 %v378, 127
      %v2511 = vpop.permute.xlu0 %2510
      %2512 = vrot.lane.b32.xlu0 %v382, 127
      %v2513 = vpop.permute.xlu0 %2512
      %v2514 = vsel %vm368, %v2511, %v2513
      %v2518 = vmul.f32 %v1774, %v2511
      %v2519 = vmul.f32 %v1775, %v2514
      %v2520 = vmul.f32 %v1776, %v2513
      %2524 = vrot.lane.b32.xlu0 %v2518, 1
      %v2525 = vpop.permute.xlu0 %2524
      %2526 = vrot.lane.b32.xlu0 %v2519, 1
      %v2527 = vpop.permute.xlu0 %2526
      %2528 = vrot.lane.b32.xlu0 %v2520, 1
      %v2529 = vpop.permute.xlu0 %2528
      %v2530 = vsel %vm352, %v2525, %v2527
      %v2531 = vsel %vm352, %v2527, %v2529
      %2534 = vst [vmem:[#allocation4 + $0x170] sm:$0xff] %v2530
      %2535 = vst [vmem:[#allocation4 + $0x178] sm:$0xff] %v2531
      %v2536 = vmul.f32 %v1775, %v414
      %v2537 = vmul.f32 %v1776, %v418
      %2538 = vst [vmem:[#allocation4 + $0x180] sm:$0xff] %v2536
      %2539 = vst [vmem:[#allocation4 + $0x188] sm:$0xff] %v2537
      %2540 = vrot.lane.b32.xlu0 %v451, 1
      %v2541 = vpop.permute.xlu0 %2540
      %2542 = vrot.lane.b32.xlu0 %v455, 1
      %v2543 = vpop.permute.xlu0 %2542
      %v2544 = vsel %vm352, %v2541, %v2543
      %v2548 = vmul.f32 %v1775, %v2541
      %v2549 = vmul.f32 %v1776, %v2544
      %v2550 = vmul.f32 %v1777, %v2543
      %2554 = vrot.lane.b32.xlu0 %v2548, 127
      %v2555 = vpop.permute.xlu0 %2554
      %2556 = vrot.lane.b32.xlu0 %v2549, 127
      %v2557 = vpop.permute.xlu0 %2556
      %2558 = vrot.lane.b32.xlu0 %v2550, 127
      %v2559 = vpop.permute.xlu0 %2558
      %v2560 = vsel %vm368, %v2555, %v2557
      %v2561 = vsel %vm368, %v2557, %v2559
      %2564 = vst [vmem:[#allocation4 + $0x190] sm:$0xff] %v2560
      %2565 = vst [vmem:[#allocation4 + $0x198] sm:$0xff] %v2561
      %2566 = vrot.lane.b32.xlu0 %v487, 2
      %v2567 = vpop.permute.xlu0 %2566
      %2568 = vrot.lane.b32.xlu0 %v491, 2
      %v2569 = vpop.permute.xlu0 %2568
      %v2570 = vsel %vm389, %v2567, %v2569
      %v2574 = vmul.f32 %v1775, %v2567
      %v2575 = vmul.f32 %v1776, %v2570
      %v2576 = vmul.f32 %v1777, %v2569
      %2580 = vrot.lane.b32.xlu0 %v2574, 126
      %v2581 = vpop.permute.xlu0 %2580
      %2582 = vrot.lane.b32.xlu0 %v2575, 126
      %v2583 = vpop.permute.xlu0 %2582
      %2584 = vrot.lane.b32.xlu0 %v2576, 126
      %v2585 = vpop.permute.xlu0 %2584
      %v2586 = vsel %vm404, %v2581, %v2583
      %v2587 = vsel %vm404, %v2583, %v2585
      %2590 = vst [vmem:[#allocation4 + $0x1a0] sm:$0xff] %v2586
      %2591 = vst [vmem:[#allocation4 + $0x1a8] sm:$0xff] %v2587
      %2592 = vrot.lane.b32.xlu0 %v524, 3
      %v2593 = vpop.permute.xlu0 %2592
      %2594 = vrot.lane.b32.xlu0 %v528, 3
      %v2595 = vpop.permute.xlu0 %2594
      %v2596 = vsel %vm425, %v2593, %v2595
      %v2600 = vmul.f32 %v1775, %v2593
      %v2601 = vmul.f32 %v1776, %v2596
      %v2602 = vmul.f32 %v1777, %v2595
      %2606 = vrot.lane.b32.xlu0 %v2600, 125
      %v2607 = vpop.permute.xlu0 %2606
      %2608 = vrot.lane.b32.xlu0 %v2601, 125
      %v2609 = vpop.permute.xlu0 %2608
      %2610 = vrot.lane.b32.xlu0 %v2602, 125
      %v2611 = vpop.permute.xlu0 %2610
      %v2612 = vsel %vm441, %v2607, %v2609
      %v2613 = vsel %vm441, %v2609, %v2611
      %2616 = vst [vmem:[#allocation4 + $0x1b0] sm:$0xff] %v2612
      %2617 = vst [vmem:[#allocation4 + $0x1b8] sm:$0xff] %v2613
      %2618 = vrot.lane.b32.xlu0 %v323, 13
      %v2619 = vpop.permute.xlu0 %2618
      %2620 = vrot.lane.b32.xlu0 %v327, 13
      %v2621 = vpop.permute.xlu0 %2620
      %v2622 = vsel %vm2451, %v2619, %v2621
      %v2626 = vmul.f32 %v1775, %v2619
      %v2627 = vmul.f32 %v1776, %v2622
      %v2628 = vmul.f32 %v1777, %v2621
      %2632 = vrot.lane.b32.xlu0 %v2626, 115
      %v2633 = vpop.permute.xlu0 %2632
      %2634 = vrot.lane.b32.xlu0 %v2627, 115
      %v2635 = vpop.permute.xlu0 %2634
      %2636 = vrot.lane.b32.xlu0 %v2628, 115
      %v2637 = vpop.permute.xlu0 %2636
      %v2638 = vsel %vm2434, %v2633, %v2635
      %v2639 = vsel %vm2434, %v2635, %v2637
      %2642 = vst [vmem:[#allocation4 + $0x1c0] sm:$0xff] %v2638
      %2643 = vst [vmem:[#allocation4 + $0x1c8] sm:$0xff] %v2639
      %2644 = vrot.lane.b32.xlu0 %v341, 14
      %v2645 = vpop.permute.xlu0 %2644
      %2646 = vrot.lane.b32.xlu0 %v345, 14
      %v2647 = vpop.permute.xlu0 %2646
      %v2648 = vsel %vm2423, %v2645, %v2647
      %v2652 = vmul.f32 %v1775, %v2645
      %v2653 = vmul.f32 %v1776, %v2648
      %v2654 = vmul.f32 %v1777, %v2647
      %2658 = vrot.lane.b32.xlu0 %v2652, 114
      %v2659 = vpop.permute.xlu0 %2658
      %2660 = vrot.lane.b32.xlu0 %v2653, 114
      %v2661 = vpop.permute.xlu0 %2660
      %2662 = vrot.lane.b32.xlu0 %v2654, 114
      %v2663 = vpop.permute.xlu0 %2662
      %v2664 = vsel %vm2406, %v2659, %v2661
      %v2665 = vsel %vm2406, %v2661, %v2663
      %2668 = vst [vmem:[#allocation4 + $0x1d0] sm:$0xff] %v2664
      %2669 = vst [vmem:[#allocation4 + $0x1d8] sm:$0xff] %v2665
      %2670 = vrot.lane.b32.xlu0 %v378, 15
      %v2671 = vpop.permute.xlu0 %2670
      %2672 = vrot.lane.b32.xlu0 %v382, 15
      %v2673 = vpop.permute.xlu0 %2672
      %v2674 = vsel %vm2395, %v2671, %v2673
      %v2678 = vmul.f32 %v1775, %v2671
      %v2679 = vmul.f32 %v1776, %v2674
      %v2680 = vmul.f32 %v1777, %v2673
      %2684 = vrot.lane.b32.xlu0 %v2678, 113
      %v2685 = vpop.permute.xlu0 %2684
      %2686 = vrot.lane.b32.xlu0 %v2679, 113
      %v2687 = vpop.permute.xlu0 %2686
      %2688 = vrot.lane.b32.xlu0 %v2680, 113
      %v2689 = vpop.permute.xlu0 %2688
      %v2690 = vsel %vm2378, %v2685, %v2687
      %v2691 = vsel %vm2378, %v2687, %v2689
      %2694 = vst [vmem:[#allocation4 + $0x1e0] sm:$0xff] %v2690
      %2695 = vst [vmem:[#allocation4 + $0x1e8] sm:$0xff] %v2691
      %2696 = vrot.lane.b32.xlu0 %v414, 16
      %v2697 = vpop.permute.xlu0 %2696
      %2698 = vrot.lane.b32.xlu0 %v418, 16
      %v2699 = vpop.permute.xlu0 %2698
      %v2700 = vsel %vm560, %v2697, %v2699
      %v2704 = vmul.f32 %v1775, %v2697
      %v2705 = vmul.f32 %v1776, %v2700
      %v2706 = vmul.f32 %v1777, %v2699
      %2710 = vrot.lane.b32.xlu0 %v2704, 112
      %v2711 = vpop.permute.xlu0 %2710
      %2712 = vrot.lane.b32.xlu0 %v2705, 112
      %v2713 = vpop.permute.xlu0 %2712
      %2714 = vrot.lane.b32.xlu0 %v2706, 112
      %v2715 = vpop.permute.xlu0 %2714
      %v2716 = vsel %vm576, %v2711, %v2713
      %v2717 = vsel %vm576, %v2713, %v2715
      %2720 = vst [vmem:[#allocation4 + $0x1f0] sm:$0xff] %v2716
      %2721 = vst [vmem:[#allocation4 + $0x1f8] sm:$0xff] %v2717
      %2722 = vrot.lane.b32.xlu0 %v451, 17
      %v2723 = vpop.permute.xlu0 %2722
      %2724 = vrot.lane.b32.xlu0 %v455, 17
      %v2725 = vpop.permute.xlu0 %2724
      %v2726 = vsel %vm586, %v2723, %v2725
      %v2730 = vmul.f32 %v1775, %v2723
      %v2731 = vmul.f32 %v1776, %v2726
      %v2732 = vmul.f32 %v1777, %v2725
      %2736 = vrot.lane.b32.xlu0 %v2730, 111
      %v2737 = vpop.permute.xlu0 %2736
      %2738 = vrot.lane.b32.xlu0 %v2731, 111
      %v2739 = vpop.permute.xlu0 %2738
      %2740 = vrot.lane.b32.xlu0 %v2732, 111
      %v2741 = vpop.permute.xlu0 %2740
      %v2742 = vsel %vm601, %v2737, %v2739
      %v2743 = vsel %vm601, %v2739, %v2741
      %2746 = vst [vmem:[#allocation4 + $0x200] sm:$0xff] %v2742
      %2747 = vst [vmem:[#allocation4 + $0x208] sm:$0xff] %v2743
      %2748 = vrot.lane.b32.xlu0 %v487, 18
      %v2749 = vpop.permute.xlu0 %2748
      %2750 = vrot.lane.b32.xlu0 %v491, 18
      %v2751 = vpop.permute.xlu0 %2750
      %v2752 = vsel %vm611, %v2749, %v2751
      %v2756 = vmul.f32 %v1775, %v2749
      %v2757 = vmul.f32 %v1776, %v2752
      %v2758 = vmul.f32 %v1777, %v2751
      %2762 = vrot.lane.b32.xlu0 %v2756, 110
      %v2763 = vpop.permute.xlu0 %2762
      %2764 = vrot.lane.b32.xlu0 %v2757, 110
      %v2765 = vpop.permute.xlu0 %2764
      %2766 = vrot.lane.b32.xlu0 %v2758, 110
      %v2767 = vpop.permute.xlu0 %2766
      %v2768 = vsel %vm627, %v2763, %v2765
      %v2769 = vsel %vm627, %v2765, %v2767
      %2772 = vst [vmem:[#allocation4 + $0x210] sm:$0xff] %v2768
      %2773 = vst [vmem:[#allocation4 + $0x218] sm:$0xff] %v2769
      %2774 = vrot.lane.b32.xlu0 %v524, 19
      %v2775 = vpop.permute.xlu0 %2774
      %2776 = vrot.lane.b32.xlu0 %v528, 19
      %v2777 = vpop.permute.xlu0 %2776
      %v2778 = vsel %vm637, %v2775, %v2777
      %v2782 = vmul.f32 %v1775, %v2775
      %v2783 = vmul.f32 %v1776, %v2778
      %v2784 = vmul.f32 %v1777, %v2777
      %2788 = vrot.lane.b32.xlu0 %v2782, 109
      %v2789 = vpop.permute.xlu0 %2788
      %2790 = vrot.lane.b32.xlu0 %v2783, 109
      %v2791 = vpop.permute.xlu0 %2790
      %2792 = vrot.lane.b32.xlu0 %v2784, 109
      %v2793 = vpop.permute.xlu0 %2792
      %v2794 = vsel %vm652, %v2789, %v2791
      %v2795 = vsel %vm652, %v2791, %v2793
      %2798 = vst [vmem:[#allocation4 + $0x220] sm:$0xff] %v2794
      %2799 = vst [vmem:[#allocation4 + $0x228] sm:$0xff] %v2795
      %2800 = vrot.lane.b32.xlu0 %v323, 29
      %v2801 = vpop.permute.xlu0 %2800
      %2802 = vrot.lane.b32.xlu0 %v327, 29
      %v2803 = vpop.permute.xlu0 %2802
      %v2804 = vsel %vm1540, %v2801, %v2803
      %v2808 = vmul.f32 %v1775, %v2801
      %v2809 = vmul.f32 %v1776, %v2804
      %v2810 = vmul.f32 %v1777, %v2803
      %2814 = vrot.lane.b32.xlu0 %v2808, 99
      %v2815 = vpop.permute.xlu0 %2814
      %2816 = vrot.lane.b32.xlu0 %v2809, 99
      %v2817 = vpop.permute.xlu0 %2816
      %2818 = vrot.lane.b32.xlu0 %v2810, 99
      %v2819 = vpop.permute.xlu0 %2818
      %v2820 = vsel %vm1524, %v2815, %v2817
      %v2821 = vsel %vm1524, %v2817, %v2819
      %2824 = vst [vmem:[#allocation4 + $0x230] sm:$0xff] %v2820
      %2825 = vst [vmem:[#allocation4 + $0x238] sm:$0xff] %v2821
      %2826 = vrot.lane.b32.xlu0 %v341, 30
      %v2827 = vpop.permute.xlu0 %2826
      %2828 = vrot.lane.b32.xlu0 %v345, 30
      %v2829 = vpop.permute.xlu0 %2828
      %v2830 = vsel %vm1514, %v2827, %v2829
      %v2834 = vmul.f32 %v1775, %v2827
      %v2835 = vmul.f32 %v1776, %v2830
      %v2836 = vmul.f32 %v1777, %v2829
      %2840 = vrot.lane.b32.xlu0 %v2834, 98
      %v2841 = vpop.permute.xlu0 %2840
      %2842 = vrot.lane.b32.xlu0 %v2835, 98
      %v2843 = vpop.permute.xlu0 %2842
      %2844 = vrot.lane.b32.xlu0 %v2836, 98
      %v2845 = vpop.permute.xlu0 %2844
      %v2846 = vsel %vm1499, %v2841, %v2843
      %v2847 = vsel %vm1499, %v2843, %v2845
      %2850 = vst [vmem:[#allocation4 + $0x240] sm:$0xff] %v2846
      %2851 = vst [vmem:[#allocation4 + $0x248] sm:$0xff] %v2847
      %2852 = vrot.lane.b32.xlu0 %v378, 31
      %v2853 = vpop.permute.xlu0 %2852
      %2854 = vrot.lane.b32.xlu0 %v382, 31
      %v2855 = vpop.permute.xlu0 %2854
      %v2856 = vsel %vm1489, %v2853, %v2855
      %v2860 = vmul.f32 %v1775, %v2853
      %v2861 = vmul.f32 %v1776, %v2856
      %v2862 = vmul.f32 %v1777, %v2855
      %2866 = vrot.lane.b32.xlu0 %v2860, 97
      %v2867 = vpop.permute.xlu0 %2866
      %2868 = vrot.lane.b32.xlu0 %v2861, 97
      %v2869 = vpop.permute.xlu0 %2868
      %2870 = vrot.lane.b32.xlu0 %v2862, 97
      %v2871 = vpop.permute.xlu0 %2870
      %v2872 = vsel %vm1473, %v2867, %v2869
      %v2873 = vsel %vm1473, %v2869, %v2871
      %2876 = vst [vmem:[#allocation4 + $0x250] sm:$0xff] %v2872
      %2877 = vst [vmem:[#allocation4 + $0x258] sm:$0xff] %v2873
      %2878 = vrot.lane.b32.xlu0 %v414, 32
      %v2879 = vpop.permute.xlu0 %2878
      %2880 = vrot.lane.b32.xlu0 %v418, 32
      %v2881 = vpop.permute.xlu0 %2880
      %v2882 = vsel %vm739, %v2879, %v2881
      %v2886 = vmul.f32 %v1775, %v2879
      %v2887 = vmul.f32 %v1776, %v2882
      %v2888 = vmul.f32 %v1777, %v2881
      %2892 = vrot.lane.b32.xlu0 %v2886, 96
      %v2893 = vpop.permute.xlu0 %2892
      %2894 = vrot.lane.b32.xlu0 %v2887, 96
      %v2895 = vpop.permute.xlu0 %2894
      %2896 = vrot.lane.b32.xlu0 %v2888, 96
      %v2897 = vpop.permute.xlu0 %2896
      %v2898 = vsel %vm754, %v2893, %v2895
      %v2899 = vsel %vm754, %v2895, %v2897
      %2902 = vst [vmem:[#allocation4 + $0x260] sm:$0xff] %v2898
      %2903 = vst [vmem:[#allocation4 + $0x268] sm:$0xff] %v2899
      %2904 = vrot.lane.b32.xlu0 %v451, 33
      %v2905 = vpop.permute.xlu0 %2904
      %2906 = vrot.lane.b32.xlu0 %v455, 33
      %v2907 = vpop.permute.xlu0 %2906
      %v2908 = vsel %vm764, %v2905, %v2907
      %v2912 = vmul.f32 %v1775, %v2905
      %v2913 = vmul.f32 %v1776, %v2908
      %v2914 = vmul.f32 %v1777, %v2907
      %2918 = vrot.lane.b32.xlu0 %v2912, 95
      %v2919 = vpop.permute.xlu0 %2918
      %2920 = vrot.lane.b32.xlu0 %v2913, 95
      %v2921 = vpop.permute.xlu0 %2920
      %2922 = vrot.lane.b32.xlu0 %v2914, 95
      %v2923 = vpop.permute.xlu0 %2922
      %v2924 = vsel %vm780, %v2919, %v2921
      %v2925 = vsel %vm780, %v2921, %v2923
      %2928 = vst [vmem:[#allocation4 + $0x270] sm:$0xff] %v2924
      %2929 = vst [vmem:[#allocation4 + $0x278] sm:$0xff] %v2925
      %2930 = vrot.lane.b32.xlu0 %v487, 34
      %v2931 = vpop.permute.xlu0 %2930
      %2932 = vrot.lane.b32.xlu0 %v491, 34
      %v2933 = vpop.permute.xlu0 %2932
      %v2934 = vsel %vm790, %v2931, %v2933
      %v2938 = vmul.f32 %v1775, %v2931
      %v2939 = vmul.f32 %v1776, %v2934
      %v2940 = vmul.f32 %v1777, %v2933
      %2944 = vrot.lane.b32.xlu0 %v2938, 94
      %v2945 = vpop.permute.xlu0 %2944
      %2946 = vrot.lane.b32.xlu0 %v2939, 94
      %v2947 = vpop.permute.xlu0 %2946
      %2948 = vrot.lane.b32.xlu0 %v2940, 94
      %v2949 = vpop.permute.xlu0 %2948
      %v2950 = vsel %vm805, %v2945, %v2947
      %v2951 = vsel %vm805, %v2947, %v2949
      %2954 = vst [vmem:[#allocation4 + $0x280] sm:$0xff] %v2950
      %2955 = vst [vmem:[#allocation4 + $0x288] sm:$0xff] %v2951
      %2956 = vrot.lane.b32.xlu0 %v524, 35
      %v2957 = vpop.permute.xlu0 %2956
      %2958 = vrot.lane.b32.xlu0 %v528, 35
      %v2959 = vpop.permute.xlu0 %2958
      %v2960 = vsel %vm815, %v2957, %v2959
      %v2964 = vmul.f32 %v1775, %v2957
      %v2965 = vmul.f32 %v1776, %v2960
      %v2966 = vmul.f32 %v1777, %v2959
      %2970 = vrot.lane.b32.xlu0 %v2964, 93
      %v2971 = vpop.permute.xlu0 %2970
      %2972 = vrot.lane.b32.xlu0 %v2965, 93
      %v2973 = vpop.permute.xlu0 %2972
      %2974 = vrot.lane.b32.xlu0 %v2966, 93
      %v2975 = vpop.permute.xlu0 %2974
      %v2976 = vsel %vm831, %v2971, %v2973
      %v2977 = vsel %vm831, %v2973, %v2975
      %2980 = vst [vmem:[#allocation4 + $0x290] sm:$0xff] %v2976
      %2981 = vst [vmem:[#allocation4 + $0x298] sm:$0xff] %v2977
      %2982 = vrot.lane.b32.xlu0 %v323, 45
      %v2983 = vpop.permute.xlu0 %2982
      %2984 = vrot.lane.b32.xlu0 %v327, 45
      %v2985 = vpop.permute.xlu0 %2984
      %v2986 = vsel %vm1363, %v2983, %v2985
      %v2990 = vmul.f32 %v1775, %v2983
      %v2991 = vmul.f32 %v1776, %v2986
      %v2992 = vmul.f32 %v1777, %v2985
      %2996 = vrot.lane.b32.xlu0 %v2990, 83
      %v2997 = vpop.permute.xlu0 %2996
      %2998 = vrot.lane.b32.xlu0 %v2991, 83
      %v2999 = vpop.permute.xlu0 %2998
      %3000 = vrot.lane.b32.xlu0 %v2992, 83
      %v3001 = vpop.permute.xlu0 %3000
      %v3002 = vsel %vm1348, %v2997, %v2999
      %v3003 = vsel %vm1348, %v2999, %v3001
      %3006 = vst [vmem:[#allocation4 + $0x2a0] sm:$0xff] %v3002
      %3007 = vst [vmem:[#allocation4 + $0x2a8] sm:$0xff] %v3003
      %3008 = vrot.lane.b32.xlu0 %v341, 46
      %v3009 = vpop.permute.xlu0 %3008
      %3010 = vrot.lane.b32.xlu0 %v345, 46
      %v3011 = vpop.permute.xlu0 %3010
      %v3012 = vsel %vm1338, %v3009, %v3011
      %v3016 = vmul.f32 %v1775, %v3009
      %v3017 = vmul.f32 %v1776, %v3012
      %v3018 = vmul.f32 %v1777, %v3011
      %3022 = vrot.lane.b32.xlu0 %v3016, 82
      %v3023 = vpop.permute.xlu0 %3022
      %3024 = vrot.lane.b32.xlu0 %v3017, 82
      %v3025 = vpop.permute.xlu0 %3024
      %3026 = vrot.lane.b32.xlu0 %v3018, 82
      %v3027 = vpop.permute.xlu0 %3026
      %v3028 = vsel %vm1322, %v3023, %v3025
      %v3029 = vsel %vm1322, %v3025, %v3027
      %3032 = vst [vmem:[#allocation4 + $0x2b0] sm:$0xff] %v3028
      %3033 = vst [vmem:[#allocation4 + $0x2b8] sm:$0xff] %v3029
      %3034 = vrot.lane.b32.xlu0 %v378, 47
      %v3035 = vpop.permute.xlu0 %3034
      %3036 = vrot.lane.b32.xlu0 %v382, 47
      %v3037 = vpop.permute.xlu0 %3036
      %v3038 = vsel %vm1312, %v3035, %v3037
      %v3042 = vmul.f32 %v1775, %v3035
      %v3043 = vmul.f32 %v1776, %v3038
      %v3044 = vmul.f32 %v1777, %v3037
      %3048 = vrot.lane.b32.xlu0 %v3042, 81
      %v3049 = vpop.permute.xlu0 %3048
      %3050 = vrot.lane.b32.xlu0 %v3043, 81
      %v3051 = vpop.permute.xlu0 %3050
      %3052 = vrot.lane.b32.xlu0 %v3044, 81
      %v3053 = vpop.permute.xlu0 %3052
      %v3054 = vsel %vm1297, %v3049, %v3051
      %v3055 = vsel %vm1297, %v3051, %v3053
      %3058 = vst [vmem:[#allocation4 + $0x2c0] sm:$0xff] %v3054
      %3059 = vst [vmem:[#allocation4 + $0x2c8] sm:$0xff] %v3055
      %3060 = vrot.lane.b32.xlu0 %v414, 48
      %v3061 = vpop.permute.xlu0 %3060
      %3062 = vrot.lane.b32.xlu0 %v418, 48
      %v3063 = vpop.permute.xlu0 %3062
      %v3064 = vsel %vm917, %v3061, %v3063
      %v3068 = vmul.f32 %v1775, %v3061
      %v3069 = vmul.f32 %v1776, %v3064
      %v3070 = vmul.f32 %v1777, %v3063
      %3074 = vrot.lane.b32.xlu0 %v3068, 80
      %v3075 = vpop.permute.xlu0 %3074
      %3076 = vrot.lane.b32.xlu0 %v3069, 80
      %v3077 = vpop.permute.xlu0 %3076
      %3078 = vrot.lane.b32.xlu0 %v3070, 80
      %v3079 = vpop.permute.xlu0 %3078
      %v3080 = vsel %vm933, %v3075, %v3077
      %v3081 = vsel %vm933, %v3077, %v3079
      %3084 = vst [vmem:[#allocation4 + $0x2d0] sm:$0xff] %v3080
      %3085 = vst [vmem:[#allocation4 + $0x2d8] sm:$0xff] %v3081
      %3086 = vrot.lane.b32.xlu0 %v451, 49
      %v3087 = vpop.permute.xlu0 %3086
      %3088 = vrot.lane.b32.xlu0 %v455, 49
      %v3089 = vpop.permute.xlu0 %3088
      %v3090 = vsel %vm943, %v3087, %v3089
      %v3094 = vmul.f32 %v1775, %v3087
      %v3095 = vmul.f32 %v1776, %v3090
      %v3096 = vmul.f32 %v1777, %v3089
      %3100 = vrot.lane.b32.xlu0 %v3094, 79
      %v3101 = vpop.permute.xlu0 %3100
      %3102 = vrot.lane.b32.xlu0 %v3095, 79
      %v3103 = vpop.permute.xlu0 %3102
      %3104 = vrot.lane.b32.xlu0 %v3096, 79
      %v3105 = vpop.permute.xlu0 %3104
      %v3106 = vsel %vm958, %v3101, %v3103
      %v3107 = vsel %vm958, %v3103, %v3105
      %3110 = vst [vmem:[#allocation4 + $0x2e0] sm:$0xff] %v3106
      %3111 = vst [vmem:[#allocation4 + $0x2e8] sm:$0xff] %v3107
      %3112 = vrot.lane.b32.xlu0 %v487, 50
      %v3113 = vpop.permute.xlu0 %3112
      %3114 = vrot.lane.b32.xlu0 %v491, 50
      %v3115 = vpop.permute.xlu0 %3114
      %v3116 = vsel %vm968, %v3113, %v3115
      %v3120 = vmul.f32 %v1775, %v3113
      %v3121 = vmul.f32 %v1776, %v3116
      %v3122 = vmul.f32 %v1777, %v3115
      %3126 = vrot.lane.b32.xlu0 %v3120, 78
      %v3127 = vpop.permute.xlu0 %3126
      %3128 = vrot.lane.b32.xlu0 %v3121, 78
      %v3129 = vpop.permute.xlu0 %3128
      %3130 = vrot.lane.b32.xlu0 %v3122, 78
      %v3131 = vpop.permute.xlu0 %3130
      %v3132 = vsel %vm984, %v3127, %v3129
      %v3133 = vsel %vm984, %v3129, %v3131
      %3136 = vst [vmem:[#allocation4 + $0x2f0] sm:$0xff] %v3132
      %3137 = vst [vmem:[#allocation4 + $0x2f8] sm:$0xff] %v3133
      %3138 = vrot.lane.b32.xlu0 %v524, 51
      %v3139 = vpop.permute.xlu0 %3138
      %3140 = vrot.lane.b32.xlu0 %v528, 51
      %v3141 = vpop.permute.xlu0 %3140
      %v3142 = vsel %vm994, %v3139, %v3141
      %v3146 = vmul.f32 %v1775, %v3139
      %v3147 = vmul.f32 %v1776, %v3142
      %v3148 = vmul.f32 %v1777, %v3141
      %3152 = vrot.lane.b32.xlu0 %v3146, 77
      %v3153 = vpop.permute.xlu0 %3152
      %3154 = vrot.lane.b32.xlu0 %v3147, 77
      %v3155 = vpop.permute.xlu0 %3154
      %3156 = vrot.lane.b32.xlu0 %v3148, 77
      %v3157 = vpop.permute.xlu0 %3156
      %v3158 = vsel %vm1009, %v3153, %v3155
      %v3159 = vsel %vm1009, %v3155, %v3157
      %3162 = vst [vmem:[#allocation4 + $0x300] sm:$0xff] %v3158
      %3163 = vst [vmem:[#allocation4 + $0x308] sm:$0xff] %v3159
      %v3164 = vld [vmem:[%s3] sm:$0xff]
      %v3165 = vld [vmem:[%s3 + $0x8] sm:$0xff]
      %v3166 = vld [vmem:[%s3 + $0x10] sm:$0xff]
      %v3167 = vld [vmem:[%s3 + $0x18] sm:$0xff]
      %v3168 = vld [vmem:[#allocation4] sm:$0xff]
      %v3169 = vld [vmem:[#allocation4 + $0x8] sm:$0xff]
      %v3170 = vld [vmem:[#allocation4 + $0x10] sm:$0xff]
      %v3171 = vld [vmem:[#allocation4 + $0x18] sm:$0xff]
      %v3172 = vld [vmem:[#allocation4 + $0x20] sm:$0xff]
      %v3173 = vld [vmem:[#allocation4 + $0x28] sm:$0xff]
      %v3174 = vld [vmem:[#allocation4 + $0x30] sm:$0xff]
      %v3175 = vld [vmem:[#allocation4 + $0x38] sm:$0xff]
      %v3176 = vld [vmem:[#allocation4 + $0x40] sm:$0xff]
      %v3177 = vld [vmem:[#allocation4 + $0x48] sm:$0xff]
      %v3178 = vld [vmem:[#allocation4 + $0x50] sm:$0xff]
      %v3179 = vld [vmem:[#allocation4 + $0x58] sm:$0xff]
      %v3180 = vld [vmem:[#allocation4 + $0x60] sm:$0xff]
      %v3181 = vld [vmem:[#allocation4 + $0x68] sm:$0xff]
      %v3182 = vld [vmem:[#allocation4 + $0x70] sm:$0xff]
      %v3183 = vld [vmem:[#allocation4 + $0x78] sm:$0xff]
      %v3184 = vld [vmem:[#allocation4 + $0x80] sm:$0xff]
      %v3185 = vld [vmem:[#allocation4 + $0x88] sm:$0xff]
      %v3186 = vld [vmem:[#allocation4 + $0x90] sm:$0xff]
      %v3187 = vld [vmem:[#allocation4 + $0x98] sm:$0xff]
      %v3188 = vld [vmem:[#allocation4 + $0xa0] sm:$0xff]
      %v3189 = vld [vmem:[#allocation4 + $0xa8] sm:$0xff]
      %v3190 = vld [vmem:[#allocation4 + $0xb0] sm:$0xff]
      %v3191 = vld [vmem:[#allocation4 + $0xb8] sm:$0xff]
      %v3192 = vld [vmem:[#allocation4 + $0xc0] sm:$0xff]
      %v3193 = vld [vmem:[#allocation4 + $0xc8] sm:$0xff]
      %v3194 = vld [vmem:[#allocation4 + $0xd0] sm:$0xff]
      %v3195 = vld [vmem:[#allocation4 + $0xd8] sm:$0xff]
      %v3196 = vld [vmem:[#allocation4 + $0xe0] sm:$0xff]
      %v3197 = vld [vmem:[#allocation4 + $0xe8] sm:$0xff]
      %v3198 = vld [vmem:[#allocation4 + $0xf0] sm:$0xff]
      %v3199 = vld [vmem:[#allocation4 + $0xf8] sm:$0xff]
      %v3200 = vld [vmem:[#allocation4 + $0x100] sm:$0xff]
      %v3201 = vld [vmem:[#allocation4 + $0x108] sm:$0xff]
      %v3202 = vld [vmem:[#allocation4 + $0x110] sm:$0xff]
      %v3203 = vld [vmem:[#allocation4 + $0x118] sm:$0xff]
      %v3204 = vld [vmem:[#allocation4 + $0x120] sm:$0xff]
      %v3205 = vld [vmem:[#allocation4 + $0x128] sm:$0xff]
      %v3206 = vld [vmem:[#allocation4 + $0x130] sm:$0xff]
      %v3207 = vld [vmem:[#allocation4 + $0x138] sm:$0xff]
      %v3208 = vld [vmem:[#allocation4 + $0x140] sm:$0xff]
      %v3209 = vld [vmem:[#allocation4 + $0x148] sm:$0xff]
      %v3210 = vld [vmem:[#allocation4 + $0x150] sm:$0xff]
      %v3211 = vld [vmem:[#allocation4 + $0x158] sm:$0xff]
      %v3212 = vld [vmem:[#allocation4 + $0x160] sm:$0xff]
      %v3213 = vld [vmem:[#allocation4 + $0x168] sm:$0xff]
      %v3214 = vld [vmem:[#allocation4 + $0x170] sm:$0xff]
      %v3215 = vld [vmem:[#allocation4 + $0x178] sm:$0xff]
      %v3216 = vld [vmem:[#allocation4 + $0x180] sm:$0xff]
      %v3217 = vld [vmem:[#allocation4 + $0x188] sm:$0xff]
      %v3218 = vld [vmem:[#allocation4 + $0x190] sm:$0xff]
      %v3219 = vld [vmem:[#allocation4 + $0x198] sm:$0xff]
      %v3220 = vld [vmem:[#allocation4 + $0x1a0] sm:$0xff]
      %v3221 = vld [vmem:[#allocation4 + $0x1a8] sm:$0xff]
      %v3222 = vld [vmem:[#allocation4 + $0x1b0] sm:$0xff]
      %v3223 = vld [vmem:[#allocation4 + $0x1b8] sm:$0xff]
      %v3224 = vld [vmem:[#allocation4 + $0x1c0] sm:$0xff]
      %v3225 = vld [vmem:[#allocation4 + $0x1c8] sm:$0xff]
      %v3226 = vld [vmem:[#allocation4 + $0x1d0] sm:$0xff]
      %v3227 = vld [vmem:[#allocation4 + $0x1d8] sm:$0xff]
      %v3228 = vld [vmem:[#allocation4 + $0x1e0] sm:$0xff]
      %v3229 = vld [vmem:[#allocation4 + $0x1e8] sm:$0xff]
      %v3230 = vld [vmem:[#allocation4 + $0x1f0] sm:$0xff]
      %v3231 = vld [vmem:[#allocation4 + $0x1f8] sm:$0xff]
      %v3232 = vld [vmem:[#allocation4 + $0x200] sm:$0xff]
      %v3233 = vld [vmem:[#allocation4 + $0x208] sm:$0xff]
      %v3234 = vld [vmem:[#allocation4 + $0x210] sm:$0xff]
      %v3235 = vld [vmem:[#allocation4 + $0x218] sm:$0xff]
      %v3236 = vld [vmem:[#allocation4 + $0x220] sm:$0xff]
      %v3237 = vld [vmem:[#allocation4 + $0x228] sm:$0xff]
      %v3238 = vld [vmem:[#allocation4 + $0x230] sm:$0xff]
      %v3239 = vld [vmem:[#allocation4 + $0x238] sm:$0xff]
      %v3240 = vld [vmem:[#allocation4 + $0x240] sm:$0xff]
      %v3241 = vld [vmem:[#allocation4 + $0x248] sm:$0xff]
      %v3242 = vld [vmem:[#allocation4 + $0x250] sm:$0xff]
      %v3243 = vld [vmem:[#allocation4 + $0x258] sm:$0xff]
      %v3244 = vld [vmem:[#allocation4 + $0x260] sm:$0xff]
      %v3245 = vld [vmem:[#allocation4 + $0x268] sm:$0xff]
      %v3246 = vld [vmem:[#allocation4 + $0x270] sm:$0xff]
      %v3247 = vld [vmem:[#allocation4 + $0x278] sm:$0xff]
      %v3248 = vld [vmem:[#allocation4 + $0x280] sm:$0xff]
      %v3249 = vld [vmem:[#allocation4 + $0x288] sm:$0xff]
      %v3250 = vld [vmem:[#allocation4 + $0x290] sm:$0xff]
      %v3251 = vld [vmem:[#allocation4 + $0x298] sm:$0xff]
      %v3252 = vld [vmem:[#allocation4 + $0x2a0] sm:$0xff]
      %v3253 = vld [vmem:[#allocation4 + $0x2a8] sm:$0xff]
      %v3254 = vld [vmem:[#allocation4 + $0x2b0] sm:$0xff]
      %v3255 = vld [vmem:[#allocation4 + $0x2b8] sm:$0xff]
      %v3256 = vld [vmem:[#allocation4 + $0x2c0] sm:$0xff]
      %v3257 = vld [vmem:[#allocation4 + $0x2c8] sm:$0xff]
      %v3258 = vld [vmem:[#allocation4 + $0x2d0] sm:$0xff]
      %v3259 = vld [vmem:[#allocation4 + $0x2d8] sm:$0xff]
      %v3260 = vld [vmem:[#allocation4 + $0x2e0] sm:$0xff]
      %v3261 = vld [vmem:[#allocation4 + $0x2e8] sm:$0xff]
      %v3262 = vld [vmem:[#allocation4 + $0x2f0] sm:$0xff]
      %v3263 = vld [vmem:[#allocation4 + $0x2f8] sm:$0xff]
      %v3264 = vld [vmem:[#allocation4 + $0x300] sm:$0xff]
      %v3265 = vld [vmem:[#allocation4 + $0x308] sm:$0xff]
      %v3266 = vld [vmem:[#allocation4 + $0x310] sm:$0xff]
      %v3267 = vld [vmem:[#allocation4 + $0x318] sm:$0xff]
      %v3268 = vld [vmem:[#allocation4 + $0x320] sm:$0xff]
      %v3269 = vld [vmem:[#allocation4 + $0x328] sm:$0xff]
      %v3270 = vld [vmem:[#allocation4 + $0x330] sm:$0xff]
      %v3271 = vld [vmem:[#allocation4 + $0x338] sm:$0xff]
      %v3272 = vld [vmem:[#allocation4 + $0x340] sm:$0xff]
      %v3273 = vld [vmem:[#allocation4 + $0x348] sm:$0xff]
      %v3274 = vld [vmem:[#allocation4 + $0x350] sm:$0xff]
      %v3275 = vld [vmem:[#allocation4 + $0x358] sm:$0xff]
      %v3276 = vld [vmem:[#allocation4 + $0x360] sm:$0xff]
      %v3277 = vld [vmem:[#allocation4 + $0x368] sm:$0xff]
      %v3278 = vld [vmem:[#allocation4 + $0x370] sm:$0xff]
      %v3279 = vld [vmem:[#allocation4 + $0x378] sm:$0xff]
      %v3280 = vld [vmem:[#allocation4 + $0x380] sm:$0xff]
      %v3281 = vld [vmem:[#allocation4 + $0x388] sm:$0xff]
      %v3282 = vld [vmem:[#allocation4 + $0x390] sm:$0xff]
      %v3283 = vld [vmem:[#allocation4 + $0x398] sm:$0xff]
      %v3284 = vld [vmem:[#allocation4 + $0x3a0] sm:$0xff]
      %v3285 = vld [vmem:[#allocation4 + $0x3a8] sm:$0xff]
      %v3286 = vld [vmem:[#allocation4 + $0x3b0] sm:$0xff]
      %v3287 = vld [vmem:[#allocation4 + $0x3b8] sm:$0xff]
      %v3288 = vld [vmem:[#allocation4 + $0x3c0] sm:$0xff]
      %v3289 = vld [vmem:[#allocation4 + $0x3c8] sm:$0xff]
      %v3290 = vld [vmem:[#allocation4 + $0x3d0] sm:$0xff]
      %v3291 = vld [vmem:[#allocation4 + $0x3d8] sm:$0xff]
      %v3292 = vld [vmem:[#allocation4 + $0x3e0] sm:$0xff]
      %v3293 = vld [vmem:[#allocation4 + $0x3e8] sm:$0xff]
      %v3294 = vld [vmem:[#allocation4 + $0x3f0] sm:$0xff]
      %v3295 = vld [vmem:[#allocation4 + $0x3f8] sm:$0xff]
      %v3296 = vld [vmem:[%s4] sm:$0xff]
      %3298 = vset.pattern.permute.xlu0 0
      %3299 = vperm.xlu0 %3298, %v3296
      %v3300 = vpop.permute.xlu0 %3299
      %3302 = vmatprep.subr.mxu0 %v3169
      %3303 = vmatpush1.msra.mxu0 %v3168
      %3304 = vmatprep.subr.mxu0 %v3171
      %3305 = vmatpush1.msra.mxu0 %v3170
      %3306 = vmatprep.subr.mxu0 %v3173
      %3307 = vmatpush1.msra.mxu0 %v3172
      %3308 = vmatprep.subr.mxu0 %v3175
      %3309 = vmatpush1.msra.mxu0 %v3174
      %3310 = vmatprep.subr.mxu0 %v3177
      %3311 = vmatpush1.msra.mxu0 %v3176
      %3312 = vmatprep.subr.mxu0 %v3179
      %3313 = vmatpush1.msra.mxu0 %v3178
      %3314 = vmatprep.subr.mxu0 %v3181
      %3315 = vmatpush1.msra.mxu0 %v3180
      %3316 = vmatprep.subr.mxu0 %v3183
      %3317 = vmatpush1.msra.mxu0 %v3182
      %3318 = vmatprep.subr.mxu0 %v3185
      %3319 = vmatpush1.msra.mxu0 %v3184
      %3320 = vmatprep.subr.mxu0 %v3187
      %3321 = vmatpush1.msra.mxu0 %v3186
      %3322 = vmatprep.subr.mxu0 %v3189
      %3323 = vmatpush1.msra.mxu0 %v3188
      %3324 = vmatprep.subr.mxu0 %v3191
      %3325 = vmatpush1.msra.mxu0 %v3190
      %3326 = vmatprep.subr.mxu0 %v3193
      %3327 = vmatpush1.msra.mxu0 %v3192
      %3328 = vmatprep.subr.mxu0 %v3195
      %3329 = vmatpush1.msra.mxu0 %v3194
      %3330 = vmatprep.subr.mxu0 %v3197
      %3331 = vmatpush1.msra.mxu0 %v3196
      %3332 = vmatprep.subr.mxu0 %v3199
      %3333 = vmatpush1.msra.mxu0 %v3198
      %3334 = vmatprep.subr.mxu0 %v3201
      %3335 = vmatpush1.msra.mxu0 %v3200
      %3336 = vmatprep.subr.mxu0 %v3203
      %3337 = vmatpush1.msra.mxu0 %v3202
      %3338 = vmatprep.subr.mxu0 %v3205
      %3339 = vmatpush1.msra.mxu0 %v3204
      %3340 = vmatprep.subr.mxu0 %v3207
      %3341 = vmatpush1.msra.mxu0 %v3206
      %3342 = vmatprep.subr.mxu0 %v3209
      %3343 = vmatpush1.msra.mxu0 %v3208
      %3344 = vmatprep.subr.mxu0 %v3211
      %3345 = vmatpush1.msra.mxu0 %v3210
      %3346 = vmatprep.subr.mxu0 %v3213
      %3347 = vmatpush1.msra.mxu0 %v3212
      %3348 = vmatprep.subr.mxu0 %v3215
      %3349 = vmatpush1.msra.mxu0 %v3214
      %3350 = vmatprep.subr.mxu0 %v3217
      %3351 = vmatpush1.msra.mxu0 %v3216
      %3352 = vmatprep.subr.mxu0 %v3219
      %3353 = vmatpush1.msra.mxu0 %v3218
      %3354 = vmatprep.subr.mxu0 %v3221
      %3355 = vmatpush1.msra.mxu0 %v3220
      %3356 = vmatprep.subr.mxu0 %v3223
      %3357 = vmatpush1.msra.mxu0 %v3222
      %3358 = vmatprep.subr.mxu0 %v3225
      %3359 = vmatpush1.msra.mxu0 %v3224
      %3360 = vmatprep.subr.mxu0 %v3227
      %3361 = vmatpush1.msra.mxu0 %v3226
      %3362 = vmatprep.subr.mxu0 %v3229
      %3363 = vmatpush1.msra.mxu0 %v3228
      %3364 = vmatprep.subr.mxu0 %v3231
      %3365 = vmatpush1.msra.mxu0 %v3230
      %3366 = vmatprep.mubr.f32.mxu0 %v3165
      %3367 = vmatmul.mubr.f32.gmra.mrb[0].mxu0 %v3164
      %v3368 = vpop.f32.mrb[0].mxu0
      %v3369 = vadd.f32 %v3300, %v3368
      %v3370 = vpop.f32.mrb[0].mxu0
      %v3371 = vadd.f32 %v3300, %v3370
      %3372 = vdwg.mxu0
      %3373 = vmatprep.subr.mxu0 %v3233
      %3374 = vmatpush1.msra.mxu0 %v3232
      %3375 = vmatprep.subr.mxu0 %v3235
      %3376 = vmatpush1.msra.mxu0 %v3234
      %3377 = vmatprep.subr.mxu0 %v3237
      %3378 = vmatpush1.msra.mxu0 %v3236
      %3379 = vmatprep.subr.mxu0 %v3239
      %3380 = vmatpush1.msra.mxu0 %v3238
      %3381 = vmatprep.subr.mxu0 %v3241
      %3382 = vmatpush1.msra.mxu0 %v3240
      %3383 = vmatprep.subr.mxu0 %v3243
      %3384 = vmatpush1.msra.mxu0 %v3242
      %3385 = vmatprep.subr.mxu0 %v3245
      %3386 = vmatpush1.msra.mxu0 %v3244
      %3387 = vmatprep.subr.mxu0 %v3247
      %3388 = vmatpush1.msra.mxu0 %v3246
      %3389 = vmatprep.subr.mxu0 %v3249
      %3390 = vmatpush1.msra.mxu0 %v3248
      %3391 = vmatprep.subr.mxu0 %v3251
      %3392 = vmatpush1.msra.mxu0 %v3250
      %3393 = vmatprep.subr.mxu0 %v3253
      %3394 = vmatpush1.msra.mxu0 %v3252
      %3395 = vmatprep.subr.mxu0 %v3255
      %3396 = vmatpush1.msra.mxu0 %v3254
      %3397 = vmatprep.subr.mxu0 %v3257
      %3398 = vmatpush1.msra.mxu0 %v3256
      %3399 = vmatprep.subr.mxu0 %v3259
      %3400 = vmatpush1.msra.mxu0 %v3258
      %3401 = vmatprep.subr.mxu0 %v3261
      %3402 = vmatpush1.msra.mxu0 %v3260
      %3403 = vmatprep.subr.mxu0 %v3263
      %3404 = vmatpush1.msra.mxu0 %v3262
      %3405 = vmatprep.subr.mxu0 %v3265
      %3406 = vmatpush1.msra.mxu0 %v3264
      %3407 = vmatprep.subr.mxu0 %v3267
      %3408 = vmatpush1.msra.mxu0 %v3266
      %3409 = vmatprep.subr.mxu0 %v3269
      %3410 = vmatpush1.msra.mxu0 %v3268
      %3411 = vmatprep.subr.mxu0 %v3271
      %3412 = vmatpush1.msra.mxu0 %v3270
      %3413 = vmatprep.subr.mxu0 %v3273
      %3414 = vmatpush1.msra.mxu0 %v3272
      %3415 = vmatprep.subr.mxu0 %v3275
      %3416 = vmatpush1.msra.mxu0 %v3274
      %3417 = vmatprep.subr.mxu0 %v3277
      %3418 = vmatpush1.msra.mxu0 %v3276
      %3419 = vmatprep.subr.mxu0 %v3279
      %3420 = vmatpush1.msra.mxu0 %v3278
      %3421 = vmatprep.subr.mxu0 %v3281
      %3422 = vmatpush1.msra.mxu0 %v3280
      %3423 = vmatprep.subr.mxu0 %v3283
      %3424 = vmatpush1.msra.mxu0 %v3282
      %3425 = vmatprep.subr.mxu0 %v3285
      %3426 = vmatpush1.msra.mxu0 %v3284
      %3427 = vmatprep.subr.mxu0 %v3287
      %3428 = vmatpush1.msra.mxu0 %v3286
      %3429 = vmatprep.subr.mxu0 %v3289
      %3430 = vmatpush1.msra.mxu0 %v3288
      %3431 = vmatprep.subr.mxu0 %v3291
      %3432 = vmatpush1.msra.mxu0 %v3290
      %3433 = vmatprep.subr.mxu0 %v3293
      %3434 = vmatpush1.msra.mxu0 %v3292
      %3435 = vmatprep.subr.mxu0 %v3295
      %3436 = vmatpush1.msra.mxu0 %v3294
      %3437 = vmatprep.mubr.f32.mxu0 %v3167
      %3438 = vmatmul.mubr.f32.gmra.mrb[0].mxu0 %v3166
      %v3439 = vpop.f32.mrb[0].mxu0
      %v3440 = vadd.f32 %v3369, %v3439
      %v3441 = vpop.f32.mrb[0].mxu0
      %v3442 = vadd.f32 %v3371, %v3441
      %3443 = vdwg.mxu0
      %v3444 = vmax.f32 %v3440, 0.0
      %v3445 = vmax.f32 %v3442, 0.0
      %3446 = vst [vmem:[%s251] sm:$0xff] %v3444
      %3447 = vst [vmem:[%s251 + $0x8] sm:$0xff] %v3445
      %p3448 = scmp.lt.s32.totalorder %s17, 1
      %s3449 = scalar_select %p3448, %s17, 1
      %s3450 = smul.addr %s3449, 2
      %s3451 = smul.addr %s3450, 8
      %s3452 = scalar_lea.vmem %s6, %s3451
      // Predicated region
      $region45: #{inconv_1_forward.1} parent=43 // pred_check
        %p3453 = pneg %p166
      $region46: #{inconv_1_forward.1} parent=43 // pred_check_branch
        %3455 = sbr.rel (%p3453) target = $region48
      $region47: #{inconv_1_forward.1} parent=43 // pred_region
        _
      $region48: #{inconv_1_forward.1} parent=43 // pred_fallthru
        _
    $region44: #{inconv_1_forward.1} parent=5 // pred_fallthru
      _
    %p3456 = scmp.le.s32.totalorder 2, %s12
    // Predicated region
    $region49: #{inconv_1_forward.1} parent=5 // pred_check
      %p3457 = pneg %p3456
    $region50: #{inconv_1_forward.1} parent=5 // pred_check_branch
      %3459 = sbr.rel (%p3457) target = $region52
    $region51: #{inconv_1_forward.1} parent=5 // pred_region
      %s3460 = ssub.s32 %s12, 2
      // Predicated region
      $region53: #{inconv_1_forward.1} parent=51 // pred_check
        %p3461 = pneg %p172
      $region54: #{inconv_1_forward.1} parent=51 // pred_check_branch
        %3463 = sbr.rel (%p3461) target = $region56
      $region55: #{inconv_1_forward.1} parent=51 // pred_region
        %p3464 = scmp.lt.s32.totalorder %s18, 1
        %s3465 = scalar_select %p3464, %s18, 1
        %s3466 = smul.addr %s3465, 2
        %s3467 = smul.addr %s3466, 8
        %s3468 = scalar_lea.vmem %s6, %s3467
      $region56: #{inconv_1_forward.1} parent=51 // pred_fallthru
        _
    $region52: #{inconv_1_forward.1} parent=5 // pred_fallthru
      _
  $region6: #{inconv_1_forward.1} parent=0 // loop_footer
    %s16 = sadd.s32 1, %s12
  $region7: #{inconv_1_forward.1} parent=0 // loop_footer_branch
    %11 = sbr.rel target = $region3
  $region8: #{inconv_1_forward.1} parent=0 // loop_exit
    _

</llo_original>
